<compile_context>
chip_gen: v5e
topology: v5e:2x2
jax: 0.10.0
libtpu: 0.0.40
codegen_flags: <defaults>
</compile_context>

<pallas_src>
import functools

import jax
import jax.numpy as jnp
from jax.experimental import pallas as pl
from jax.experimental.pallas import tpu as pltpu


# --------------------------------------------------------------------------
# Small helpers.
# --------------------------------------------------------------------------
def _round_up(n, m):
    return ((n + m - 1) // m) * m


def _vmem_limit_bytes():
    """3/4 of per-core VMEM (capped) -> ~96 MiB on v5e/v6e, ~48 MiB on v7x."""
    cap = 128 * 1024 * 1024
    try:
        info = pltpu.get_tpu_info()
        cap = int(getattr(info, "vmem_capacity_bytes", cap))
    except Exception:
        pass
    return int(min(cap * 3 // 4, 100 * 1024 * 1024))


def _choose_batch_block(Bp, sub):
    """Split the (padded) batch into 2 blocks when possible (v7x: 2 TCs)."""
    if Bp >= 2 * sub and Bp % (2 * sub) == 0:
        return Bp // 2
    return Bp


def _choose_time_chunk(T, Bc, H, D, io_bytes, w_bytes, budget_bytes,
                       requested=None):
    """Largest divisor of T whose chunk working set fits the VMEM budget."""
    if requested is not None:
        assert T % requested == 0, (T, requested)
        return int(requested)
    fixed = 2 * (D * 3 * H + H * 3 * H) * w_bytes       # double-buffered weights
    fixed += 2 * (3 * H + H) * 4                         # biases
    fixed += Bc * H * 4                                  # carried h scratch
    per_t = 2 * Bc * D * io_bytes                        # x block (double-buf)
    per_t += 2 * Bc * H * io_bytes                       # out block (double-buf)
    per_t += Bc * 3 * H * 4                              # gi scratch (f32)
    tc_max = max(1, (budget_bytes - fixed) // per_t)
    tc = min(T, int(tc_max))
    while T % tc:
        tc -= 1
    return int(tc)


# --------------------------------------------------------------------------
# Recurrent kernel: one grid step == one (batch block, time chunk) tile.
# Grid = (num_batch_blocks, num_time_chunks); time is the inner/serial axis.
# --------------------------------------------------------------------------
def _make_gru_chunk_kernel(Tc, H, add_residual, reverse_input, reverse_output):
    def kernel(x_ref, wih_ref, whh_ref, bias_ref, bhn_ref, out_ref,
               gi_ref, h_ref):
        # Zero-init the carried hidden state at the FIRST TIME CHUNK of every
        # batch block (time is grid axis 1 -> no state leak across batch
        # blocks, and correct under a "parallel" batch axis).
        @pl.when(pl.program_id(1) == 0)
        def _():
            h_ref[...] = jnp.zeros_like(h_ref)

        _, Bc, D = x_ref.shape
        mm_dtype = whh_ref.dtype

        # Fused per-chunk input projection: one MXU-friendly
        # (Tc*Bc, D) x (D, 3H) matmul; biases (b_ir+b_hr, b_iz+b_hz, b_in)
        # folded in.  Result kept in f32 in a VMEM scratch.
        x2d = x_ref[...].reshape(Tc * Bc, D)
        gi = jnp.dot(x2d, wih_ref[...], preferred_element_type=jnp.float32)
        gi = gi + bias_ref[...]
        gi_ref[...] = gi.reshape(Tc, Bc, 3 * H)

        whh = whh_ref[...]                                   # (H, 3H) resident
        bhn = jnp.broadcast_to(bhn_ref[...], (Bc, H))        # hoisted broadcast

        def step(j, h):
            tj = (Tc - 1 - j) if reverse_input else j
            g = gi_ref[tj]                                   # (Bc, 3H) f32
            gh = jnp.dot(h.astype(mm_dtype), whh,
                         preferred_element_type=jnp.float32)  # (Bc, 3H)
            r = jax.nn.sigmoid(g[:, 0:H] + gh[:, 0:H])
            z = jax.nn.sigmoid(g[:, H:2 * H] + gh[:, H:2 * H])
            n = jnp.tanh(g[:, 2 * H:] + r * (gh[:, 2 * H:] + bhn))
            h_new = n + z * (h - n)                          # == (1-z)n + z h
            if add_residual:
                y = h_new + x_ref[tj].astype(jnp.float32)    # fused residual
            else:
                y = h_new
            oj = (Tc - 1 - j) if reverse_output else j
            out_ref[oj] = y.astype(out_ref.dtype)
            return h_new

        unroll = Tc if Tc <= 8 else 4
        h = jax.lax.fori_loop(0, Tc, step, h_ref[...], unroll=unroll)
        h_ref[...] = h

    return kernel


def gru_layer_pallas(x_tbd, wih_f, whh_f, bias_f, b_hn, *,
                     add_residual, reverse_input, reverse_output,
                     time_chunk=None):
    """One GRU layer over a time-major, already-padded sequence.

    x_tbd  : (T, Bp, D)  layer input (io dtype; D == Hp for residual layers)
    wih_f  : (D, 3H)     fused input->gates weights (r, z, n)
    whh_f  : (H, 3H)     fused hidden->gates weights (r, z, n)
    bias_f : (1, 3H)     folded biases (b_ir+b_hr, b_iz+b_hz, b_in), f32
    b_hn   : (1, H)      hidden bias of the n gate (scaled by r), f32
    returns: (T, Bp, H)  in io dtype
    """
    T, Bp, D = x_tbd.shape
    H3 = whh_f.shape[-1]
    H = H3 // 3
    io_dtype = x_tbd.dtype
    io_bytes = jnp.dtype(io_dtype).itemsize
    w_bytes = jnp.dtype(whh_f.dtype).itemsize
    sub = 32 // io_bytes

    Bc = _choose_batch_block(Bp, sub)
    NB = Bp // Bc

    vmem_limit = _vmem_limit_bytes()
    budget = int(vmem_limit * 0.6)
    Tc = _choose_time_chunk(T, Bc, H, D, io_bytes, w_bytes, budget, time_chunk)
    Nc = T // Tc

    def in_idx(b, c):
        return ((Nc - 1 - c) if reverse_input else c, b, 0)

    def out_idx(b, c):
        return ((Nc - 1 - c) if reverse_output else c, b, 0)

    kernel = _make_gru_chunk_kernel(Tc, H, add_residual,
                                    reverse_input, reverse_output)

    return pl.pallas_call(
        kernel,
        out_shape=jax.ShapeDtypeStruct((T, Bp, H), io_dtype),
        grid_spec=pltpu.PrefetchScalarGridSpec(
            num_scalar_prefetch=0,
            grid=(NB, Nc),
            in_specs=[
                pl.BlockSpec((Tc, Bc, D), in_idx),            # x chunk
                pl.BlockSpec((D, H3), lambda b, c: (0, 0)),   # Wih fused
                pl.BlockSpec((H, H3), lambda b, c: (0, 0)),   # Whh fused
                pl.BlockSpec((1, H3), lambda b, c: (0, 0)),   # folded biases
                pl.BlockSpec((1, H), lambda b, c: (0, 0)),    # b_hn
            ],
            out_specs=pl.BlockSpec((Tc, Bc, H), out_idx),
            scratch_shapes=[
                pltpu.VMEM((Tc, Bc, H3), jnp.float32),        # chunk gi
                pltpu.VMEM((Bc, H), jnp.float32),             # carried h
            ],
        ),
        compiler_params=pltpu.CompilerParams(
            dimension_semantics=("parallel", "arbitrary"),
            vmem_limit_bytes=vmem_limit,
        ),
    )(x_tbd, wih_f, whh_f, bias_f, b_hn)


# --------------------------------------------------------------------------
# Parameter packing: pad to (sub, 128) tiles, fuse gates, fold biases.
# --------------------------------------------------------------------------
def pack_layer_params(wih, whh, bih, bhh, *, d_pad, h_pad, w_dtype):
    """wih (3,D,H), whh (3,H,H), bih/bhh (3,1,H) in (r,z,n) order."""
    d, h = wih.shape[1], wih.shape[2]
    wih = jnp.pad(wih, ((0, 0), (0, d_pad - d), (0, h_pad - h)))
    whh = jnp.pad(whh, ((0, 0), (0, h_pad - h), (0, h_pad - h)))
    bih = jnp.pad(bih, ((0, 0), (0, 0), (0, h_pad - h)))
    bhh = jnp.pad(bhh, ((0, 0), (0, 0), (0, h_pad - h)))
    wih_f = jnp.concatenate([wih[0], wih[1], wih[2]], axis=-1).astype(w_dtype)
    whh_f = jnp.concatenate([whh[0], whh[1], whh[2]], axis=-1).astype(w_dtype)
    # r/z: both biases fold into the hoisted projection; n: only b_in folds,
    # b_hn stays inside the recurrence (scaled by r).
    bias_f = jnp.concatenate([bih[0] + bhh[0], bih[1] + bhh[1], bih[2]],
                             axis=-1).astype(jnp.float32)
    b_hn = bhh[2].astype(jnp.float32)
    return wih_f, whh_f, bias_f, b_hn


# --------------------------------------------------------------------------
# Full BiGRUForSRL forward.
# --------------------------------------------------------------------------
def bigru_for_srl_forward(x_btd, params, *, compute_dtype=jnp.bfloat16,
                          time_chunk=None):
    """Replicates BiGRUForSRL.forward.  x: (B, T, dim_in), batch_first."""
    L = len(params)
    B0, T, D0 = x_btd.shape
    H0 = params[0][1].shape[-1]

    io_bytes = jnp.dtype(compute_dtype).itemsize
    sub = 32 // io_bytes                     # sublane tile: 8 (f32) / 16 (bf16)
    Bp = _round_up(B0, sub)
    Dp = _round_up(D0, 128)
    Hp = _round_up(H0, 128)

    a = jnp.transpose(x_btd, (1, 0, 2))                       # time-major once
    a = jnp.pad(a, ((0, 0), (0, Bp - B0), (0, Dp - D0))).astype(compute_dtype)

    for l, p in enumerate(params):
        d_in = Dp if l == 0 else Hp
        wih_f, whh_f, bias_f, b_hn = pack_layer_params(
            *p, d_pad=d_in, h_pad=Hp, w_dtype=compute_dtype)
        a = gru_layer_pallas(
            a, wih_f, whh_f, bias_f, b_hn,
            add_residual=(l > 0),            # layers >= 2 add the flipped input
            reverse_input=(l > 0),           # time flip folded into index_map
            reverse_output=(l == L - 1),     # final flip folded into last layer
            time_chunk=time_chunk,
        )

    out = jnp.transpose(a.astype(jnp.float32), (1, 0, 2))     # batch-first once
    return out[:B0, :, :H0]                                   # drop padding


def init_params(key, dim_in, dim_u, num_layers):
    """Deterministic PyTorch-style init: U(-1/sqrt(H), 1/sqrt(H))."""
    params = []
    bound = 1.0 / float(dim_u) ** 0.5
    d = dim_in
    for _ in range(num_layers):
        key, k0, k1, k2, k3 = jax.random.split(key, 5)
        wih = jax.random.uniform(k0, (3, d, dim_u), jnp.float32, -bound, bound)
        whh = jax.random.uniform(k1, (3, dim_u, dim_u), jnp.float32, -bound, bound)
        bih = jax.random.uniform(k2, (3, 1, dim_u), jnp.float32, -bound, bound)
        bhh = jax.random.uniform(k3, (3, 1, dim_u), jnp.float32, -bound, bound)
        params.append((wih, whh, bih, bhh))
        d = dim_u
    return params


# ---------------- pure-JAX reference for validation ----------------
def _gru_layer_ref(x_btd, wih, whh, bih, bhh):
    B = x_btd.shape[0]
    H = whh.shape[-1]

    def step(h, x_t):
        gi = jnp.einsum('bd,gdh->gbh', x_t, wih) + bih
        gh = jnp.einsum('bh,ghk->gbk', h, whh) + bhh
        r = jax.nn.sigmoid(gi[0] + gh[0])
        z = jax.nn.sigmoid(gi[1] + gh[1])
        n = jnp.tanh(gi[2] + r * gh[2])
        h_new = (1.0 - z) * n + z * h
        return h_new, h_new

    h0 = jnp.zeros((B, H), jnp.float32)
    _, ys = jax.lax.scan(step, h0, jnp.transpose(x_btd, (1, 0, 2)))
    return jnp.transpose(ys, (1, 0, 2))


def bigru_ref(x_btd, params):
    out = _gru_layer_ref(x_btd, *params[0])
    for p in params[1:]:
        flipped = out[:, ::-1, :]
        out = flipped + _gru_layer_ref(flipped, *p)
    return out[:, ::-1, :]


if __name__ == "__main__":
    key = jax.random.PRNGKey(0)
    # (B, T, dim_in, dim_u, layers, compute_dtype, time_chunk, abs tol)
    configs = [
        # bf16 streams/weights, multi-chunk time axis (cross-chunk h carry,
        # reversed chunk index maps), fully-unrolled inner loop.
        (2, 8, 16, 32, 3, jnp.bfloat16, 4, 2e-1),
        # f32 everywhere, single chunk: strict numerical check vs reference.
        (2, 8, 16, 32, 3, jnp.float32, None, 2e-3),
        # f32, batch padded to 16 -> 2 "parallel" batch blocks, Tc=12 > 8 ->
        # partially-unrolled fori_loop path with dynamic ref indexing.
        (16, 24, 16, 32, 2, jnp.float32, 12, 2e-3),
    ]
    for (B, T, Din, H, L, cdt, tck, tol) in configs:
        key, kx, kp = jax.random.split(key, 3)
        x = jax.random.normal(kx, (B, T, Din), jnp.float32)
        params = init_params(kp, Din, H, L)

        fwd = jax.jit(functools.partial(bigru_for_srl_forward,
                                        compute_dtype=cdt, time_chunk=tck))
        out = jax.block_until_ready(fwd(x, params))

        ref = bigru_ref(x, params)
        assert out.shape == (B, T, H), out.shape
        err = float(jnp.max(jnp.abs(out - ref)))
        assert err < tol, (str(jnp.dtype(cdt)), tck, err)

    print("KERNEL_OK")
</pallas_src>

<mosaic_0001>
module attributes {stable_mosaic.version = 11 : i64} {
  func.func @kernel(%arg0: i32, %arg1: i32, %arg2: memref<4x16x128xbf16, #tpu.memory_space<vmem>>, %arg3: memref<128x384xbf16, #tpu.memory_space<vmem>>, %arg4: memref<128x384xbf16, #tpu.memory_space<vmem>>, %arg5: memref<1x384xf32, #tpu.memory_space<vmem>>, %arg6: memref<1x128xf32, #tpu.memory_space<vmem>>, %arg7: memref<4x16x128xbf16, #tpu.memory_space<vmem>>, %arg8: memref<4x16x384xf32, #tpu.memory_space<vmem>>, %arg9: memref<16x128xf32, #tpu.memory_space<vmem>>) attributes {dimension_semantics = [#tpu.dimension_semantics<parallel>, #tpu.dimension_semantics<arbitrary>], iteration_bounds = array<i64: 1, 2>, scalar_prefetch = 0 : i64, scratch_operands = 2 : i64, tpu.core_type = #tpu.core_type<tc>, window_params = [{transform_indices = @transform_0, window_bounds = array<i64: 4, 16, 128>}, {pipeline_mode = #tpu.pipeline_mode<synchronous>, transform_indices = @transform_1, window_bounds = array<i64: 128, 384>}, {pipeline_mode = #tpu.pipeline_mode<synchronous>, transform_indices = @transform_2, window_bounds = array<i64: 128, 384>}, {pipeline_mode = #tpu.pipeline_mode<synchronous>, transform_indices = @transform_3, window_bounds = array<i64: 1, 384>}, {pipeline_mode = #tpu.pipeline_mode<synchronous>, transform_indices = @transform_4, window_bounds = array<i64: 1, 128>}, {transform_indices = @transform_5, window_bounds = array<i64: 4, 16, 128>}]} {
    %c0_i32 = arith.constant 0 : i32
    %0 = arith.cmpi eq, %arg1, %c0_i32 : i32
    %1 = arith.extui %0 : i1 to i32
    %c0_i32_0 = arith.constant 0 : i32
    %2 = arith.cmpi ne, %1, %c0_i32_0 : i32
    scf.if %2 {
      %cst_47 = arith.constant 0.000000e+00 : f32
      %158 = vector.broadcast %cst_47 : f32 to vector<16x128xf32>
      %c0_48 = arith.constant 0 : index
      %c0_49 = arith.constant 0 : index
      %159 = vector.load %arg9[%c0_48, %c0_49] : memref<16x128xf32, #tpu.memory_space<vmem>>, vector<16x128xf32>
      tpu.vector_store %arg9[%c0_48, %c0_49], %158 {strides = array<i32>} : memref<16x128xf32, #tpu.memory_space<vmem>>, vector<16x128xf32>,
    } else {
    }
    %c0 = arith.constant 0 : index
    %c0_1 = arith.constant 0 : index
    %c0_2 = arith.constant 0 : index
    %3 = vector.load %arg2[%c0, %c0_1, %c0_2] : memref<4x16x128xbf16, #tpu.memory_space<vmem>>, vector<4x16x128xbf16>
    %4 = vector.shape_cast %3 : vector<4x16x128xbf16> to vector<64x128xbf16>
    %c0_3 = arith.constant 0 : index
    %c0_4 = arith.constant 0 : index
    %5 = vector.load %arg3[%c0_3, %c0_4] : memref<128x384xbf16, #tpu.memory_space<vmem>>, vector<128x384xbf16>
    %cst = arith.constant dense<0.000000e+00> : vector<64x384xf32>
    %6 = tpu.matmul %4, %5, %cst {dimension_numbers = #tpu.dot_dimension_numbers<[1], [0], [0], [1], [0, 0, 1, 1], [], []>} : vector<64x128xbf16>, vector<128x384xbf16>, vector<64x384xf32> -> vector<64x384xf32>
    %c0_5 = arith.constant 0 : index
    %c0_6 = arith.constant 0 : index
    %7 = vector.load %arg5[%c0_5, %c0_6] : memref<1x384xf32, #tpu.memory_space<vmem>>, vector<1x384xf32>
    %8 = vector.broadcast %7 : vector<1x384xf32> to vector<64x384xf32>
    %9 = arith.addf %6, %8 : vector<64x384xf32>
    %10 = vector.shape_cast %9 : vector<64x384xf32> to vector<4x16x384xf32>
    %c0_7 = arith.constant 0 : index
    %c0_8 = arith.constant 0 : index
    %c0_9 = arith.constant 0 : index
    %11 = vector.load %arg8[%c0_7, %c0_8, %c0_9] : memref<4x16x384xf32, #tpu.memory_space<vmem>>, vector<4x16x384xf32>
    tpu.vector_store %arg8[%c0_7, %c0_8, %c0_9], %10 {strides = array<i32>} : memref<4x16x384xf32, #tpu.memory_space<vmem>>, vector<4x16x384xf32>,
    %c0_10 = arith.constant 0 : index
    %c0_11 = arith.constant 0 : index
    %12 = vector.load %arg4[%c0_10, %c0_11] : memref<128x384xbf16, #tpu.memory_space<vmem>>, vector<128x384xbf16>
    %c0_12 = arith.constant 0 : index
    %c0_13 = arith.constant 0 : index
    %13 = vector.load %arg6[%c0_12, %c0_13] : memref<1x128xf32, #tpu.memory_space<vmem>>, vector<1x128xf32>
    %14 = vector.shape_cast %13 : vector<1x128xf32> to vector<1x128xf32>
    %15 = vector.broadcast %14 : vector<1x128xf32> to vector<16x128xf32>
    %c0_14 = arith.constant 0 : index
    %c0_15 = arith.constant 0 : index
    %16 = vector.load %arg9[%c0_14, %c0_15] : memref<16x128xf32, #tpu.memory_space<vmem>>, vector<16x128xf32>
    %c0_i32_16 = arith.constant 0 : i32
    %17 = arith.index_cast %c0_i32_16 : i32 to index
    %c0_17 = arith.constant 0 : index
    %c0_18 = arith.constant 0 : index
    %18 = vector.load %arg8[%17, %c0_17, %c0_18] : memref<4x16x384xf32, #tpu.memory_space<vmem>>, vector<1x16x384xf32>
    %19 = vector.shape_cast %18 : vector<1x16x384xf32> to vector<16x384xf32>
    %20 = arith.truncf %16 : vector<16x128xf32> to vector<16x128xbf16>
    %cst_19 = arith.constant dense<0.000000e+00> : vector<16x384xf32>
    %21 = tpu.matmul %20, %12, %cst_19 {dimension_numbers = #tpu.dot_dimension_numbers<[1], [0], [0], [1], [0, 0, 1, 1], [], []>} : vector<16x128xbf16>, vector<128x384xbf16>, vector<16x384xf32> -> vector<16x384xf32>
    %22 = vector.extract_strided_slice %19 {offsets = [0, 0], sizes = [16, 128], strides = [1, 1]} : vector<16x384xf32> to vector<16x128xf32>
    %23 = vector.extract_strided_slice %21 {offsets = [0, 0], sizes = [16, 128], strides = [1, 1]} : vector<16x384xf32> to vector<16x128xf32>
    %24 = arith.addf %22, %23 : vector<16x128xf32>
    %25 = arith.negf %24 : vector<16x128xf32>
    %26 = math.exp %25 : vector<16x128xf32>
    %cst_20 = arith.constant 1.000000e+00 : f32
    %27 = vector.broadcast %cst_20 : f32 to vector<16x128xf32>
    %28 = arith.addf %27, %26 : vector<16x128xf32>
    %29 = arith.divf %27, %28 : vector<16x128xf32>
    %30 = vector.extract_strided_slice %19 {offsets = [0, 128], sizes = [16, 128], strides = [1, 1]} : vector<16x384xf32> to vector<16x128xf32>
    %31 = vector.extract_strided_slice %21 {offsets = [0, 128], sizes = [16, 128], strides = [1, 1]} : vector<16x384xf32> to vector<16x128xf32>
    %32 = arith.addf %30, %31 : vector<16x128xf32>
    %33 = arith.negf %32 : vector<16x128xf32>
    %34 = math.exp %33 : vector<16x128xf32>
    %cst_21 = arith.constant 1.000000e+00 : f32
    %35 = vector.broadcast %cst_21 : f32 to vector<16x128xf32>
    %36 = arith.addf %35, %34 : vector<16x128xf32>
    %37 = arith.divf %35, %36 : vector<16x128xf32>
    %38 = vector.extract_strided_slice %19 {offsets = [0, 256], sizes = [16, 128], strides = [1, 1]} : vector<16x384xf32> to vector<16x128xf32>
    %39 = vector.extract_strided_slice %21 {offsets = [0, 256], sizes = [16, 128], strides = [1, 1]} : vector<16x384xf32> to vector<16x128xf32>
    %40 = arith.addf %39, %15 : vector<16x128xf32>
    %41 = arith.mulf %29, %40 : vector<16x128xf32>
    %42 = arith.addf %38, %41 : vector<16x128xf32>
    %43 = math.tanh %42 : vector<16x128xf32>
    %44 = arith.subf %16, %43 : vector<16x128xf32>
    %45 = arith.mulf %37, %44 : vector<16x128xf32>
    %46 = arith.addf %43, %45 : vector<16x128xf32>
    %47 = arith.truncf %46 : vector<16x128xf32> to vector<16x128xbf16>
    %48 = arith.index_cast %c0_i32_16 : i32 to index
    %c0_22 = arith.constant 0 : index
    %c0_23 = arith.constant 0 : index
    %49 = vector.load %arg7[%48, %c0_22, %c0_23] : memref<4x16x128xbf16, #tpu.memory_space<vmem>>, vector<1x16x128xbf16>
    %50 = vector.shape_cast %49 : vector<1x16x128xbf16> to vector<16x128xbf16>
    %51 = vector.shape_cast %47 : vector<16x128xbf16> to vector<1x16x128xbf16>
    tpu.vector_store %arg7[%48, %c0_22, %c0_23], %51 {strides = array<i32>} : memref<4x16x128xbf16, #tpu.memory_space<vmem>>, vector<1x16x128xbf16>,
    %c1_i32 = arith.constant 1 : i32
    %52 = arith.index_cast %c1_i32 : i32 to index
    %c0_24 = arith.constant 0 : index
    %c0_25 = arith.constant 0 : index
    %53 = vector.load %arg8[%52, %c0_24, %c0_25] : memref<4x16x384xf32, #tpu.memory_space<vmem>>, vector<1x16x384xf32>
    %54 = vector.shape_cast %53 : vector<1x16x384xf32> to vector<16x384xf32>
    %55 = arith.truncf %46 : vector<16x128xf32> to vector<16x128xbf16>
    %cst_26 = arith.constant dense<0.000000e+00> : vector<16x384xf32>
    %56 = tpu.matmul %55, %12, %cst_26 {dimension_numbers = #tpu.dot_dimension_numbers<[1], [0], [0], [1], [0, 0, 1, 1], [], []>} : vector<16x128xbf16>, vector<128x384xbf16>, vector<16x384xf32> -> vector<16x384xf32>
    %57 = vector.extract_strided_slice %54 {offsets = [0, 0], sizes = [16, 128], strides = [1, 1]} : vector<16x384xf32> to vector<16x128xf32>
    %58 = vector.extract_strided_slice %56 {offsets = [0, 0], sizes = [16, 128], strides = [1, 1]} : vector<16x384xf32> to vector<16x128xf32>
    %59 = arith.addf %57, %58 : vector<16x128xf32>
    %60 = arith.negf %59 : vector<16x128xf32>
    %61 = math.exp %60 : vector<16x128xf32>
    %cst_27 = arith.constant 1.000000e+00 : f32
    %62 = vector.broadcast %cst_27 : f32 to vector<16x128xf32>
    %63 = arith.addf %62, %61 : vector<16x128xf32>
    %64 = arith.divf %62, %63 : vector<16x128xf32>
    %65 = vector.extract_strided_slice %54 {offsets = [0, 128], sizes = [16, 128], strides = [1, 1]} : vector<16x384xf32> to vector<16x128xf32>
    %66 = vector.extract_strided_slice %56 {offsets = [0, 128], sizes = [16, 128], strides = [1, 1]} : vector<16x384xf32> to vector<16x128xf32>
    %67 = arith.addf %65, %66 : vector<16x128xf32>
    %68 = arith.negf %67 : vector<16x128xf32>
    %69 = math.exp %68 : vector<16x128xf32>
    %cst_28 = arith.constant 1.000000e+00 : f32
    %70 = vector.broadcast %cst_28 : f32 to vector<16x128xf32>
    %71 = arith.addf %70, %69 : vector<16x128xf32>
    %72 = arith.divf %70, %71 : vector<16x128xf32>
    %73 = vector.extract_strided_slice %54 {offsets = [0, 256], sizes = [16, 128], strides = [1, 1]} : vector<16x384xf32> to vector<16x128xf32>
    %74 = vector.extract_strided_slice %56 {offsets = [0, 256], sizes = [16, 128], strides = [1, 1]} : vector<16x384xf32> to vector<16x128xf32>
    %75 = arith.addf %74, %15 : vector<16x128xf32>
    %76 = arith.mulf %64, %75 : vector<16x128xf32>
    %77 = arith.addf %73, %76 : vector<16x128xf32>
    %78 = math.tanh %77 : vector<16x128xf32>
    %79 = arith.subf %46, %78 : vector<16x128xf32>
    %80 = arith.mulf %72, %79 : vector<16x128xf32>
    %81 = arith.addf %78, %80 : vector<16x128xf32>
    %82 = arith.truncf %81 : vector<16x128xf32> to vector<16x128xbf16>
    %83 = arith.index_cast %c1_i32 : i32 to index
    %c0_29 = arith.constant 0 : index
    %c0_30 = arith.constant 0 : index
    %84 = vector.load %arg7[%83, %c0_29, %c0_30] : memref<4x16x128xbf16, #tpu.memory_space<vmem>>, vector<1x16x128xbf16>
    %85 = vector.shape_cast %84 : vector<1x16x128xbf16> to vector<16x128xbf16>
    %86 = vector.shape_cast %82 : vector<16x128xbf16> to vector<1x16x128xbf16>
    tpu.vector_store %arg7[%83, %c0_29, %c0_30], %86 {strides = array<i32>} : memref<4x16x128xbf16, #tpu.memory_space<vmem>>, vector<1x16x128xbf16>,
    %c2_i32 = arith.constant 2 : i32
    %87 = arith.index_cast %c2_i32 : i32 to index
    %c0_31 = arith.constant 0 : index
    %c0_32 = arith.constant 0 : index
    %88 = vector.load %arg8[%87, %c0_31, %c0_32] : memref<4x16x384xf32, #tpu.memory_space<vmem>>, vector<1x16x384xf32>
    %89 = vector.shape_cast %88 : vector<1x16x384xf32> to vector<16x384xf32>
    %90 = arith.truncf %81 : vector<16x128xf32> to vector<16x128xbf16>
    %cst_33 = arith.constant dense<0.000000e+00> : vector<16x384xf32>
    %91 = tpu.matmul %90, %12, %cst_33 {dimension_numbers = #tpu.dot_dimension_numbers<[1], [0], [0], [1], [0, 0, 1, 1], [], []>} : vector<16x128xbf16>, vector<128x384xbf16>, vector<16x384xf32> -> vector<16x384xf32>
    %92 = vector.extract_strided_slice %89 {offsets = [0, 0], sizes = [16, 128], strides = [1, 1]} : vector<16x384xf32> to vector<16x128xf32>
    %93 = vector.extract_strided_slice %91 {offsets = [0, 0], sizes = [16, 128], strides = [1, 1]} : vector<16x384xf32> to vector<16x128xf32>
    %94 = arith.addf %92, %93 : vector<16x128xf32>
    %95 = arith.negf %94 : vector<16x128xf32>
    %96 = math.exp %95 : vector<16x128xf32>
    %cst_34 = arith.constant 1.000000e+00 : f32
    %97 = vector.broadcast %cst_34 : f32 to vector<16x128xf32>
    %98 = arith.addf %97, %96 : vector<16x128xf32>
    %99 = arith.divf %97, %98 : vector<16x128xf32>
    %100 = vector.extract_strided_slice %89 {offsets = [0, 128], sizes = [16, 128], strides = [1, 1]} : vector<16x384xf32> to vector<16x128xf32>
    %101 = vector.extract_strided_slice %91 {offsets = [0, 128], sizes = [16, 128], strides = [1, 1]} : vector<16x384xf32> to vector<16x128xf32>
    %102 = arith.addf %100, %101 : vector<16x128xf32>
    %103 = arith.negf %102 : vector<16x128xf32>
    %104 = math.exp %103 : vector<16x128xf32>
    %cst_35 = arith.constant 1.000000e+00 : f32
    %105 = vector.broadcast %cst_35 : f32 to vector<16x128xf32>
    %106 = arith.addf %105, %104 : vector<16x128xf32>
    %107 = arith.divf %105, %106 : vector<16x128xf32>
    %108 = vector.extract_strided_slice %89 {offsets = [0, 256], sizes = [16, 128], strides = [1, 1]} : vector<16x384xf32> to vector<16x128xf32>
    %109 = vector.extract_strided_slice %91 {offsets = [0, 256], sizes = [16, 128], strides = [1, 1]} : vector<16x384xf32> to vector<16x128xf32>
    %110 = arith.addf %109, %15 : vector<16x128xf32>
    %111 = arith.mulf %99, %110 : vector<16x128xf32>
    %112 = arith.addf %108, %111 : vector<16x128xf32>
    %113 = math.tanh %112 : vector<16x128xf32>
    %114 = arith.subf %81, %113 : vector<16x128xf32>
    %115 = arith.mulf %107, %114 : vector<16x128xf32>
    %116 = arith.addf %113, %115 : vector<16x128xf32>
    %117 = arith.truncf %116 : vector<16x128xf32> to vector<16x128xbf16>
    %118 = arith.index_cast %c2_i32 : i32 to index
    %c0_36 = arith.constant 0 : index
    %c0_37 = arith.constant 0 : index
    %119 = vector.load %arg7[%118, %c0_36, %c0_37] : memref<4x16x128xbf16, #tpu.memory_space<vmem>>, vector<1x16x128xbf16>
    %120 = vector.shape_cast %119 : vector<1x16x128xbf16> to vector<16x128xbf16>
    %121 = vector.shape_cast %117 : vector<16x128xbf16> to vector<1x16x128xbf16>
    tpu.vector_store %arg7[%118, %c0_36, %c0_37], %121 {strides = array<i32>} : memref<4x16x128xbf16, #tpu.memory_space<vmem>>, vector<1x16x128xbf16>,
    %c3_i32 = arith.constant 3 : i32
    %122 = arith.index_cast %c3_i32 : i32 to index
    %c0_38 = arith.constant 0 : index
    %c0_39 = arith.constant 0 : index
    %123 = vector.load %arg8[%122, %c0_38, %c0_39] : memref<4x16x384xf32, #tpu.memory_space<vmem>>, vector<1x16x384xf32>
    %124 = vector.shape_cast %123 : vector<1x16x384xf32> to vector<16x384xf32>
    %125 = arith.truncf %116 : vector<16x128xf32> to vector<16x128xbf16>
    %cst_40 = arith.constant dense<0.000000e+00> : vector<16x384xf32>
    %126 = tpu.matmul %125, %12, %cst_40 {dimension_numbers = #tpu.dot_dimension_numbers<[1], [0], [0], [1], [0, 0, 1, 1], [], []>} : vector<16x128xbf16>, vector<128x384xbf16>, vector<16x384xf32> -> vector<16x384xf32>
    %127 = vector.extract_strided_slice %124 {offsets = [0, 0], sizes = [16, 128], strides = [1, 1]} : vector<16x384xf32> to vector<16x128xf32>
    %128 = vector.extract_strided_slice %126 {offsets = [0, 0], sizes = [16, 128], strides = [1, 1]} : vector<16x384xf32> to vector<16x128xf32>
    %129 = arith.addf %127, %128 : vector<16x128xf32>
    %130 = arith.negf %129 : vector<16x128xf32>
    %131 = math.exp %130 : vector<16x128xf32>
    %cst_41 = arith.constant 1.000000e+00 : f32
    %132 = vector.broadcast %cst_41 : f32 to vector<16x128xf32>
    %133 = arith.addf %132, %131 : vector<16x128xf32>
    %134 = arith.divf %132, %133 : vector<16x128xf32>
    %135 = vector.extract_strided_slice %124 {offsets = [0, 128], sizes = [16, 128], strides = [1, 1]} : vector<16x384xf32> to vector<16x128xf32>
    %136 = vector.extract_strided_slice %126 {offsets = [0, 128], sizes = [16, 128], strides = [1, 1]} : vector<16x384xf32> to vector<16x128xf32>
    %137 = arith.addf %135, %136 : vector<16x128xf32>
    %138 = arith.negf %137 : vector<16x128xf32>
    %139 = math.exp %138 : vector<16x128xf32>
    %cst_42 = arith.constant 1.000000e+00 : f32
    %140 = vector.broadcast %cst_42 : f32 to vector<16x128xf32>
    %141 = arith.addf %140, %139 : vector<16x128xf32>
    %142 = arith.divf %140, %141 : vector<16x128xf32>
    %143 = vector.extract_strided_slice %124 {offsets = [0, 256], sizes = [16, 128], strides = [1, 1]} : vector<16x384xf32> to vector<16x128xf32>
    %144 = vector.extract_strided_slice %126 {offsets = [0, 256], sizes = [16, 128], strides = [1, 1]} : vector<16x384xf32> to vector<16x128xf32>
    %145 = arith.addf %144, %15 : vector<16x128xf32>
    %146 = arith.mulf %134, %145 : vector<16x128xf32>
    %147 = arith.addf %143, %146 : vector<16x128xf32>
    %148 = math.tanh %147 : vector<16x128xf32>
    %149 = arith.subf %116, %148 : vector<16x128xf32>
    %150 = arith.mulf %142, %149 : vector<16x128xf32>
    %151 = arith.addf %148, %150 : vector<16x128xf32>
    %152 = arith.truncf %151 : vector<16x128xf32> to vector<16x128xbf16>
    %153 = arith.index_cast %c3_i32 : i32 to index
    %c0_43 = arith.constant 0 : index
    %c0_44 = arith.constant 0 : index
    %154 = vector.load %arg7[%153, %c0_43, %c0_44] : memref<4x16x128xbf16, #tpu.memory_space<vmem>>, vector<1x16x128xbf16>
    %155 = vector.shape_cast %154 : vector<1x16x128xbf16> to vector<16x128xbf16>
    %156 = vector.shape_cast %152 : vector<16x128xbf16> to vector<1x16x128xbf16>
    tpu.vector_store %arg7[%153, %c0_43, %c0_44], %156 {strides = array<i32>} : memref<4x16x128xbf16, #tpu.memory_space<vmem>>, vector<1x16x128xbf16>,
    %c4_i32 = arith.constant 4 : i32
    %c0_45 = arith.constant 0 : index
    %c0_46 = arith.constant 0 : index
    %157 = vector.load %arg9[%c0_45, %c0_46] : memref<16x128xf32, #tpu.memory_space<vmem>>, vector<16x128xf32>
    tpu.vector_store %arg9[%c0_45, %c0_46], %151 {strides = array<i32>} : memref<16x128xf32, #tpu.memory_space<vmem>>, vector<16x128xf32>,
    return
  }
  func.func @transform_0(%arg0: i32, %arg1: i32) -> (i32, i32, i32) {
    %c0_i32 = arith.constant 0 : i32
    %c0_i32_0 = arith.constant 0 : i32
    return %arg1, %arg0, %c0_i32 : i32, i32, i32
  }
  func.func @transform_1(%arg0: i32, %arg1: i32) -> (i32, i32) {
    %c0_i32 = arith.constant 0 : i32
    %c0_i32_0 = arith.constant 0 : i32
    %c0_i32_1 = arith.constant 0 : i32
    return %c0_i32, %c0_i32_0 : i32, i32
  }
  func.func @transform_2(%arg0: i32, %arg1: i32) -> (i32, i32) {
    %c0_i32 = arith.constant 0 : i32
    %c0_i32_0 = arith.constant 0 : i32
    %c0_i32_1 = arith.constant 0 : i32
    return %c0_i32, %c0_i32_0 : i32, i32
  }
  func.func @transform_3(%arg0: i32, %arg1: i32) -> (i32, i32) {
    %c0_i32 = arith.constant 0 : i32
    %c0_i32_0 = arith.constant 0 : i32
    %c0_i32_1 = arith.constant 0 : i32
    return %c0_i32, %c0_i32_0 : i32, i32
  }
  func.func @transform_4(%arg0: i32, %arg1: i32) -> (i32, i32) {
    %c0_i32 = arith.constant 0 : i32
    %c0_i32_0 = arith.constant 0 : i32
    %c0_i32_1 = arith.constant 0 : i32
    return %c0_i32, %c0_i32_0 : i32, i32
  }
  func.func @transform_5(%arg0: i32, %arg1: i32) -> (i32, i32, i32) {
    %c0_i32 = arith.constant 0 : i32
    %c0_i32_0 = arith.constant 0 : i32
    return %arg1, %arg0, %c0_i32 : i32, i32, i32
  }
}

module attributes {stable_mosaic.version = 11 : i64} {
  func.func @kernel(%arg0: i32, %arg1: i32, %arg2: memref<4x16x128xbf16, #tpu.memory_space<vmem>>, %arg3: memref<128x384xbf16, #tpu.memory_space<vmem>>, %arg4: memref<128x384xbf16, #tpu.memory_space<vmem>>, %arg5: memref<1x384xf32, #tpu.memory_space<vmem>>, %arg6: memref<1x128xf32, #tpu.memory_space<vmem>>, %arg7: memref<4x16x128xbf16, #tpu.memory_space<vmem>>, %arg8: memref<4x16x384xf32, #tpu.memory_space<vmem>>, %arg9: memref<16x128xf32, #tpu.memory_space<vmem>>) attributes {dimension_semantics = [#tpu.dimension_semantics<parallel>, #tpu.dimension_semantics<arbitrary>], iteration_bounds = array<i64: 1, 2>, scalar_prefetch = 0 : i64, scratch_operands = 2 : i64, tpu.core_type = #tpu.core_type<tc>, window_params = [{transform_indices = @transform_0, window_bounds = array<i64: 4, 16, 128>}, {pipeline_mode = #tpu.pipeline_mode<synchronous>, transform_indices = @transform_1, window_bounds = array<i64: 128, 384>}, {pipeline_mode = #tpu.pipeline_mode<synchronous>, transform_indices = @transform_2, window_bounds = array<i64: 128, 384>}, {pipeline_mode = #tpu.pipeline_mode<synchronous>, transform_indices = @transform_3, window_bounds = array<i64: 1, 384>}, {pipeline_mode = #tpu.pipeline_mode<synchronous>, transform_indices = @transform_4, window_bounds = array<i64: 1, 128>}, {transform_indices = @transform_5, window_bounds = array<i64: 4, 16, 128>}]} {
    %c0_i32 = arith.constant 0 : i32
    %0 = arith.cmpi eq, %arg1, %c0_i32 : i32
    %1 = arith.extui %0 : i1 to i32
    %c0_i32_0 = arith.constant 0 : i32
    %2 = arith.cmpi ne, %1, %c0_i32_0 : i32
    scf.if %2 {
      %cst_59 = arith.constant 0.000000e+00 : f32
      %182 = vector.broadcast %cst_59 : f32 to vector<16x128xf32>
      %c0_60 = arith.constant 0 : index
      %c0_61 = arith.constant 0 : index
      %183 = vector.load %arg9[%c0_60, %c0_61] : memref<16x128xf32, #tpu.memory_space<vmem>>, vector<16x128xf32>
      tpu.vector_store %arg9[%c0_60, %c0_61], %182 {strides = array<i32>} : memref<16x128xf32, #tpu.memory_space<vmem>>, vector<16x128xf32>,
    } else {
    }
    %c0 = arith.constant 0 : index
    %c0_1 = arith.constant 0 : index
    %c0_2 = arith.constant 0 : index
    %3 = vector.load %arg2[%c0, %c0_1, %c0_2] : memref<4x16x128xbf16, #tpu.memory_space<vmem>>, vector<4x16x128xbf16>
    %4 = vector.shape_cast %3 : vector<4x16x128xbf16> to vector<64x128xbf16>
    %c0_3 = arith.constant 0 : index
    %c0_4 = arith.constant 0 : index
    %5 = vector.load %arg3[%c0_3, %c0_4] : memref<128x384xbf16, #tpu.memory_space<vmem>>, vector<128x384xbf16>
    %cst = arith.constant dense<0.000000e+00> : vector<64x384xf32>
    %6 = tpu.matmul %4, %5, %cst {dimension_numbers = #tpu.dot_dimension_numbers<[1], [0], [0], [1], [0, 0, 1, 1], [], []>} : vector<64x128xbf16>, vector<128x384xbf16>, vector<64x384xf32> -> vector<64x384xf32>
    %c0_5 = arith.constant 0 : index
    %c0_6 = arith.constant 0 : index
    %7 = vector.load %arg5[%c0_5, %c0_6] : memref<1x384xf32, #tpu.memory_space<vmem>>, vector<1x384xf32>
    %8 = vector.broadcast %7 : vector<1x384xf32> to vector<64x384xf32>
    %9 = arith.addf %6, %8 : vector<64x384xf32>
    %10 = vector.shape_cast %9 : vector<64x384xf32> to vector<4x16x384xf32>
    %c0_7 = arith.constant 0 : index
    %c0_8 = arith.constant 0 : index
    %c0_9 = arith.constant 0 : index
    %11 = vector.load %arg8[%c0_7, %c0_8, %c0_9] : memref<4x16x384xf32, #tpu.memory_space<vmem>>, vector<4x16x384xf32>
    tpu.vector_store %arg8[%c0_7, %c0_8, %c0_9], %10 {strides = array<i32>} : memref<4x16x384xf32, #tpu.memory_space<vmem>>, vector<4x16x384xf32>,
    %c0_10 = arith.constant 0 : index
    %c0_11 = arith.constant 0 : index
    %12 = vector.load %arg4[%c0_10, %c0_11] : memref<128x384xbf16, #tpu.memory_space<vmem>>, vector<128x384xbf16>
    %c0_12 = arith.constant 0 : index
    %c0_13 = arith.constant 0 : index
    %13 = vector.load %arg6[%c0_12, %c0_13] : memref<1x128xf32, #tpu.memory_space<vmem>>, vector<1x128xf32>
    %14 = vector.shape_cast %13 : vector<1x128xf32> to vector<1x128xf32>
    %15 = vector.broadcast %14 : vector<1x128xf32> to vector<16x128xf32>
    %c0_14 = arith.constant 0 : index
    %c0_15 = arith.constant 0 : index
    %16 = vector.load %arg9[%c0_14, %c0_15] : memref<16x128xf32, #tpu.memory_space<vmem>>, vector<16x128xf32>
    %c0_i32_16 = arith.constant 0 : i32
    %c3_i32 = arith.constant 3 : i32
    %17 = arith.subi %c3_i32, %c0_i32_16 : i32
    %18 = arith.index_cast %17 : i32 to index
    %c0_17 = arith.constant 0 : index
    %c0_18 = arith.constant 0 : index
    %19 = vector.load %arg8[%18, %c0_17, %c0_18] : memref<4x16x384xf32, #tpu.memory_space<vmem>>, vector<1x16x384xf32>
    %20 = vector.shape_cast %19 : vector<1x16x384xf32> to vector<16x384xf32>
    %21 = arith.truncf %16 : vector<16x128xf32> to vector<16x128xbf16>
    %cst_19 = arith.constant dense<0.000000e+00> : vector<16x384xf32>
    %22 = tpu.matmul %21, %12, %cst_19 {dimension_numbers = #tpu.dot_dimension_numbers<[1], [0], [0], [1], [0, 0, 1, 1], [], []>} : vector<16x128xbf16>, vector<128x384xbf16>, vector<16x384xf32> -> vector<16x384xf32>
    %23 = vector.extract_strided_slice %20 {offsets = [0, 0], sizes = [16, 128], strides = [1, 1]} : vector<16x384xf32> to vector<16x128xf32>
    %24 = vector.extract_strided_slice %22 {offsets = [0, 0], sizes = [16, 128], strides = [1, 1]} : vector<16x384xf32> to vector<16x128xf32>
    %25 = arith.addf %23, %24 : vector<16x128xf32>
    %26 = arith.negf %25 : vector<16x128xf32>
    %27 = math.exp %26 : vector<16x128xf32>
    %cst_20 = arith.constant 1.000000e+00 : f32
    %28 = vector.broadcast %cst_20 : f32 to vector<16x128xf32>
    %29 = arith.addf %28, %27 : vector<16x128xf32>
    %30 = arith.divf %28, %29 : vector<16x128xf32>
    %31 = vector.extract_strided_slice %20 {offsets = [0, 128], sizes = [16, 128], strides = [1, 1]} : vector<16x384xf32> to vector<16x128xf32>
    %32 = vector.extract_strided_slice %22 {offsets = [0, 128], sizes = [16, 128], strides = [1, 1]} : vector<16x384xf32> to vector<16x128xf32>
    %33 = arith.addf %31, %32 : vector<16x128xf32>
    %34 = arith.negf %33 : vector<16x128xf32>
    %35 = math.exp %34 : vector<16x128xf32>
    %cst_21 = arith.constant 1.000000e+00 : f32
    %36 = vector.broadcast %cst_21 : f32 to vector<16x128xf32>
    %37 = arith.addf %36, %35 : vector<16x128xf32>
    %38 = arith.divf %36, %37 : vector<16x128xf32>
    %39 = vector.extract_strided_slice %20 {offsets = [0, 256], sizes = [16, 128], strides = [1, 1]} : vector<16x384xf32> to vector<16x128xf32>
    %40 = vector.extract_strided_slice %22 {offsets = [0, 256], sizes = [16, 128], strides = [1, 1]} : vector<16x384xf32> to vector<16x128xf32>
    %41 = arith.addf %40, %15 : vector<16x128xf32>
    %42 = arith.mulf %30, %41 : vector<16x128xf32>
    %43 = arith.addf %39, %42 : vector<16x128xf32>
    %44 = math.tanh %43 : vector<16x128xf32>
    %45 = arith.subf %16, %44 : vector<16x128xf32>
    %46 = arith.mulf %38, %45 : vector<16x128xf32>
    %47 = arith.addf %44, %46 : vector<16x128xf32>
    %48 = arith.index_cast %17 : i32 to index
    %c0_22 = arith.constant 0 : index
    %c0_23 = arith.constant 0 : index
    %49 = vector.load %arg2[%48, %c0_22, %c0_23] : memref<4x16x128xbf16, #tpu.memory_space<vmem>>, vector<1x16x128xbf16>
    %50 = vector.shape_cast %49 : vector<1x16x128xbf16> to vector<16x128xbf16>
    %51 = arith.extf %50 : vector<16x128xbf16> to vector<16x128xf32>
    %52 = arith.addf %47, %51 : vector<16x128xf32>
    %53 = arith.truncf %52 : vector<16x128xf32> to vector<16x128xbf16>
    %54 = arith.index_cast %c0_i32_16 : i32 to index
    %c0_24 = arith.constant 0 : index
    %c0_25 = arith.constant 0 : index
    %55 = vector.load %arg7[%54, %c0_24, %c0_25] : memref<4x16x128xbf16, #tpu.memory_space<vmem>>, vector<1x16x128xbf16>
    %56 = vector.shape_cast %55 : vector<1x16x128xbf16> to vector<16x128xbf16>
    %57 = vector.shape_cast %53 : vector<16x128xbf16> to vector<1x16x128xbf16>
    tpu.vector_store %arg7[%54, %c0_24, %c0_25], %57 {strides = array<i32>} : memref<4x16x128xbf16, #tpu.memory_space<vmem>>, vector<1x16x128xbf16>,
    %c1_i32 = arith.constant 1 : i32
    %c3_i32_26 = arith.constant 3 : i32
    %58 = arith.subi %c3_i32_26, %c1_i32 : i32
    %59 = arith.index_cast %58 : i32 to index
    %c0_27 = arith.constant 0 : index
    %c0_28 = arith.constant 0 : index
    %60 = vector.load %arg8[%59, %c0_27, %c0_28] : memref<4x16x384xf32, #tpu.memory_space<vmem>>, vector<1x16x384xf32>
    %61 = vector.shape_cast %60 : vector<1x16x384xf32> to vector<16x384xf32>
    %62 = arith.truncf %47 : vector<16x128xf32> to vector<16x128xbf16>
    %cst_29 = arith.constant dense<0.000000e+00> : vector<16x384xf32>
    %63 = tpu.matmul %62, %12, %cst_29 {dimension_numbers = #tpu.dot_dimension_numbers<[1], [0], [0], [1], [0, 0, 1, 1], [], []>} : vector<16x128xbf16>, vector<128x384xbf16>, vector<16x384xf32> -> vector<16x384xf32>
    %64 = vector.extract_strided_slice %61 {offsets = [0, 0], sizes = [16, 128], strides = [1, 1]} : vector<16x384xf32> to vector<16x128xf32>
    %65 = vector.extract_strided_slice %63 {offsets = [0, 0], sizes = [16, 128], strides = [1, 1]} : vector<16x384xf32> to vector<16x128xf32>
    %66 = arith.addf %64, %65 : vector<16x128xf32>
    %67 = arith.negf %66 : vector<16x128xf32>
    %68 = math.exp %67 : vector<16x128xf32>
    %cst_30 = arith.constant 1.000000e+00 : f32
    %69 = vector.broadcast %cst_30 : f32 to vector<16x128xf32>
    %70 = arith.addf %69, %68 : vector<16x128xf32>
    %71 = arith.divf %69, %70 : vector<16x128xf32>
    %72 = vector.extract_strided_slice %61 {offsets = [0, 128], sizes = [16, 128], strides = [1, 1]} : vector<16x384xf32> to vector<16x128xf32>
    %73 = vector.extract_strided_slice %63 {offsets = [0, 128], sizes = [16, 128], strides = [1, 1]} : vector<16x384xf32> to vector<16x128xf32>
    %74 = arith.addf %72, %73 : vector<16x128xf32>
    %75 = arith.negf %74 : vector<16x128xf32>
    %76 = math.exp %75 : vector<16x128xf32>
    %cst_31 = arith.constant 1.000000e+00 : f32
    %77 = vector.broadcast %cst_31 : f32 to vector<16x128xf32>
    %78 = arith.addf %77, %76 : vector<16x128xf32>
    %79 = arith.divf %77, %78 : vector<16x128xf32>
    %80 = vector.extract_strided_slice %61 {offsets = [0, 256], sizes = [16, 128], strides = [1, 1]} : vector<16x384xf32> to vector<16x128xf32>
    %81 = vector.extract_strided_slice %63 {offsets = [0, 256], sizes = [16, 128], strides = [1, 1]} : vector<16x384xf32> to vector<16x128xf32>
    %82 = arith.addf %81, %15 : vector<16x128xf32>
    %83 = arith.mulf %71, %82 : vector<16x128xf32>
    %84 = arith.addf %80, %83 : vector<16x128xf32>
    %85 = math.tanh %84 : vector<16x128xf32>
    %86 = arith.subf %47, %85 : vector<16x128xf32>
    %87 = arith.mulf %79, %86 : vector<16x128xf32>
    %88 = arith.addf %85, %87 : vector<16x128xf32>
    %89 = arith.index_cast %58 : i32 to index
    %c0_32 = arith.constant 0 : index
    %c0_33 = arith.constant 0 : index
    %90 = vector.load %arg2[%89, %c0_32, %c0_33] : memref<4x16x128xbf16, #tpu.memory_space<vmem>>, vector<1x16x128xbf16>
    %91 = vector.shape_cast %90 : vector<1x16x128xbf16> to vector<16x128xbf16>
    %92 = arith.extf %91 : vector<16x128xbf16> to vector<16x128xf32>
    %93 = arith.addf %88, %92 : vector<16x128xf32>
    %94 = arith.truncf %93 : vector<16x128xf32> to vector<16x128xbf16>
    %95 = arith.index_cast %c1_i32 : i32 to index
    %c0_34 = arith.constant 0 : index
    %c0_35 = arith.constant 0 : index
    %96 = vector.load %arg7[%95, %c0_34, %c0_35] : memref<4x16x128xbf16, #tpu.memory_space<vmem>>, vector<1x16x128xbf16>
    %97 = vector.shape_cast %96 : vector<1x16x128xbf16> to vector<16x128xbf16>
    %98 = vector.shape_cast %94 : vector<16x128xbf16> to vector<1x16x128xbf16>
    tpu.vector_store %arg7[%95, %c0_34, %c0_35], %98 {strides = array<i32>} : memref<4x16x128xbf16, #tpu.memory_space<vmem>>, vector<1x16x128xbf16>,
    %c2_i32 = arith.constant 2 : i32
    %c3_i32_36 = arith.constant 3 : i32
    %99 = arith.subi %c3_i32_36, %c2_i32 : i32
    %100 = arith.index_cast %99 : i32 to index
    %c0_37 = arith.constant 0 : index
    %c0_38 = arith.constant 0 : index
    %101 = vector.load %arg8[%100, %c0_37, %c0_38] : memref<4x16x384xf32, #tpu.memory_space<vmem>>, vector<1x16x384xf32>
    %102 = vector.shape_cast %101 : vector<1x16x384xf32> to vector<16x384xf32>
    %103 = arith.truncf %88 : vector<16x128xf32> to vector<16x128xbf16>
    %cst_39 = arith.constant dense<0.000000e+00> : vector<16x384xf32>
    %104 = tpu.matmul %103, %12, %cst_39 {dimension_numbers = #tpu.dot_dimension_numbers<[1], [0], [0], [1], [0, 0, 1, 1], [], []>} : vector<16x128xbf16>, vector<128x384xbf16>, vector<16x384xf32> -> vector<16x384xf32>
    %105 = vector.extract_strided_slice %102 {offsets = [0, 0], sizes = [16, 128], strides = [1, 1]} : vector<16x384xf32> to vector<16x128xf32>
    %106 = vector.extract_strided_slice %104 {offsets = [0, 0], sizes = [16, 128], strides = [1, 1]} : vector<16x384xf32> to vector<16x128xf32>
    %107 = arith.addf %105, %106 : vector<16x128xf32>
    %108 = arith.negf %107 : vector<16x128xf32>
    %109 = math.exp %108 : vector<16x128xf32>
    %cst_40 = arith.constant 1.000000e+00 : f32
    %110 = vector.broadcast %cst_40 : f32 to vector<16x128xf32>
    %111 = arith.addf %110, %109 : vector<16x128xf32>
    %112 = arith.divf %110, %111 : vector<16x128xf32>
    %113 = vector.extract_strided_slice %102 {offsets = [0, 128], sizes = [16, 128], strides = [1, 1]} : vector<16x384xf32> to vector<16x128xf32>
    %114 = vector.extract_strided_slice %104 {offsets = [0, 128], sizes = [16, 128], strides = [1, 1]} : vector<16x384xf32> to vector<16x128xf32>
    %115 = arith.addf %113, %114 : vector<16x128xf32>
    %116 = arith.negf %115 : vector<16x128xf32>
    %117 = math.exp %116 : vector<16x128xf32>
    %cst_41 = arith.constant 1.000000e+00 : f32
    %118 = vector.broadcast %cst_41 : f32 to vector<16x128xf32>
    %119 = arith.addf %118, %117 : vector<16x128xf32>
    %120 = arith.divf %118, %119 : vector<16x128xf32>
    %121 = vector.extract_strided_slice %102 {offsets = [0, 256], sizes = [16, 128], strides = [1, 1]} : vector<16x384xf32> to vector<16x128xf32>
    %122 = vector.extract_strided_slice %104 {offsets = [0, 256], sizes = [16, 128], strides = [1, 1]} : vector<16x384xf32> to vector<16x128xf32>
    %123 = arith.addf %122, %15 : vector<16x128xf32>
    %124 = arith.mulf %112, %123 : vector<16x128xf32>
    %125 = arith.addf %121, %124 : vector<16x128xf32>
    %126 = math.tanh %125 : vector<16x128xf32>
    %127 = arith.subf %88, %126 : vector<16x128xf32>
    %128 = arith.mulf %120, %127 : vector<16x128xf32>
    %129 = arith.addf %126, %128 : vector<16x128xf32>
    %130 = arith.index_cast %99 : i32 to index
    %c0_42 = arith.constant 0 : index
    %c0_43 = arith.constant 0 : index
    %131 = vector.load %arg2[%130, %c0_42, %c0_43] : memref<4x16x128xbf16, #tpu.memory_space<vmem>>, vector<1x16x128xbf16>
    %132 = vector.shape_cast %131 : vector<1x16x128xbf16> to vector<16x128xbf16>
    %133 = arith.extf %132 : vector<16x128xbf16> to vector<16x128xf32>
    %134 = arith.addf %129, %133 : vector<16x128xf32>
    %135 = arith.truncf %134 : vector<16x128xf32> to vector<16x128xbf16>
    %136 = arith.index_cast %c2_i32 : i32 to index
    %c0_44 = arith.constant 0 : index
    %c0_45 = arith.constant 0 : index
    %137 = vector.load %arg7[%136, %c0_44, %c0_45] : memref<4x16x128xbf16, #tpu.memory_space<vmem>>, vector<1x16x128xbf16>
    %138 = vector.shape_cast %137 : vector<1x16x128xbf16> to vector<16x128xbf16>
    %139 = vector.shape_cast %135 : vector<16x128xbf16> to vector<1x16x128xbf16>
    tpu.vector_store %arg7[%136, %c0_44, %c0_45], %139 {strides = array<i32>} : memref<4x16x128xbf16, #tpu.memory_space<vmem>>, vector<1x16x128xbf16>,
    %c3_i32_46 = arith.constant 3 : i32
    %c3_i32_47 = arith.constant 3 : i32
    %140 = arith.subi %c3_i32_47, %c3_i32_46 : i32
    %141 = arith.index_cast %140 : i32 to index
    %c0_48 = arith.constant 0 : index
    %c0_49 = arith.constant 0 : index
    %142 = vector.load %arg8[%141, %c0_48, %c0_49] : memref<4x16x384xf32, #tpu.memory_space<vmem>>, vector<1x16x384xf32>
    %143 = vector.shape_cast %142 : vector<1x16x384xf32> to vector<16x384xf32>
    %144 = arith.truncf %129 : vector<16x128xf32> to vector<16x128xbf16>
    %cst_50 = arith.constant dense<0.000000e+00> : vector<16x384xf32>
    %145 = tpu.matmul %144, %12, %cst_50 {dimension_numbers = #tpu.dot_dimension_numbers<[1], [0], [0], [1], [0, 0, 1, 1], [], []>} : vector<16x128xbf16>, vector<128x384xbf16>, vector<16x384xf32> -> vector<16x384xf32>
    %146 = vector.extract_strided_slice %143 {offsets = [0, 0], sizes = [16, 128], strides = [1, 1]} : vector<16x384xf32> to vector<16x128xf32>
    %147 = vector.extract_strided_slice %145 {offsets = [0, 0], sizes = [16, 128], strides = [1, 1]} : vector<16x384xf32> to vector<16x128xf32>
    %148 = arith.addf %146, %147 : vector<16x128xf32>
    %149 = arith.negf %148 : vector<16x128xf32>
    %150 = math.exp %149 : vector<16x128xf32>
    %cst_51 = arith.constant 1.000000e+00 : f32
    %151 = vector.broadcast %cst_51 : f32 to vector<16x128xf32>
    %152 = arith.addf %151, %150 : vector<16x128xf32>
    %153 = arith.divf %151, %152 : vector<16x128xf32>
    %154 = vector.extract_strided_slice %143 {offsets = [0, 128], sizes = [16, 128], strides = [1, 1]} : vector<16x384xf32> to vector<16x128xf32>
    %155 = vector.extract_strided_slice %145 {offsets = [0, 128], sizes = [16, 128], strides = [1, 1]} : vector<16x384xf32> to vector<16x128xf32>
    %156 = arith.addf %154, %155 : vector<16x128xf32>
    %157 = arith.negf %156 : vector<16x128xf32>
    %158 = math.exp %157 : vector<16x128xf32>
    %cst_52 = arith.constant 1.000000e+00 : f32
    %159 = vector.broadcast %cst_52 : f32 to vector<16x128xf32>
    %160 = arith.addf %159, %158 : vector<16x128xf32>
    %161 = arith.divf %159, %160 : vector<16x128xf32>
    %162 = vector.extract_strided_slice %143 {offsets = [0, 256], sizes = [16, 128], strides = [1, 1]} : vector<16x384xf32> to vector<16x128xf32>
    %163 = vector.extract_strided_slice %145 {offsets = [0, 256], sizes = [16, 128], strides = [1, 1]} : vector<16x384xf32> to vector<16x128xf32>
    %164 = arith.addf %163, %15 : vector<16x128xf32>
    %165 = arith.mulf %153, %164 : vector<16x128xf32>
    %166 = arith.addf %162, %165 : vector<16x128xf32>
    %167 = math.tanh %166 : vector<16x128xf32>
    %168 = arith.subf %129, %167 : vector<16x128xf32>
    %169 = arith.mulf %161, %168 : vector<16x128xf32>
    %170 = arith.addf %167, %169 : vector<16x128xf32>
    %171 = arith.index_cast %140 : i32 to index
    %c0_53 = arith.constant 0 : index
    %c0_54 = arith.constant 0 : index
    %172 = vector.load %arg2[%171, %c0_53, %c0_54] : memref<4x16x128xbf16, #tpu.memory_space<vmem>>, vector<1x16x128xbf16>
    %173 = vector.shape_cast %172 : vector<1x16x128xbf16> to vector<16x128xbf16>
    %174 = arith.extf %173 : vector<16x128xbf16> to vector<16x128xf32>
    %175 = arith.addf %170, %174 : vector<16x128xf32>
    %176 = arith.truncf %175 : vector<16x128xf32> to vector<16x128xbf16>
    %177 = arith.index_cast %c3_i32_46 : i32 to index
    %c0_55 = arith.constant 0 : index
    %c0_56 = arith.constant 0 : index
    %178 = vector.load %arg7[%177, %c0_55, %c0_56] : memref<4x16x128xbf16, #tpu.memory_space<vmem>>, vector<1x16x128xbf16>
    %179 = vector.shape_cast %178 : vector<1x16x128xbf16> to vector<16x128xbf16>
    %180 = vector.shape_cast %176 : vector<16x128xbf16> to vector<1x16x128xbf16>
    tpu.vector_store %arg7[%177, %c0_55, %c0_56], %180 {strides = array<i32>} : memref<4x16x128xbf16, #tpu.memory_space<vmem>>, vector<1x16x128xbf16>,
    %c4_i32 = arith.constant 4 : i32
    %c0_57 = arith.constant 0 : index
    %c0_58 = arith.constant 0 : index
    %181 = vector.load %arg9[%c0_57, %c0_58] : memref<16x128xf32, #tpu.memory_space<vmem>>, vector<16x128xf32>
    tpu.vector_store %arg9[%c0_57, %c0_58], %170 {strides = array<i32>} : memref<16x128xf32, #tpu.memory_space<vmem>>, vector<16x128xf32>,
    return
  }
  func.func @transform_0(%arg0: i32, %arg1: i32) -> (i32, i32, i32) {
    %c1_i32 = arith.constant 1 : i32
    %0 = arith.subi %c1_i32, %arg1 : i32
    %c0_i32 = arith.constant 0 : i32
    %c0_i32_0 = arith.constant 0 : i32
    return %0, %arg0, %c0_i32 : i32, i32, i32
  }
  func.func @transform_1(%arg0: i32, %arg1: i32) -> (i32, i32) {
    %c0_i32 = arith.constant 0 : i32
    %c0_i32_0 = arith.constant 0 : i32
    %c0_i32_1 = arith.constant 0 : i32
    return %c0_i32, %c0_i32_0 : i32, i32
  }
  func.func @transform_2(%arg0: i32, %arg1: i32) -> (i32, i32) {
    %c0_i32 = arith.constant 0 : i32
    %c0_i32_0 = arith.constant 0 : i32
    %c0_i32_1 = arith.constant 0 : i32
    return %c0_i32, %c0_i32_0 : i32, i32
  }
  func.func @transform_3(%arg0: i32, %arg1: i32) -> (i32, i32) {
    %c0_i32 = arith.constant 0 : i32
    %c0_i32_0 = arith.constant 0 : i32
    %c0_i32_1 = arith.constant 0 : i32
    return %c0_i32, %c0_i32_0 : i32, i32
  }
  func.func @transform_4(%arg0: i32, %arg1: i32) -> (i32, i32) {
    %c0_i32 = arith.constant 0 : i32
    %c0_i32_0 = arith.constant 0 : i32
    %c0_i32_1 = arith.constant 0 : i32
    return %c0_i32, %c0_i32_0 : i32, i32
  }
  func.func @transform_5(%arg0: i32, %arg1: i32) -> (i32, i32, i32) {
    %c0_i32 = arith.constant 0 : i32
    %c0_i32_0 = arith.constant 0 : i32
    return %arg1, %arg0, %c0_i32 : i32, i32, i32
  }
}

module attributes {stable_mosaic.version = 11 : i64} {
  func.func @kernel(%arg0: i32, %arg1: i32, %arg2: memref<4x16x128xbf16, #tpu.memory_space<vmem>>, %arg3: memref<128x384xbf16, #tpu.memory_space<vmem>>, %arg4: memref<128x384xbf16, #tpu.memory_space<vmem>>, %arg5: memref<1x384xf32, #tpu.memory_space<vmem>>, %arg6: memref<1x128xf32, #tpu.memory_space<vmem>>, %arg7: memref<4x16x128xbf16, #tpu.memory_space<vmem>>, %arg8: memref<4x16x384xf32, #tpu.memory_space<vmem>>, %arg9: memref<16x128xf32, #tpu.memory_space<vmem>>) attributes {dimension_semantics = [#tpu.dimension_semantics<parallel>, #tpu.dimension_semantics<arbitrary>], iteration_bounds = array<i64: 1, 2>, scalar_prefetch = 0 : i64, scratch_operands = 2 : i64, tpu.core_type = #tpu.core_type<tc>, window_params = [{transform_indices = @transform_0, window_bounds = array<i64: 4, 16, 128>}, {pipeline_mode = #tpu.pipeline_mode<synchronous>, transform_indices = @transform_1, window_bounds = array<i64: 128, 384>}, {pipeline_mode = #tpu.pipeline_mode<synchronous>, transform_indices = @transform_2, window_bounds = array<i64: 128, 384>}, {pipeline_mode = #tpu.pipeline_mode<synchronous>, transform_indices = @transform_3, window_bounds = array<i64: 1, 384>}, {pipeline_mode = #tpu.pipeline_mode<synchronous>, transform_indices = @transform_4, window_bounds = array<i64: 1, 128>}, {transform_indices = @transform_5, window_bounds = array<i64: 4, 16, 128>}]} {
    %c0_i32 = arith.constant 0 : i32
    %0 = arith.cmpi eq, %arg1, %c0_i32 : i32
    %1 = arith.extui %0 : i1 to i32
    %c0_i32_0 = arith.constant 0 : i32
    %2 = arith.cmpi ne, %1, %c0_i32_0 : i32
    scf.if %2 {
      %cst_63 = arith.constant 0.000000e+00 : f32
      %186 = vector.broadcast %cst_63 : f32 to vector<16x128xf32>
      %c0_64 = arith.constant 0 : index
      %c0_65 = arith.constant 0 : index
      %187 = vector.load %arg9[%c0_64, %c0_65] : memref<16x128xf32, #tpu.memory_space<vmem>>, vector<16x128xf32>
      tpu.vector_store %arg9[%c0_64, %c0_65], %186 {strides = array<i32>} : memref<16x128xf32, #tpu.memory_space<vmem>>, vector<16x128xf32>,
    } else {
    }
    %c0 = arith.constant 0 : index
    %c0_1 = arith.constant 0 : index
    %c0_2 = arith.constant 0 : index
    %3 = vector.load %arg2[%c0, %c0_1, %c0_2] : memref<4x16x128xbf16, #tpu.memory_space<vmem>>, vector<4x16x128xbf16>
    %4 = vector.shape_cast %3 : vector<4x16x128xbf16> to vector<64x128xbf16>
    %c0_3 = arith.constant 0 : index
    %c0_4 = arith.constant 0 : index
    %5 = vector.load %arg3[%c0_3, %c0_4] : memref<128x384xbf16, #tpu.memory_space<vmem>>, vector<128x384xbf16>
    %cst = arith.constant dense<0.000000e+00> : vector<64x384xf32>
    %6 = tpu.matmul %4, %5, %cst {dimension_numbers = #tpu.dot_dimension_numbers<[1], [0], [0], [1], [0, 0, 1, 1], [], []>} : vector<64x128xbf16>, vector<128x384xbf16>, vector<64x384xf32> -> vector<64x384xf32>
    %c0_5 = arith.constant 0 : index
    %c0_6 = arith.constant 0 : index
    %7 = vector.load %arg5[%c0_5, %c0_6] : memref<1x384xf32, #tpu.memory_space<vmem>>, vector<1x384xf32>
    %8 = vector.broadcast %7 : vector<1x384xf32> to vector<64x384xf32>
    %9 = arith.addf %6, %8 : vector<64x384xf32>
    %10 = vector.shape_cast %9 : vector<64x384xf32> to vector<4x16x384xf32>
    %c0_7 = arith.constant 0 : index
    %c0_8 = arith.constant 0 : index
    %c0_9 = arith.constant 0 : index
    %11 = vector.load %arg8[%c0_7, %c0_8, %c0_9] : memref<4x16x384xf32, #tpu.memory_space<vmem>>, vector<4x16x384xf32>
    tpu.vector_store %arg8[%c0_7, %c0_8, %c0_9], %10 {strides = array<i32>} : memref<4x16x384xf32, #tpu.memory_space<vmem>>, vector<4x16x384xf32>,
    %c0_10 = arith.constant 0 : index
    %c0_11 = arith.constant 0 : index
    %12 = vector.load %arg4[%c0_10, %c0_11] : memref<128x384xbf16, #tpu.memory_space<vmem>>, vector<128x384xbf16>
    %c0_12 = arith.constant 0 : index
    %c0_13 = arith.constant 0 : index
    %13 = vector.load %arg6[%c0_12, %c0_13] : memref<1x128xf32, #tpu.memory_space<vmem>>, vector<1x128xf32>
    %14 = vector.shape_cast %13 : vector<1x128xf32> to vector<1x128xf32>
    %15 = vector.broadcast %14 : vector<1x128xf32> to vector<16x128xf32>
    %c0_14 = arith.constant 0 : index
    %c0_15 = arith.constant 0 : index
    %16 = vector.load %arg9[%c0_14, %c0_15] : memref<16x128xf32, #tpu.memory_space<vmem>>, vector<16x128xf32>
    %c0_i32_16 = arith.constant 0 : i32
    %c3_i32 = arith.constant 3 : i32
    %17 = arith.subi %c3_i32, %c0_i32_16 : i32
    %18 = arith.index_cast %17 : i32 to index
    %c0_17 = arith.constant 0 : index
    %c0_18 = arith.constant 0 : index
    %19 = vector.load %arg8[%18, %c0_17, %c0_18] : memref<4x16x384xf32, #tpu.memory_space<vmem>>, vector<1x16x384xf32>
    %20 = vector.shape_cast %19 : vector<1x16x384xf32> to vector<16x384xf32>
    %21 = arith.truncf %16 : vector<16x128xf32> to vector<16x128xbf16>
    %cst_19 = arith.constant dense<0.000000e+00> : vector<16x384xf32>
    %22 = tpu.matmul %21, %12, %cst_19 {dimension_numbers = #tpu.dot_dimension_numbers<[1], [0], [0], [1], [0, 0, 1, 1], [], []>} : vector<16x128xbf16>, vector<128x384xbf16>, vector<16x384xf32> -> vector<16x384xf32>
    %23 = vector.extract_strided_slice %20 {offsets = [0, 0], sizes = [16, 128], strides = [1, 1]} : vector<16x384xf32> to vector<16x128xf32>
    %24 = vector.extract_strided_slice %22 {offsets = [0, 0], sizes = [16, 128], strides = [1, 1]} : vector<16x384xf32> to vector<16x128xf32>
    %25 = arith.addf %23, %24 : vector<16x128xf32>
    %26 = arith.negf %25 : vector<16x128xf32>
    %27 = math.exp %26 : vector<16x128xf32>
    %cst_20 = arith.constant 1.000000e+00 : f32
    %28 = vector.broadcast %cst_20 : f32 to vector<16x128xf32>
    %29 = arith.addf %28, %27 : vector<16x128xf32>
    %30 = arith.divf %28, %29 : vector<16x128xf32>
    %31 = vector.extract_strided_slice %20 {offsets = [0, 128], sizes = [16, 128], strides = [1, 1]} : vector<16x384xf32> to vector<16x128xf32>
    %32 = vector.extract_strided_slice %22 {offsets = [0, 128], sizes = [16, 128], strides = [1, 1]} : vector<16x384xf32> to vector<16x128xf32>
    %33 = arith.addf %31, %32 : vector<16x128xf32>
    %34 = arith.negf %33 : vector<16x128xf32>
    %35 = math.exp %34 : vector<16x128xf32>
    %cst_21 = arith.constant 1.000000e+00 : f32
    %36 = vector.broadcast %cst_21 : f32 to vector<16x128xf32>
    %37 = arith.addf %36, %35 : vector<16x128xf32>
    %38 = arith.divf %36, %37 : vector<16x128xf32>
    %39 = vector.extract_strided_slice %20 {offsets = [0, 256], sizes = [16, 128], strides = [1, 1]} : vector<16x384xf32> to vector<16x128xf32>
    %40 = vector.extract_strided_slice %22 {offsets = [0, 256], sizes = [16, 128], strides = [1, 1]} : vector<16x384xf32> to vector<16x128xf32>
    %41 = arith.addf %40, %15 : vector<16x128xf32>
    %42 = arith.mulf %30, %41 : vector<16x128xf32>
    %43 = arith.addf %39, %42 : vector<16x128xf32>
    %44 = math.tanh %43 : vector<16x128xf32>
    %45 = arith.subf %16, %44 : vector<16x128xf32>
    %46 = arith.mulf %38, %45 : vector<16x128xf32>
    %47 = arith.addf %44, %46 : vector<16x128xf32>
    %48 = arith.index_cast %17 : i32 to index
    %c0_22 = arith.constant 0 : index
    %c0_23 = arith.constant 0 : index
    %49 = vector.load %arg2[%48, %c0_22, %c0_23] : memref<4x16x128xbf16, #tpu.memory_space<vmem>>, vector<1x16x128xbf16>
    %50 = vector.shape_cast %49 : vector<1x16x128xbf16> to vector<16x128xbf16>
    %51 = arith.extf %50 : vector<16x128xbf16> to vector<16x128xf32>
    %52 = arith.addf %47, %51 : vector<16x128xf32>
    %c3_i32_24 = arith.constant 3 : i32
    %53 = arith.subi %c3_i32_24, %c0_i32_16 : i32
    %54 = arith.truncf %52 : vector<16x128xf32> to vector<16x128xbf16>
    %55 = arith.index_cast %53 : i32 to index
    %c0_25 = arith.constant 0 : index
    %c0_26 = arith.constant 0 : index
    %56 = vector.load %arg7[%55, %c0_25, %c0_26] : memref<4x16x128xbf16, #tpu.memory_space<vmem>>, vector<1x16x128xbf16>
    %57 = vector.shape_cast %56 : vector<1x16x128xbf16> to vector<16x128xbf16>
    %58 = vector.shape_cast %54 : vector<16x128xbf16> to vector<1x16x128xbf16>
    tpu.vector_store %arg7[%55, %c0_25, %c0_26], %58 {strides = array<i32>} : memref<4x16x128xbf16, #tpu.memory_space<vmem>>, vector<1x16x128xbf16>,
    %c1_i32 = arith.constant 1 : i32
    %c3_i32_27 = arith.constant 3 : i32
    %59 = arith.subi %c3_i32_27, %c1_i32 : i32
    %60 = arith.index_cast %59 : i32 to index
    %c0_28 = arith.constant 0 : index
    %c0_29 = arith.constant 0 : index
    %61 = vector.load %arg8[%60, %c0_28, %c0_29] : memref<4x16x384xf32, #tpu.memory_space<vmem>>, vector<1x16x384xf32>
    %62 = vector.shape_cast %61 : vector<1x16x384xf32> to vector<16x384xf32>
    %63 = arith.truncf %47 : vector<16x128xf32> to vector<16x128xbf16>
    %cst_30 = arith.constant dense<0.000000e+00> : vector<16x384xf32>
    %64 = tpu.matmul %63, %12, %cst_30 {dimension_numbers = #tpu.dot_dimension_numbers<[1], [0], [0], [1], [0, 0, 1, 1], [], []>} : vector<16x128xbf16>, vector<128x384xbf16>, vector<16x384xf32> -> vector<16x384xf32>
    %65 = vector.extract_strided_slice %62 {offsets = [0, 0], sizes = [16, 128], strides = [1, 1]} : vector<16x384xf32> to vector<16x128xf32>
    %66 = vector.extract_strided_slice %64 {offsets = [0, 0], sizes = [16, 128], strides = [1, 1]} : vector<16x384xf32> to vector<16x128xf32>
    %67 = arith.addf %65, %66 : vector<16x128xf32>
    %68 = arith.negf %67 : vector<16x128xf32>
    %69 = math.exp %68 : vector<16x128xf32>
    %cst_31 = arith.constant 1.000000e+00 : f32
    %70 = vector.broadcast %cst_31 : f32 to vector<16x128xf32>
    %71 = arith.addf %70, %69 : vector<16x128xf32>
    %72 = arith.divf %70, %71 : vector<16x128xf32>
    %73 = vector.extract_strided_slice %62 {offsets = [0, 128], sizes = [16, 128], strides = [1, 1]} : vector<16x384xf32> to vector<16x128xf32>
    %74 = vector.extract_strided_slice %64 {offsets = [0, 128], sizes = [16, 128], strides = [1, 1]} : vector<16x384xf32> to vector<16x128xf32>
    %75 = arith.addf %73, %74 : vector<16x128xf32>
    %76 = arith.negf %75 : vector<16x128xf32>
    %77 = math.exp %76 : vector<16x128xf32>
    %cst_32 = arith.constant 1.000000e+00 : f32
    %78 = vector.broadcast %cst_32 : f32 to vector<16x128xf32>
    %79 = arith.addf %78, %77 : vector<16x128xf32>
    %80 = arith.divf %78, %79 : vector<16x128xf32>
    %81 = vector.extract_strided_slice %62 {offsets = [0, 256], sizes = [16, 128], strides = [1, 1]} : vector<16x384xf32> to vector<16x128xf32>
    %82 = vector.extract_strided_slice %64 {offsets = [0, 256], sizes = [16, 128], strides = [1, 1]} : vector<16x384xf32> to vector<16x128xf32>
    %83 = arith.addf %82, %15 : vector<16x128xf32>
    %84 = arith.mulf %72, %83 : vector<16x128xf32>
    %85 = arith.addf %81, %84 : vector<16x128xf32>
    %86 = math.tanh %85 : vector<16x128xf32>
    %87 = arith.subf %47, %86 : vector<16x128xf32>
    %88 = arith.mulf %80, %87 : vector<16x128xf32>
    %89 = arith.addf %86, %88 : vector<16x128xf32>
    %90 = arith.index_cast %59 : i32 to index
    %c0_33 = arith.constant 0 : index
    %c0_34 = arith.constant 0 : index
    %91 = vector.load %arg2[%90, %c0_33, %c0_34] : memref<4x16x128xbf16, #tpu.memory_space<vmem>>, vector<1x16x128xbf16>
    %92 = vector.shape_cast %91 : vector<1x16x128xbf16> to vector<16x128xbf16>
    %93 = arith.extf %92 : vector<16x128xbf16> to vector<16x128xf32>
    %94 = arith.addf %89, %93 : vector<16x128xf32>
    %c3_i32_35 = arith.constant 3 : i32
    %95 = arith.subi %c3_i32_35, %c1_i32 : i32
    %96 = arith.truncf %94 : vector<16x128xf32> to vector<16x128xbf16>
    %97 = arith.index_cast %95 : i32 to index
    %c0_36 = arith.constant 0 : index
    %c0_37 = arith.constant 0 : index
    %98 = vector.load %arg7[%97, %c0_36, %c0_37] : memref<4x16x128xbf16, #tpu.memory_space<vmem>>, vector<1x16x128xbf16>
    %99 = vector.shape_cast %98 : vector<1x16x128xbf16> to vector<16x128xbf16>
    %100 = vector.shape_cast %96 : vector<16x128xbf16> to vector<1x16x128xbf16>
    tpu.vector_store %arg7[%97, %c0_36, %c0_37], %100 {strides = array<i32>} : memref<4x16x128xbf16, #tpu.memory_space<vmem>>, vector<1x16x128xbf16>,
    %c2_i32 = arith.constant 2 : i32
    %c3_i32_38 = arith.constant 3 : i32
    %101 = arith.subi %c3_i32_38, %c2_i32 : i32
    %102 = arith.index_cast %101 : i32 to index
    %c0_39 = arith.constant 0 : index
    %c0_40 = arith.constant 0 : index
    %103 = vector.load %arg8[%102, %c0_39, %c0_40] : memref<4x16x384xf32, #tpu.memory_space<vmem>>, vector<1x16x384xf32>
    %104 = vector.shape_cast %103 : vector<1x16x384xf32> to vector<16x384xf32>
    %105 = arith.truncf %89 : vector<16x128xf32> to vector<16x128xbf16>
    %cst_41 = arith.constant dense<0.000000e+00> : vector<16x384xf32>
    %106 = tpu.matmul %105, %12, %cst_41 {dimension_numbers = #tpu.dot_dimension_numbers<[1], [0], [0], [1], [0, 0, 1, 1], [], []>} : vector<16x128xbf16>, vector<128x384xbf16>, vector<16x384xf32> -> vector<16x384xf32>
    %107 = vector.extract_strided_slice %104 {offsets = [0, 0], sizes = [16, 128], strides = [1, 1]} : vector<16x384xf32> to vector<16x128xf32>
    %108 = vector.extract_strided_slice %106 {offsets = [0, 0], sizes = [16, 128], strides = [1, 1]} : vector<16x384xf32> to vector<16x128xf32>
    %109 = arith.addf %107, %108 : vector<16x128xf32>
    %110 = arith.negf %109 : vector<16x128xf32>
    %111 = math.exp %110 : vector<16x128xf32>
    %cst_42 = arith.constant 1.000000e+00 : f32
    %112 = vector.broadcast %cst_42 : f32 to vector<16x128xf32>
    %113 = arith.addf %112, %111 : vector<16x128xf32>
    %114 = arith.divf %112, %113 : vector<16x128xf32>
    %115 = vector.extract_strided_slice %104 {offsets = [0, 128], sizes = [16, 128], strides = [1, 1]} : vector<16x384xf32> to vector<16x128xf32>
    %116 = vector.extract_strided_slice %106 {offsets = [0, 128], sizes = [16, 128], strides = [1, 1]} : vector<16x384xf32> to vector<16x128xf32>
    %117 = arith.addf %115, %116 : vector<16x128xf32>
    %118 = arith.negf %117 : vector<16x128xf32>
    %119 = math.exp %118 : vector<16x128xf32>
    %cst_43 = arith.constant 1.000000e+00 : f32
    %120 = vector.broadcast %cst_43 : f32 to vector<16x128xf32>
    %121 = arith.addf %120, %119 : vector<16x128xf32>
    %122 = arith.divf %120, %121 : vector<16x128xf32>
    %123 = vector.extract_strided_slice %104 {offsets = [0, 256], sizes = [16, 128], strides = [1, 1]} : vector<16x384xf32> to vector<16x128xf32>
    %124 = vector.extract_strided_slice %106 {offsets = [0, 256], sizes = [16, 128], strides = [1, 1]} : vector<16x384xf32> to vector<16x128xf32>
    %125 = arith.addf %124, %15 : vector<16x128xf32>
    %126 = arith.mulf %114, %125 : vector<16x128xf32>
    %127 = arith.addf %123, %126 : vector<16x128xf32>
    %128 = math.tanh %127 : vector<16x128xf32>
    %129 = arith.subf %89, %128 : vector<16x128xf32>
    %130 = arith.mulf %122, %129 : vector<16x128xf32>
    %131 = arith.addf %128, %130 : vector<16x128xf32>
    %132 = arith.index_cast %101 : i32 to index
    %c0_44 = arith.constant 0 : index
    %c0_45 = arith.constant 0 : index
    %133 = vector.load %arg2[%132, %c0_44, %c0_45] : memref<4x16x128xbf16, #tpu.memory_space<vmem>>, vector<1x16x128xbf16>
    %134 = vector.shape_cast %133 : vector<1x16x128xbf16> to vector<16x128xbf16>
    %135 = arith.extf %134 : vector<16x128xbf16> to vector<16x128xf32>
    %136 = arith.addf %131, %135 : vector<16x128xf32>
    %c3_i32_46 = arith.constant 3 : i32
    %137 = arith.subi %c3_i32_46, %c2_i32 : i32
    %138 = arith.truncf %136 : vector<16x128xf32> to vector<16x128xbf16>
    %139 = arith.index_cast %137 : i32 to index
    %c0_47 = arith.constant 0 : index
    %c0_48 = arith.constant 0 : index
    %140 = vector.load %arg7[%139, %c0_47, %c0_48] : memref<4x16x128xbf16, #tpu.memory_space<vmem>>, vector<1x16x128xbf16>
    %141 = vector.shape_cast %140 : vector<1x16x128xbf16> to vector<16x128xbf16>
    %142 = vector.shape_cast %138 : vector<16x128xbf16> to vector<1x16x128xbf16>
    tpu.vector_store %arg7[%139, %c0_47, %c0_48], %142 {strides = array<i32>} : memref<4x16x128xbf16, #tpu.memory_space<vmem>>, vector<1x16x128xbf16>,
    %c3_i32_49 = arith.constant 3 : i32
    %c3_i32_50 = arith.constant 3 : i32
    %143 = arith.subi %c3_i32_50, %c3_i32_49 : i32
    %144 = arith.index_cast %143 : i32 to index
    %c0_51 = arith.constant 0 : index
    %c0_52 = arith.constant 0 : index
    %145 = vector.load %arg8[%144, %c0_51, %c0_52] : memref<4x16x384xf32, #tpu.memory_space<vmem>>, vector<1x16x384xf32>
    %146 = vector.shape_cast %145 : vector<1x16x384xf32> to vector<16x384xf32>
    %147 = arith.truncf %131 : vector<16x128xf32> to vector<16x128xbf16>
    %cst_53 = arith.constant dense<0.000000e+00> : vector<16x384xf32>
    %148 = tpu.matmul %147, %12, %cst_53 {dimension_numbers = #tpu.dot_dimension_numbers<[1], [0], [0], [1], [0, 0, 1, 1], [], []>} : vector<16x128xbf16>, vector<128x384xbf16>, vector<16x384xf32> -> vector<16x384xf32>
    %149 = vector.extract_strided_slice %146 {offsets = [0, 0], sizes = [16, 128], strides = [1, 1]} : vector<16x384xf32> to vector<16x128xf32>
    %150 = vector.extract_strided_slice %148 {offsets = [0, 0], sizes = [16, 128], strides = [1, 1]} : vector<16x384xf32> to vector<16x128xf32>
    %151 = arith.addf %149, %150 : vector<16x128xf32>
    %152 = arith.negf %151 : vector<16x128xf32>
    %153 = math.exp %152 : vector<16x128xf32>
    %cst_54 = arith.constant 1.000000e+00 : f32
    %154 = vector.broadcast %cst_54 : f32 to vector<16x128xf32>
    %155 = arith.addf %154, %153 : vector<16x128xf32>
    %156 = arith.divf %154, %155 : vector<16x128xf32>
    %157 = vector.extract_strided_slice %146 {offsets = [0, 128], sizes = [16, 128], strides = [1, 1]} : vector<16x384xf32> to vector<16x128xf32>
    %158 = vector.extract_strided_slice %148 {offsets = [0, 128], sizes = [16, 128], strides = [1, 1]} : vector<16x384xf32> to vector<16x128xf32>
    %159 = arith.addf %157, %158 : vector<16x128xf32>
    %160 = arith.negf %159 : vector<16x128xf32>
    %161 = math.exp %160 : vector<16x128xf32>
    %cst_55 = arith.constant 1.000000e+00 : f32
    %162 = vector.broadcast %cst_55 : f32 to vector<16x128xf32>
    %163 = arith.addf %162, %161 : vector<16x128xf32>
    %164 = arith.divf %162, %163 : vector<16x128xf32>
    %165 = vector.extract_strided_slice %146 {offsets = [0, 256], sizes = [16, 128], strides = [1, 1]} : vector<16x384xf32> to vector<16x128xf32>
    %166 = vector.extract_strided_slice %148 {offsets = [0, 256], sizes = [16, 128], strides = [1, 1]} : vector<16x384xf32> to vector<16x128xf32>
    %167 = arith.addf %166, %15 : vector<16x128xf32>
    %168 = arith.mulf %156, %167 : vector<16x128xf32>
    %169 = arith.addf %165, %168 : vector<16x128xf32>
    %170 = math.tanh %169 : vector<16x128xf32>
    %171 = arith.subf %131, %170 : vector<16x128xf32>
    %172 = arith.mulf %164, %171 : vector<16x128xf32>
    %173 = arith.addf %170, %172 : vector<16x128xf32>
    %174 = arith.index_cast %143 : i32 to index
    %c0_56 = arith.constant 0 : index
    %c0_57 = arith.constant 0 : index
    %175 = vector.load %arg2[%174, %c0_56, %c0_57] : memref<4x16x128xbf16, #tpu.memory_space<vmem>>, vector<1x16x128xbf16>
    %176 = vector.shape_cast %175 : vector<1x16x128xbf16> to vector<16x128xbf16>
    %177 = arith.extf %176 : vector<16x128xbf16> to vector<16x128xf32>
    %178 = arith.addf %173, %177 : vector<16x128xf32>
    %c3_i32_58 = arith.constant 3 : i32
    %179 = arith.subi %c3_i32_58, %c3_i32_49 : i32
    %180 = arith.truncf %178 : vector<16x128xf32> to vector<16x128xbf16>
    %181 = arith.index_cast %179 : i32 to index
    %c0_59 = arith.constant 0 : index
    %c0_60 = arith.constant 0 : index
    %182 = vector.load %arg7[%181, %c0_59, %c0_60] : memref<4x16x128xbf16, #tpu.memory_space<vmem>>, vector<1x16x128xbf16>
    %183 = vector.shape_cast %182 : vector<1x16x128xbf16> to vector<16x128xbf16>
    %184 = vector.shape_cast %180 : vector<16x128xbf16> to vector<1x16x128xbf16>
    tpu.vector_store %arg7[%181, %c0_59, %c0_60], %184 {strides = array<i32>} : memref<4x16x128xbf16, #tpu.memory_space<vmem>>, vector<1x16x128xbf16>,
    %c4_i32 = arith.constant 4 : i32
    %c0_61 = arith.constant 0 : index
    %c0_62 = arith.constant 0 : index
    %185 = vector.load %arg9[%c0_61, %c0_62] : memref<16x128xf32, #tpu.memory_space<vmem>>, vector<16x128xf32>
    tpu.vector_store %arg9[%c0_61, %c0_62], %173 {strides = array<i32>} : memref<16x128xf32, #tpu.memory_space<vmem>>, vector<16x128xf32>,
    return
  }
  func.func @transform_0(%arg0: i32, %arg1: i32) -> (i32, i32, i32) {
    %c1_i32 = arith.constant 1 : i32
    %0 = arith.subi %c1_i32, %arg1 : i32
    %c0_i32 = arith.constant 0 : i32
    %c0_i32_0 = arith.constant 0 : i32
    return %0, %arg0, %c0_i32 : i32, i32, i32
  }
  func.func @transform_1(%arg0: i32, %arg1: i32) -> (i32, i32) {
    %c0_i32 = arith.constant 0 : i32
    %c0_i32_0 = arith.constant 0 : i32
    %c0_i32_1 = arith.constant 0 : i32
    return %c0_i32, %c0_i32_0 : i32, i32
  }
  func.func @transform_2(%arg0: i32, %arg1: i32) -> (i32, i32) {
    %c0_i32 = arith.constant 0 : i32
    %c0_i32_0 = arith.constant 0 : i32
    %c0_i32_1 = arith.constant 0 : i32
    return %c0_i32, %c0_i32_0 : i32, i32
  }
  func.func @transform_3(%arg0: i32, %arg1: i32) -> (i32, i32) {
    %c0_i32 = arith.constant 0 : i32
    %c0_i32_0 = arith.constant 0 : i32
    %c0_i32_1 = arith.constant 0 : i32
    return %c0_i32, %c0_i32_0 : i32, i32
  }
  func.func @transform_4(%arg0: i32, %arg1: i32) -> (i32, i32) {
    %c0_i32 = arith.constant 0 : i32
    %c0_i32_0 = arith.constant 0 : i32
    %c0_i32_1 = arith.constant 0 : i32
    return %c0_i32, %c0_i32_0 : i32, i32
  }
  func.func @transform_5(%arg0: i32, %arg1: i32) -> (i32, i32, i32) {
    %c1_i32 = arith.constant 1 : i32
    %0 = arith.subi %c1_i32, %arg1 : i32
    %c0_i32 = arith.constant 0 : i32
    %c0_i32_0 = arith.constant 0 : i32
    return %0, %arg0, %c0_i32 : i32, i32, i32
  }
}

</mosaic_0001>

<llo_original>
// kernel: bigru_for_srl_forward.4
$region0: #{bigru_for_srl_forward.4}
  #allocation0 [shape = 'u32[]', space=smem, size = 0x4, offset = 0x4, fixed_abs, tag = 'smem constant byte address 0x4 - core index']
  #allocation1 [shape = 'u32[72,128]{1,0:T(1,128)}', space=vmem, size = 0x9000, scoped, tag = 'internal scratch']
  #allocation2 [shape = 'f32[4,16,384]{2,1,0:T(8,128)}', space=vmem, size = 0x18000, scoped, tag = 'scratch operand']
  #allocation3 [shape = 'f32[16,128]{1,0:T(8,128)}', space=vmem, size = 0x2000, scoped, tag = 'scratch operand']
  %s0 = inlined_call_operand.vmem [shape: bf16[8,16,128], index: 0, kind: input, shape index: {}]
  %s1 = inlined_call_operand.vmem [shape: bf16[128,384], index: 1, kind: input, shape index: {}]
  %s2 = inlined_call_operand.vmem [shape: bf16[128,384], index: 2, kind: input, shape index: {}]
  %s3 = inlined_call_operand.vmem [shape: f32[1,384], index: 3, kind: input, shape index: {}]
  %s4 = inlined_call_operand.vmem [shape: f32[1,128], index: 4, kind: input, shape index: {}]
  %s5 = inlined_call_operand.vmem [shape: bf16[8,16,128], index: 5, kind: output, shape index: {}]
  %s6 = sld [smem:[#allocation0]]
  $region57: #{bigru_for_srl_forward.4} parent=0
    _
  %s8 = ssub.s32 1, %s6
  %s9 = scalar_select 0, %s8, %s6
  loop: start=0, step=1, limit=4
  $region2: #{bigru_for_srl_forward.4} parent=0 // loop_pre_header
    _
  $region3: #{bigru_for_srl_forward.4} parent=0 // loop_header
    %s11 = sphi 0, %s15
    %p12 = scmp.ge.s32.totalorder %s11, 4
    %s18 = sphi 0, %s30
    %s19 = sphi 0, %s26
    %s20 = sphi 0, %s18
    %s21 = sphi 0, %s19
    %s22 = sphi 0, %s20
    %s23 = sphi 0, %s21
    %s37 = sphi 0, %s39
    %s40 = sphi 0, %s37
    %s41 = sphi 0, %s40
    %s57 = sphi 0, %s41
    %s61 = sphi 0, %s61
    %s63 = sphi 0, %s61
    %s64 = sphi 0, %s63
    %s78 = sphi 0, %s64
    %s82 = sphi 0, %s82
    %s84 = sphi 0, %s82
    %s85 = sphi 0, %s84
    %s99 = sphi 0, %s85
    %s103 = sphi 0, %s103
    %s105 = sphi 0, %s103
    %s106 = sphi 0, %s105
    %s120 = sphi 0, %s106
    %s124 = sphi 0, %s124
    %s126 = sphi 0, %s124
    %s127 = sphi 0, %s126
    %s141 = sphi 0, %s127
    %s149 = sphi 0, %s151
    %s152 = sphi 0, %s149
    %s153 = sphi 0, %s152
    %s169 = sphi 0, %s153
  $region4: #{bigru_for_srl_forward.4} parent=0 // loop_header_branch
    %14 = sbr.rel (%p12) target = $region8
  $region5: #{bigru_for_srl_forward.4} parent=0 // loop_body
    %s16 = ssub.s32 %s11, 1
    %s17 = ssub.s32 %s11, 2
    %s24 = sadd.s32 1, %s19
    %p25 = scmp.ge.s32.totalorder %s24, 2
    %s26 = scalar_select %p25, 0, %s24
    %s27 = sadd.s32 1, %s18
    %s28 = scalar_select %p25, %s27, %s18
    %p29 = scmp.ge.s32.totalorder %s28, 1
    %s30 = scalar_select %p29, 0, %s28
    %s31 = ssub.s32 1, %s19
    %s32 = ssub.s32 1, %s26
    %s33 = ssub.s32 %s31, %s32
    %s34 = ssub.s32 %s18, %s30
    %s35 = sor.u32 %s33, %s34
    %p36 = scmp.eq.s32.totalorder %s35, 0
    %s38 = sadd.s32 %s37, 1
    %s39 = scalar_select %p36, %s37, %s38
    %p42 = pneg %p36
    %p43 = scmp.eq.s32.totalorder %s11, 1
    %p44 = por %p42, %p43
    %p45 = scmp.ne.s32.totalorder %s37, %s40
    %p46 = scmp.eq.s32.totalorder %s11, 0
    %p47 = por %p45, %p46
    %p48 = scmp.ne.s32.totalorder %s37, %s40
    %p49 = scmp.eq.s32.totalorder %s16, 1
    %p50 = por %p48, %p49
    %p51 = scmp.ne.s32.totalorder %s40, %s41
    %p52 = scmp.eq.s32.totalorder %s16, 0
    %p53 = por %p51, %p52
    %p54 = scmp.ne.s32.totalorder %s40, %s41
    %p55 = scmp.eq.s32.totalorder %s17, 1
    %p56 = por %p54, %p55
    %p58 = scmp.ne.s32.totalorder %s41, %s57
    %p59 = scmp.eq.s32.totalorder %s17, 0
    %p60 = por %p58, %p59
    %s62 = sadd.s32 %s61, 1
    %p65 = scmp.eq.s32.totalorder %s11, 1
    %p66 = scmp.ne.s32.totalorder %s61, %s63
    %p67 = scmp.eq.s32.totalorder %s11, 0
    %p68 = por %p66, %p67
    %p69 = scmp.ne.s32.totalorder %s61, %s63
    %p70 = scmp.eq.s32.totalorder %s16, 1
    %p71 = por %p69, %p70
    %p72 = scmp.ne.s32.totalorder %s63, %s64
    %p73 = scmp.eq.s32.totalorder %s16, 0
    %p74 = por %p72, %p73
    %p75 = scmp.ne.s32.totalorder %s63, %s64
    %p76 = scmp.eq.s32.totalorder %s17, 1
    %p77 = por %p75, %p76
    %p79 = scmp.ne.s32.totalorder %s64, %s78
    %p80 = scmp.eq.s32.totalorder %s17, 0
    %p81 = por %p79, %p80
    %s83 = sadd.s32 %s82, 1
    %p86 = scmp.eq.s32.totalorder %s11, 1
    %p87 = scmp.ne.s32.totalorder %s82, %s84
    %p88 = scmp.eq.s32.totalorder %s11, 0
    %p89 = por %p87, %p88
    %p90 = scmp.ne.s32.totalorder %s82, %s84
    %p91 = scmp.eq.s32.totalorder %s16, 1
    %p92 = por %p90, %p91
    %p93 = scmp.ne.s32.totalorder %s84, %s85
    %p94 = scmp.eq.s32.totalorder %s16, 0
    %p95 = por %p93, %p94
    %p96 = scmp.ne.s32.totalorder %s84, %s85
    %p97 = scmp.eq.s32.totalorder %s17, 1
    %p98 = por %p96, %p97
    %p100 = scmp.ne.s32.totalorder %s85, %s99
    %p101 = scmp.eq.s32.totalorder %s17, 0
    %p102 = por %p100, %p101
    %s104 = sadd.s32 %s103, 1
    %p107 = scmp.eq.s32.totalorder %s11, 1
    %p108 = scmp.ne.s32.totalorder %s103, %s105
    %p109 = scmp.eq.s32.totalorder %s11, 0
    %p110 = por %p108, %p109
    %p111 = scmp.ne.s32.totalorder %s103, %s105
    %p112 = scmp.eq.s32.totalorder %s16, 1
    %p113 = por %p111, %p112
    %p114 = scmp.ne.s32.totalorder %s105, %s106
    %p115 = scmp.eq.s32.totalorder %s16, 0
    %p116 = por %p114, %p115
    %p117 = scmp.ne.s32.totalorder %s105, %s106
    %p118 = scmp.eq.s32.totalorder %s17, 1
    %p119 = por %p117, %p118
    %p121 = scmp.ne.s32.totalorder %s106, %s120
    %p122 = scmp.eq.s32.totalorder %s17, 0
    %p123 = por %p121, %p122
    %s125 = sadd.s32 %s124, 1
    %p128 = scmp.eq.s32.totalorder %s11, 1
    %p129 = scmp.ne.s32.totalorder %s124, %s126
    %p130 = scmp.eq.s32.totalorder %s11, 0
    %p131 = por %p129, %p130
    %p132 = scmp.ne.s32.totalorder %s124, %s126
    %p133 = scmp.eq.s32.totalorder %s16, 1
    %p134 = por %p132, %p133
    %p135 = scmp.ne.s32.totalorder %s126, %s127
    %p136 = scmp.eq.s32.totalorder %s16, 0
    %p137 = por %p135, %p136
    %p138 = scmp.ne.s32.totalorder %s126, %s127
    %p139 = scmp.eq.s32.totalorder %s17, 1
    %p140 = por %p138, %p139
    %p142 = scmp.ne.s32.totalorder %s127, %s141
    %p143 = scmp.eq.s32.totalorder %s17, 0
    %p144 = por %p142, %p143
    %s145 = ssub.s32 %s19, %s26
    %s146 = ssub.s32 %s18, %s30
    %s147 = sor.u32 %s145, %s146
    %p148 = scmp.eq.s32.totalorder %s147, 0
    %s150 = sadd.s32 %s149, 1
    %s151 = scalar_select %p148, %s149, %s150
    %p154 = pneg %p148
    %p155 = scmp.eq.s32.totalorder %s11, 1
    %p156 = por %p154, %p155
    %p157 = scmp.ne.s32.totalorder %s149, %s152
    %p158 = scmp.eq.s32.totalorder %s11, 0
    %p159 = por %p157, %p158
    %p160 = scmp.ne.s32.totalorder %s149, %s152
    %p161 = scmp.eq.s32.totalorder %s16, 1
    %p162 = por %p160, %p161
    %p163 = scmp.ne.s32.totalorder %s152, %s153
    %p164 = scmp.eq.s32.totalorder %s16, 0
    %p165 = por %p163, %p164
    %p166 = scmp.ne.s32.totalorder %s152, %s153
    %p167 = scmp.eq.s32.totalorder %s17, 1
    %p168 = por %p166, %p167
    %p170 = scmp.ne.s32.totalorder %s153, %s169
    %p171 = scmp.eq.s32.totalorder %s17, 0
    %p172 = por %p170, %p171
    %p173 = scmp.le.s32.totalorder 1, %s11
    %p174 = scmp.lt.s32.totalorder %s11, 3
    %p175 = pnand %p173, %p174
    %p176 = pneg %p175
    // Predicated region
    $region9: #{bigru_for_srl_forward.4} parent=5 // pred_check
      _
    $region10: #{bigru_for_srl_forward.4} parent=5 // pred_check_branch
      %178 = sbr.rel (%p175) target = $region12
    $region11: #{bigru_for_srl_forward.4} parent=5 // pred_region
      %s179 = ssub.s32 %s11, 1
      // Predicated region
      $region13: #{bigru_for_srl_forward.4} parent=11 // pred_check
        %p180 = pneg %p74
      $region14: #{bigru_for_srl_forward.4} parent=11 // pred_check_branch
        %182 = sbr.rel (%p180) target = $region16
      $region15: #{bigru_for_srl_forward.4} parent=11 // pred_region
        _
      $region16: #{bigru_for_srl_forward.4} parent=11 // pred_fallthru
        _
      // Predicated region
      $region17: #{bigru_for_srl_forward.4} parent=11 // pred_check
        %p183 = pneg %p95
      $region18: #{bigru_for_srl_forward.4} parent=11 // pred_check_branch
        %185 = sbr.rel (%p183) target = $region20
      $region19: #{bigru_for_srl_forward.4} parent=11 // pred_region
        _
      $region20: #{bigru_for_srl_forward.4} parent=11 // pred_fallthru
        _
      // Predicated region
      $region21: #{bigru_for_srl_forward.4} parent=11 // pred_check
        %p186 = pneg %p116
      $region22: #{bigru_for_srl_forward.4} parent=11 // pred_check_branch
        %188 = sbr.rel (%p186) target = $region24
      $region23: #{bigru_for_srl_forward.4} parent=11 // pred_region
        _
      $region24: #{bigru_for_srl_forward.4} parent=11 // pred_fallthru
        _
      // Predicated region
      $region25: #{bigru_for_srl_forward.4} parent=11 // pred_check
        %p189 = pneg %p137
      $region26: #{bigru_for_srl_forward.4} parent=11 // pred_check_branch
        %191 = sbr.rel (%p189) target = $region28
      $region27: #{bigru_for_srl_forward.4} parent=11 // pred_region
        _
      $region28: #{bigru_for_srl_forward.4} parent=11 // pred_fallthru
        _
    $region12: #{bigru_for_srl_forward.4} parent=5 // pred_fallthru
      _
    %p192 = scmp.lt.s32.totalorder %s11, 2
    // Predicated region
    $region29: #{bigru_for_srl_forward.4} parent=5 // pred_check
      %p193 = pneg %p192
    $region30: #{bigru_for_srl_forward.4} parent=5 // pred_check_branch
      %195 = sbr.rel (%p193) target = $region32
    $region31: #{bigru_for_srl_forward.4} parent=5 // pred_region
      // Predicated region
      $region33: #{bigru_for_srl_forward.4} parent=31 // pred_check
        %p196 = pneg %p47
      $region34: #{bigru_for_srl_forward.4} parent=31 // pred_check_branch
        %198 = sbr.rel (%p196) target = $region36
      $region35: #{bigru_for_srl_forward.4} parent=31 // pred_region
        %s199 = ssub.s32 1, %s19
        %s200 = smul.u32 4, %s199
        %s201 = smul.u32 2, %s18
        %p202 = scmp.lt.s32.totalorder %s200, 7
        %s203 = scalar_select %p202, %s200, 7
        %p204 = scmp.lt.s32.totalorder %s201, 1
        %s205 = scalar_select %p204, %s201, 1
        %s206 = smul.addr %s203, 2
        %s207 = sadd.s32 %s205, %s206
        %s208 = smul.addr %s207, 4
        %s209 = scalar_lea.vmem %s0, %s208
        %s210 = ssub.s32 1, %s19
        %s211 = smul.u32 4, %s210
        %s212 = smul.u32 2, %s18
      $region36: #{bigru_for_srl_forward.4} parent=31 // pred_fallthru
        _
    $region32: #{bigru_for_srl_forward.4} parent=5 // pred_fallthru
      _
    %p213 = scmp.le.s32.totalorder 1, %s11
    %p214 = scmp.lt.s32.totalorder %s11, 3
    %p215 = pnand %p213, %p214
    %p216 = pneg %p215
    // Predicated region
    $region37: #{bigru_for_srl_forward.4} parent=5 // pred_check
      _
    $region38: #{bigru_for_srl_forward.4} parent=5 // pred_check_branch
      %218 = sbr.rel (%p215) target = $region40
    $region39: #{bigru_for_srl_forward.4} parent=5 // pred_region
      %s219 = ssub.s32 %s11, 1
      %s220 = ssub.s32 1, %s21
      %s221 = smul.u32 4, %s220
      %s222 = smul.u32 2, %s20
      %p223 = scmp.lt.s32.totalorder %s221, 7
      %s224 = scalar_select %p223, %s221, 7
      %p225 = scmp.lt.s32.totalorder %s222, 1
      %s226 = scalar_select %p225, %s222, 1
      %s227 = smul.addr %s224, 2
      %s228 = sadd.s32 %s226, %s227
      %s229 = smul.addr %s228, 4
      %s230 = scalar_lea.vmem %s0, %s229
      %p231 = pneg %p53
      %p232 = pneg %p50
      %p233 = pneg %p74
      %p234 = pneg %p71
      %p235 = pneg %p95
      %p236 = pneg %p92
      %p237 = pneg %p116
      %p238 = pneg %p113
      %p239 = pneg %p137
      %p240 = pneg %p134
      %p241 = pneg %p165
      %p242 = pneg %p162
      %s243 = smul.u32 4, %s21
      %s244 = smul.u32 2, %s20
      %p245 = scmp.lt.s32.totalorder %s243, 7
      %s246 = scalar_select %p245, %s243, 7
      %p247 = scmp.lt.s32.totalorder %s244, 1
      %s248 = scalar_select %p247, %s244, 1
      %s249 = smul.addr %s246, 2
      %s250 = sadd.s32 %s248, %s249
      %s251 = smul.addr %s250, 4
      %s252 = scalar_lea.vmem %s5, %s251
      %s253 = ssub.s32 1, %s21
      %s254 = smul.u32 4, %s253
      %s255 = smul.u32 2, %s20
      %p256 = scmp.lt.s32.totalorder %s254, 7
      %s257 = scalar_select %p256, %s254, 7
      %p258 = scmp.lt.s32.totalorder %s255, 1
      %s259 = scalar_select %p258, %s255, 1
      %s260 = smul.addr %s257, 2
      %s261 = sadd.s32 %s259, %s260
      %s262 = smul.addr %s261, 4
      %s263 = scalar_lea.vmem %s0, %s262
      %s264 = ssub.s32 1, %s21
      %s265 = smul.u32 4, %s264
      %s266 = smul.u32 2, %s20
      %s267 = smul.u32 4, %s21
      %s268 = smul.u32 2, %s20
      %p269 = scmp.lt.s32.totalorder %s267, 7
      %s270 = scalar_select %p269, %s267, 7
      %p271 = scmp.lt.s32.totalorder %s268, 1
      %s272 = scalar_select %p271, %s268, 1
      %s273 = smul.addr %s270, 2
      %s274 = sadd.s32 %s272, %s273
      %s275 = smul.addr %s274, 4
      %s276 = scalar_lea.vmem %s5, %s275
      %s277 = smul.u32 4, %s21
      %s278 = smul.u32 2, %s20
      %p279 = scmp.eq.s32.totalorder %s21, 0
      // Predicated region
      $region41: #{bigru_for_srl_forward.4} parent=39 // pred_check
        %p280 = pneg %p279
      $region42: #{bigru_for_srl_forward.4} parent=39 // pred_check_branch
        %282 = sbr.rel (%p280) target = $region44
      $region43: #{bigru_for_srl_forward.4} parent=39 // pred_region
        %283 = vst [vmem:[#allocation3] sm:$0xff] 0.0
        %284 = vst [vmem:[#allocation3 + $0x8] sm:$0xff] 0.0
      $region44: #{bigru_for_srl_forward.4} parent=39 // pred_fallthru
        _
      %v285 = vld [vmem:[%s263] sm:$0xf]
      %v286 = vld [vmem:[%s263 + $0x4] sm:$0xf]
      %v287 = vld [vmem:[%s263 + $0x8] sm:$0xf]
      %v288 = vld [vmem:[%s263 + $0xc] sm:$0xf]
      %v289 = vld [vmem:[%s263 + $0x10] sm:$0xf]
      %v290 = vld [vmem:[%s263 + $0x14] sm:$0xf]
      %v291 = vld [vmem:[%s263 + $0x18] sm:$0xf]
      %v292 = vld [vmem:[%s263 + $0x1c] sm:$0xf]
      %v293 = vld [vmem:[%s1] sm:$0xff]
      %v294 = vld [vmem:[%s1 + $0x8] sm:$0xf]
      %v295 = vld [vmem:[%s1 + $0xc] sm:$0xff]
      %v296 = vld [vmem:[%s1 + $0x14] sm:$0xf]
      %v297 = vld [vmem:[%s1 + $0x18] sm:$0xff]
      %v298 = vld [vmem:[%s1 + $0x20] sm:$0xf]
      %v299 = vld [vmem:[%s1 + $0x24] sm:$0xff]
      %v300 = vld [vmem:[%s1 + $0x2c] sm:$0xf]
      %v301 = vld [vmem:[%s1 + $0x30] sm:$0xff]
      %v302 = vld [vmem:[%s1 + $0x38] sm:$0xf]
      %v303 = vld [vmem:[%s1 + $0x3c] sm:$0xff]
      %v304 = vld [vmem:[%s1 + $0x44] sm:$0xf]
      %v305 = vld [vmem:[%s1 + $0x48] sm:$0xff]
      %v306 = vld [vmem:[%s1 + $0x50] sm:$0xf]
      %v307 = vld [vmem:[%s1 + $0x54] sm:$0xff]
      %v308 = vld [vmem:[%s1 + $0x5c] sm:$0xf]
      %v309 = vld [vmem:[%s1 + $0x60] sm:$0xff]
      %v310 = vld [vmem:[%s1 + $0x68] sm:$0xf]
      %v311 = vld [vmem:[%s1 + $0x6c] sm:$0xff]
      %v312 = vld [vmem:[%s1 + $0x74] sm:$0xf]
      %v313 = vld [vmem:[%s1 + $0x78] sm:$0xff]
      %v314 = vld [vmem:[%s1 + $0x80] sm:$0xf]
      %v315 = vld [vmem:[%s1 + $0x84] sm:$0xff]
      %v316 = vld [vmem:[%s1 + $0x8c] sm:$0xf]
      %v317 = vld [vmem:[%s1 + $0x90] sm:$0xff]
      %v318 = vld [vmem:[%s1 + $0x98] sm:$0xf]
      %v319 = vld [vmem:[%s1 + $0x9c] sm:$0xff]
      %v320 = vld [vmem:[%s1 + $0xa4] sm:$0xf]
      %v321 = vld [vmem:[%s1 + $0xa8] sm:$0xff]
      %v322 = vld [vmem:[%s1 + $0xb0] sm:$0xf]
      %v323 = vld [vmem:[%s1 + $0xb4] sm:$0xff]
      %v324 = vld [vmem:[%s1 + $0xbc] sm:$0xf]
      %v325 = vld [vmem:[%s3] sm:$0x7]
      %v327 = vperm.slane %v325, 0
      %v328 = vperm.slane %v325, 1
      %v329 = vperm.slane %v325, 2
      %v341 = vunpack.c.l.b16 %v285
      %v342 = vunpack.c.l.b16 %v286
      %v343 = vunpack.c.l.b16 %v287
      %v344 = vunpack.c.l.b16 %v288
      %v345 = vunpack.c.l.b16 %v289
      %v346 = vunpack.c.l.b16 %v290
      %v347 = vunpack.c.l.b16 %v291
      %v348 = vunpack.c.l.b16 %v292
      %v349 = vpack.c.b16 %v342, %v341
      %v350 = vpack.c.b16 %v344, %v343
      %v351 = vpack.c.b16 %v346, %v345
      %v352 = vpack.c.b16 %v348, %v347
      %v389 = vunpack.c.l.b16 %v293
      %v390 = vunpack.c.h.b16 %v293
      %v391 = vunpack.c.l.b16 %v294
      %v392 = vunpack.c.l.b16 %v295
      %v393 = vunpack.c.h.b16 %v295
      %v394 = vunpack.c.l.b16 %v296
      %v395 = vunpack.c.l.b16 %v297
      %v396 = vunpack.c.h.b16 %v297
      %v397 = vunpack.c.l.b16 %v298
      %v398 = vunpack.c.l.b16 %v299
      %v399 = vunpack.c.h.b16 %v299
      %v400 = vunpack.c.l.b16 %v300
      %v401 = vunpack.c.l.b16 %v301
      %v402 = vunpack.c.h.b16 %v301
      %v403 = vunpack.c.l.b16 %v302
      %v404 = vunpack.c.l.b16 %v303
      %v405 = vunpack.c.h.b16 %v303
      %v406 = vunpack.c.l.b16 %v304
      %v407 = vunpack.c.l.b16 %v305
      %v408 = vunpack.c.h.b16 %v305
      %v409 = vunpack.c.l.b16 %v306
      %v410 = vunpack.c.l.b16 %v307
      %v411 = vunpack.c.h.b16 %v307
      %v412 = vunpack.c.l.b16 %v308
      %v413 = vunpack.c.l.b16 %v309
      %v414 = vunpack.c.h.b16 %v309
      %v415 = vunpack.c.l.b16 %v310
      %v416 = vunpack.c.l.b16 %v311
      %v417 = vunpack.c.h.b16 %v311
      %v418 = vunpack.c.l.b16 %v312
      %v419 = vunpack.c.l.b16 %v313
      %v420 = vunpack.c.h.b16 %v313
      %v421 = vunpack.c.l.b16 %v314
      %v422 = vunpack.c.l.b16 %v315
      %v423 = vunpack.c.h.b16 %v315
      %v424 = vunpack.c.l.b16 %v316
      %v425 = vunpack.c.l.b16 %v317
      %v426 = vunpack.c.h.b16 %v317
      %v427 = vunpack.c.l.b16 %v318
      %v428 = vunpack.c.l.b16 %v319
      %v429 = vunpack.c.h.b16 %v319
      %v430 = vunpack.c.l.b16 %v320
      %v431 = vunpack.c.l.b16 %v321
      %v432 = vunpack.c.h.b16 %v321
      %v433 = vunpack.c.l.b16 %v322
      %v434 = vunpack.c.l.b16 %v323
      %v435 = vunpack.c.h.b16 %v323
      %v436 = vunpack.c.l.b16 %v324
      %v437 = vpack.c.b16 %v392, %v389
      %v438 = vpack.c.b16 %v393, %v390
      %v439 = vpack.c.b16 %v394, %v391
      %v440 = vpack.c.b16 %v398, %v395
      %v441 = vpack.c.b16 %v399, %v396
      %v442 = vpack.c.b16 %v400, %v397
      %v443 = vpack.c.b16 %v404, %v401
      %v444 = vpack.c.b16 %v405, %v402
      %v445 = vpack.c.b16 %v406, %v403
      %v446 = vpack.c.b16 %v410, %v407
      %v447 = vpack.c.b16 %v411, %v408
      %v448 = vpack.c.b16 %v412, %v409
      %v449 = vpack.c.b16 %v416, %v413
      %v450 = vpack.c.b16 %v417, %v414
      %v451 = vpack.c.b16 %v418, %v415
      %v452 = vpack.c.b16 %v422, %v419
      %v453 = vpack.c.b16 %v423, %v420
      %v454 = vpack.c.b16 %v424, %v421
      %v455 = vpack.c.b16 %v428, %v425
      %v456 = vpack.c.b16 %v429, %v426
      %v457 = vpack.c.b16 %v430, %v427
      %v458 = vpack.c.b16 %v434, %v431
      %v459 = vpack.c.b16 %v435, %v432
      %v460 = vpack.c.b16 %v436, %v433
      %485 = vmatpush.bf16.msra.mxu0 %v458
      %486 = vmatpush.bf16.msra.mxu0 %v455
      %487 = vmatpush.bf16.msra.mxu0 %v452
      %488 = vmatpush.bf16.msra.mxu0 %v449
      %489 = vmatpush.bf16.msra.mxu0 %v446
      %490 = vmatpush.bf16.msra.mxu0 %v443
      %491 = vmatpush.bf16.msra.mxu0 %v440
      %492 = vmatpush.bf16.msra.mxu0 %v437
      %493 = vmatmul.bf16.gmra.mxu0 %v349
      %v494 = vpop.f32.mrf.mxu0
      %v495 = vadd.f32 %v327, %v494
      %v496 = vpop.f32.mrf.mxu0
      %v497 = vadd.f32 %v327, %v496
      %498 = vmatmul.bf16.gmra.mxu0 %v350
      %v499 = vpop.f32.mrf.mxu0
      %v500 = vadd.f32 %v327, %v499
      %v501 = vpop.f32.mrf.mxu0
      %v502 = vadd.f32 %v327, %v501
      %503 = vmatmul.bf16.gmra.mxu0 %v351
      %v504 = vpop.f32.mrf.mxu0
      %v505 = vadd.f32 %v327, %v504
      %v506 = vpop.f32.mrf.mxu0
      %v507 = vadd.f32 %v327, %v506
      %508 = vmatmul.bf16.gmra.mxu0 %v352
      %v509 = vpop.f32.mrf.mxu0
      %v510 = vadd.f32 %v327, %v509
      %v511 = vpop.f32.mrf.mxu0
      %v512 = vadd.f32 %v327, %v511
      %513 = vdwg.mxu0
      %514 = vmatpush.bf16.msra.mxu0 %v459
      %515 = vmatpush.bf16.msra.mxu0 %v456
      %516 = vmatpush.bf16.msra.mxu0 %v453
      %517 = vmatpush.bf16.msra.mxu0 %v450
      %518 = vmatpush.bf16.msra.mxu0 %v447
      %519 = vmatpush.bf16.msra.mxu0 %v444
      %520 = vmatpush.bf16.msra.mxu0 %v441
      %521 = vmatpush.bf16.msra.mxu0 %v438
      %522 = vmatmul.bf16.gmra.mxu0 %v349
      %v523 = vpop.f32.mrf.mxu0
      %v524 = vadd.f32 %v328, %v523
      %v525 = vpop.f32.mrf.mxu0
      %v526 = vadd.f32 %v328, %v525
      %527 = vmatmul.bf16.gmra.mxu0 %v350
      %v528 = vpop.f32.mrf.mxu0
      %v529 = vadd.f32 %v328, %v528
      %v530 = vpop.f32.mrf.mxu0
      %v531 = vadd.f32 %v328, %v530
      %532 = vmatmul.bf16.gmra.mxu0 %v351
      %v533 = vpop.f32.mrf.mxu0
      %v534 = vadd.f32 %v328, %v533
      %v535 = vpop.f32.mrf.mxu0
      %v536 = vadd.f32 %v328, %v535
      %537 = vmatmul.bf16.gmra.mxu0 %v352
      %v538 = vpop.f32.mrf.mxu0
      %v539 = vadd.f32 %v328, %v538
      %v540 = vpop.f32.mrf.mxu0
      %v541 = vadd.f32 %v328, %v540
      %542 = vdwg.mxu0
      %543 = vmatpush.bf16.msra.mxu0 %v460
      %544 = vmatpush.bf16.msra.mxu0 %v457
      %545 = vmatpush.bf16.msra.mxu0 %v454
      %546 = vmatpush.bf16.msra.mxu0 %v451
      %547 = vmatpush.bf16.msra.mxu0 %v448
      %548 = vmatpush.bf16.msra.mxu0 %v445
      %549 = vmatpush.bf16.msra.mxu0 %v442
      %550 = vmatpush.bf16.msra.mxu0 %v439
      %551 = vmatmul.bf16.gmra.mxu0 %v349
      %v552 = vpop.f32.mrf.mxu0
      %v553 = vadd.f32 %v329, %v552
      %v554 = vpop.f32.mrf.mxu0
      %v555 = vadd.f32 %v329, %v554
      %556 = vmatmul.bf16.gmra.mxu0 %v350
      %v557 = vpop.f32.mrf.mxu0
      %v558 = vadd.f32 %v329, %v557
      %v559 = vpop.f32.mrf.mxu0
      %v560 = vadd.f32 %v329, %v559
      %561 = vmatmul.bf16.gmra.mxu0 %v351
      %v562 = vpop.f32.mrf.mxu0
      %v563 = vadd.f32 %v329, %v562
      %v564 = vpop.f32.mrf.mxu0
      %v565 = vadd.f32 %v329, %v564
      %566 = vmatmul.bf16.gmra.mxu0 %v352
      %v567 = vpop.f32.mrf.mxu0
      %v568 = vadd.f32 %v329, %v567
      %v569 = vpop.f32.mrf.mxu0
      %v570 = vadd.f32 %v329, %v569
      %571 = vdwg.mxu0
      %572 = vst [vmem:[#allocation2] sm:$0xff] %v495
      %573 = vst [vmem:[#allocation2 + $0x8] sm:$0xff] %v524
      %574 = vst [vmem:[#allocation2 + $0x10] sm:$0xff] %v553
      %575 = vst [vmem:[#allocation2 + $0x18] sm:$0xff] %v497
      %576 = vst [vmem:[#allocation2 + $0x20] sm:$0xff] %v526
      %577 = vst [vmem:[#allocation2 + $0x28] sm:$0xff] %v555
      %578 = vst [vmem:[#allocation2 + $0x30] sm:$0xff] %v500
      %579 = vst [vmem:[#allocation2 + $0x38] sm:$0xff] %v529
      %580 = vst [vmem:[#allocation2 + $0x40] sm:$0xff] %v558
      %581 = vst [vmem:[#allocation2 + $0x48] sm:$0xff] %v502
      %582 = vst [vmem:[#allocation2 + $0x50] sm:$0xff] %v531
      %583 = vst [vmem:[#allocation2 + $0x58] sm:$0xff] %v560
      %584 = vst [vmem:[#allocation2 + $0x60] sm:$0xff] %v505
      %585 = vst [vmem:[#allocation2 + $0x68] sm:$0xff] %v534
      %586 = vst [vmem:[#allocation2 + $0x70] sm:$0xff] %v563
      %587 = vst [vmem:[#allocation2 + $0x78] sm:$0xff] %v507
      %588 = vst [vmem:[#allocation2 + $0x80] sm:$0xff] %v536
      %589 = vst [vmem:[#allocation2 + $0x88] sm:$0xff] %v565
      %590 = vst [vmem:[#allocation2 + $0x90] sm:$0xff] %v510
      %591 = vst [vmem:[#allocation2 + $0x98] sm:$0xff] %v539
      %592 = vst [vmem:[#allocation2 + $0xa0] sm:$0xff] %v568
      %593 = vst [vmem:[#allocation2 + $0xa8] sm:$0xff] %v512
      %594 = vst [vmem:[#allocation2 + $0xb0] sm:$0xff] %v541
      %595 = vst [vmem:[#allocation2 + $0xb8] sm:$0xff] %v570
      %v596 = vld [vmem:[%s2] sm:$0xff]
      %v597 = vld [vmem:[%s2 + $0x8] sm:$0xf]
      %v598 = vld [vmem:[%s2 + $0xc] sm:$0xff]
      %v599 = vld [vmem:[%s2 + $0x14] sm:$0xf]
      %v600 = vld [vmem:[%s2 + $0x18] sm:$0xff]
      %v601 = vld [vmem:[%s2 + $0x20] sm:$0xf]
      %v602 = vld [vmem:[%s2 + $0x24] sm:$0xff]
      %v603 = vld [vmem:[%s2 + $0x2c] sm:$0xf]
      %v604 = vld [vmem:[%s2 + $0x30] sm:$0xff]
      %v605 = vld [vmem:[%s2 + $0x38] sm:$0xf]
      %v606 = vld [vmem:[%s2 + $0x3c] sm:$0xff]
      %v607 = vld [vmem:[%s2 + $0x44] sm:$0xf]
      %v608 = vld [vmem:[%s2 + $0x48] sm:$0xff]
      %v609 = vld [vmem:[%s2 + $0x50] sm:$0xf]
      %v610 = vld [vmem:[%s2 + $0x54] sm:$0xff]
      %v611 = vld [vmem:[%s2 + $0x5c] sm:$0xf]
      %v612 = vld [vmem:[%s2 + $0x60] sm:$0xff]
      %v613 = vld [vmem:[%s2 + $0x68] sm:$0xf]
      %v614 = vld [vmem:[%s2 + $0x6c] sm:$0xff]
      %v615 = vld [vmem:[%s2 + $0x74] sm:$0xf]
      %v616 = vld [vmem:[%s2 + $0x78] sm:$0xff]
      %v617 = vld [vmem:[%s2 + $0x80] sm:$0xf]
      %v618 = vld [vmem:[%s2 + $0x84] sm:$0xff]
      %v619 = vld [vmem:[%s2 + $0x8c] sm:$0xf]
      %v620 = vld [vmem:[%s2 + $0x90] sm:$0xff]
      %v621 = vld [vmem:[%s2 + $0x98] sm:$0xf]
      %v622 = vld [vmem:[%s2 + $0x9c] sm:$0xff]
      %v623 = vld [vmem:[%s2 + $0xa4] sm:$0xf]
      %v624 = vld [vmem:[%s2 + $0xa8] sm:$0xff]
      %v625 = vld [vmem:[%s2 + $0xb0] sm:$0xf]
      %v626 = vld [vmem:[%s2 + $0xb4] sm:$0xff]
      %v627 = vld [vmem:[%s2 + $0xbc] sm:$0xf]
      %v628 = vld [vmem:[%s4] sm:$0x1]
      %v630 = vperm.slane %v628, 0
      %v632 = vld [vmem:[#allocation3] sm:$0xff]
      %v633 = vld [vmem:[#allocation3 + $0x8] sm:$0xff]
      %s634 = scalar_lea.vmem [#allocation2], 144
      %v635 = vld [vmem:[%s634] sm:$0xff]
      %v636 = vld [vmem:[%s634 + $0x8] sm:$0xff]
      %v637 = vld [vmem:[%s634 + $0x10] sm:$0xff]
      %v638 = vld [vmem:[%s634 + $0x18] sm:$0xff]
      %v639 = vld [vmem:[%s634 + $0x20] sm:$0xff]
      %v640 = vld [vmem:[%s634 + $0x28] sm:$0xff]
      %v641 = vpack.c.bf16 %v633, %v632
      %v674 = vunpack.c.l.b16 %v596
      %v675 = vunpack.c.h.b16 %v596
      %v676 = vunpack.c.l.b16 %v597
      %v677 = vunpack.c.l.b16 %v598
      %v678 = vunpack.c.h.b16 %v598
      %v679 = vunpack.c.l.b16 %v599
      %v680 = vunpack.c.l.b16 %v600
      %v681 = vunpack.c.h.b16 %v600
      %v682 = vunpack.c.l.b16 %v601
      %v683 = vunpack.c.l.b16 %v602
      %v684 = vunpack.c.h.b16 %v602
      %v685 = vunpack.c.l.b16 %v603
      %v686 = vunpack.c.l.b16 %v604
      %v687 = vunpack.c.h.b16 %v604
      %v688 = vunpack.c.l.b16 %v605
      %v689 = vunpack.c.l.b16 %v606
      %v690 = vunpack.c.h.b16 %v606
      %v691 = vunpack.c.l.b16 %v607
      %v692 = vunpack.c.l.b16 %v608
      %v693 = vunpack.c.h.b16 %v608
      %v694 = vunpack.c.l.b16 %v609
      %v695 = vunpack.c.l.b16 %v610
      %v696 = vunpack.c.h.b16 %v610
      %v697 = vunpack.c.l.b16 %v611
      %v698 = vunpack.c.l.b16 %v612
      %v699 = vunpack.c.h.b16 %v612
      %v700 = vunpack.c.l.b16 %v613
      %v701 = vunpack.c.l.b16 %v614
      %v702 = vunpack.c.h.b16 %v614
      %v703 = vunpack.c.l.b16 %v615
      %v704 = vunpack.c.l.b16 %v616
      %v705 = vunpack.c.h.b16 %v616
      %v706 = vunpack.c.l.b16 %v617
      %v707 = vunpack.c.l.b16 %v618
      %v708 = vunpack.c.h.b16 %v618
      %v709 = vunpack.c.l.b16 %v619
      %v710 = vunpack.c.l.b16 %v620
      %v711 = vunpack.c.h.b16 %v620
      %v712 = vunpack.c.l.b16 %v621
      %v713 = vunpack.c.l.b16 %v622
      %v714 = vunpack.c.h.b16 %v622
      %v715 = vunpack.c.l.b16 %v623
      %v716 = vunpack.c.l.b16 %v624
      %v717 = vunpack.c.h.b16 %v624
      %v718 = vunpack.c.l.b16 %v625
      %v719 = vunpack.c.l.b16 %v626
      %v720 = vunpack.c.h.b16 %v626
      %v721 = vunpack.c.l.b16 %v627
      %v722 = vpack.c.b16 %v677, %v674
      %v723 = vpack.c.b16 %v678, %v675
      %v724 = vpack.c.b16 %v679, %v676
      %v725 = vpack.c.b16 %v683, %v680
      %v726 = vpack.c.b16 %v684, %v681
      %v727 = vpack.c.b16 %v685, %v682
      %v728 = vpack.c.b16 %v689, %v686
      %v729 = vpack.c.b16 %v690, %v687
      %v730 = vpack.c.b16 %v691, %v688
      %v731 = vpack.c.b16 %v695, %v692
      %v732 = vpack.c.b16 %v696, %v693
      %v733 = vpack.c.b16 %v697, %v694
      %v734 = vpack.c.b16 %v701, %v698
      %v735 = vpack.c.b16 %v702, %v699
      %v736 = vpack.c.b16 %v703, %v700
      %v737 = vpack.c.b16 %v707, %v704
      %v738 = vpack.c.b16 %v708, %v705
      %v739 = vpack.c.b16 %v709, %v706
      %v740 = vpack.c.b16 %v713, %v710
      %v741 = vpack.c.b16 %v714, %v711
      %v742 = vpack.c.b16 %v715, %v712
      %v743 = vpack.c.b16 %v719, %v716
      %v744 = vpack.c.b16 %v720, %v717
      %v745 = vpack.c.b16 %v721, %v718
      %770 = vmatpush.bf16.msra.mxu0 %v743
      %771 = vmatpush.bf16.msra.mxu0 %v740
      %772 = vmatpush.bf16.msra.mxu0 %v737
      %773 = vmatpush.bf16.msra.mxu0 %v734
      %774 = vmatpush.bf16.msra.mxu0 %v731
      %775 = vmatpush.bf16.msra.mxu0 %v728
      %776 = vmatpush.bf16.msra.mxu0 %v725
      %777 = vmatpush.bf16.msra.mxu0 %v722
      %778 = vmatmul.bf16.gmra.mxu0 %v641
      %v779 = vpop.f32.mrf.mxu0
      %v780 = vadd.f32 0.0, %v779
      %v781 = vpop.f32.mrf.mxu0
      %v782 = vadd.f32 0.0, %v781
      %783 = vdwg.mxu0
      %784 = vmatpush.bf16.msra.mxu0 %v744
      %785 = vmatpush.bf16.msra.mxu0 %v741
      %786 = vmatpush.bf16.msra.mxu0 %v738
      %787 = vmatpush.bf16.msra.mxu0 %v735
      %788 = vmatpush.bf16.msra.mxu0 %v732
      %789 = vmatpush.bf16.msra.mxu0 %v729
      %790 = vmatpush.bf16.msra.mxu0 %v726
      %791 = vmatpush.bf16.msra.mxu0 %v723
      %792 = vmatmul.bf16.gmra.mxu0 %v641
      %v793 = vpop.f32.mrf.mxu0
      %v794 = vadd.f32 0.0, %v793
      %v795 = vpop.f32.mrf.mxu0
      %v796 = vadd.f32 0.0, %v795
      %797 = vdwg.mxu0
      %798 = vmatpush.bf16.msra.mxu0 %v745
      %799 = vmatpush.bf16.msra.mxu0 %v742
      %800 = vmatpush.bf16.msra.mxu0 %v739
      %801 = vmatpush.bf16.msra.mxu0 %v736
      %802 = vmatpush.bf16.msra.mxu0 %v733
      %803 = vmatpush.bf16.msra.mxu0 %v730
      %804 = vmatpush.bf16.msra.mxu0 %v727
      %805 = vmatpush.bf16.msra.mxu0 %v724
      %806 = vmatmul.bf16.gmra.mxu0 %v641
      %v807 = vpop.f32.mrf.mxu0
      %v808 = vadd.f32 0.0, %v807
      %v809 = vpop.f32.mrf.mxu0
      %v810 = vadd.f32 0.0, %v809
      %811 = vdwg.mxu0
      %v812 = vadd.f32 %v635, %v780
      %v813 = vadd.f32 %v638, %v782
      %v814 = vxor.u32 %v812, 2147483648
      %v815 = vxor.u32 %v813, 2147483648
      %v816 = vmul.f32 %v814, 1.442695
      %v817 = vpow.pop %v816
      %v818 = vmul.f32 %v815, 1.442695
      %v819 = vpow.pop %v818
      %v820 = vadd.f32 %v817, 1.0
      %v821 = vadd.f32 %v819, 1.0
      %v822 = vrcp.pop %v820
      %v823 = vmul.f32 %v820, %v822
      %v824 = vsub.f32 1.0, %v823
      %v825 = vmul.f32 %v822, %v824
      %v826 = vadd.f32 %v822, %v825
      %vm827 = vweird.f32 %v820
      %vm828 = vweird.f32 %v822
      %vm829 = vmor %vm827, %vm828
      %v830 = vsel %vm829, %v822, %v826
      %v831 = vand.u32 2147483647, %v820
      %vm832 = vcmp.eq.f32.partialorder %v831, 8.507059e+37
      %v833 = vand.u32 %v820, 2147483648
      %v834 = vor.u32 1.1754944e-38, %v833
      %v835 = vsel %vm832, %v834, %v830
      %v836 = vmul.f32 1.0, %v835
      %v837 = vrcp.pop %v821
      %v838 = vmul.f32 %v821, %v837
      %v839 = vsub.f32 1.0, %v838
      %v840 = vmul.f32 %v837, %v839
      %v841 = vadd.f32 %v837, %v840
      %vm842 = vweird.f32 %v821
      %vm843 = vweird.f32 %v837
      %vm844 = vmor %vm842, %vm843
      %v845 = vsel %vm844, %v837, %v841
      %v846 = vand.u32 2147483647, %v821
      %vm847 = vcmp.eq.f32.partialorder %v846, 8.507059e+37
      %v848 = vand.u32 %v821, 2147483648
      %v849 = vor.u32 1.1754944e-38, %v848
      %v850 = vsel %vm847, %v849, %v845
      %v851 = vmul.f32 1.0, %v850
      %v852 = vadd.f32 %v636, %v794
      %v853 = vadd.f32 %v639, %v796
      %v854 = vxor.u32 %v852, 2147483648
      %v855 = vxor.u32 %v853, 2147483648
      %v856 = vmul.f32 %v854, 1.442695
      %v857 = vpow.pop %v856
      %v858 = vmul.f32 %v855, 1.442695
      %v859 = vpow.pop %v858
      %v860 = vadd.f32 %v857, 1.0
      %v861 = vadd.f32 %v859, 1.0
      %v862 = vrcp.pop %v860
      %v863 = vmul.f32 %v860, %v862
      %v864 = vsub.f32 1.0, %v863
      %v865 = vmul.f32 %v862, %v864
      %v866 = vadd.f32 %v862, %v865
      %vm867 = vweird.f32 %v860
      %vm868 = vweird.f32 %v862
      %vm869 = vmor %vm867, %vm868
      %v870 = vsel %vm869, %v862, %v866
      %v871 = vand.u32 2147483647, %v860
      %vm872 = vcmp.eq.f32.partialorder %v871, 8.507059e+37
      %v873 = vand.u32 %v860, 2147483648
      %v874 = vor.u32 1.1754944e-38, %v873
      %v875 = vsel %vm872, %v874, %v870
      %v876 = vmul.f32 1.0, %v875
      %v877 = vrcp.pop %v861
      %v878 = vmul.f32 %v861, %v877
      %v879 = vsub.f32 1.0, %v878
      %v880 = vmul.f32 %v877, %v879
      %v881 = vadd.f32 %v877, %v880
      %vm882 = vweird.f32 %v861
      %vm883 = vweird.f32 %v877
      %vm884 = vmor %vm882, %vm883
      %v885 = vsel %vm884, %v877, %v881
      %v886 = vand.u32 2147483647, %v861
      %vm887 = vcmp.eq.f32.partialorder %v886, 8.507059e+37
      %v888 = vand.u32 %v861, 2147483648
      %v889 = vor.u32 1.1754944e-38, %v888
      %v890 = vsel %vm887, %v889, %v885
      %v891 = vmul.f32 1.0, %v890
      %v892 = vadd.f32 %v808, %v630
      %v893 = vadd.f32 %v810, %v630
      %v894 = vmul.f32 %v836, %v892
      %v895 = vmul.f32 %v851, %v893
      %v896 = vadd.f32 %v637, %v894
      %v897 = vadd.f32 %v640, %v895
      %v898 = vtanh.pop %v896
      %v899 = vtanh.pop %v897
      %v900 = vsub.f32 %v632, %v898
      %v901 = vsub.f32 %v633, %v899
      %v902 = vmul.f32 %v876, %v900
      %v903 = vmul.f32 %v891, %v901
      %v904 = vadd.f32 %v898, %v902
      %v905 = vadd.f32 %v899, %v903
      %s906 = scalar_lea.vmem %s263, 24
      %v907 = vld [vmem:[%s906] sm:$0xf]
      %v908 = vld [vmem:[%s906 + $0x4] sm:$0xf]
      %v909 = vunpack.c.l.bf16 %v907
      %v910 = vunpack.c.l.bf16 %v908
      %v911 = vadd.f32 %v904, %v909
      %v912 = vadd.f32 %v905, %v910
      %v913 = vpack.c.bf16 %v911, %v911
      %v914 = vpack.c.bf16 %v912, %v912
      %915 = vst [vmem:[%s276] sm:$0xf] %v913
      %916 = vst [vmem:[%s276 + $0x4] sm:$0xf] %v914
      %s917 = scalar_lea.vmem [#allocation2], 96
      %v918 = vld [vmem:[%s917] sm:$0xff]
      %v919 = vld [vmem:[%s917 + $0x8] sm:$0xff]
      %v920 = vld [vmem:[%s917 + $0x10] sm:$0xff]
      %v921 = vld [vmem:[%s917 + $0x18] sm:$0xff]
      %v922 = vld [vmem:[%s917 + $0x20] sm:$0xff]
      %v923 = vld [vmem:[%s917 + $0x28] sm:$0xff]
      %v924 = vpack.c.bf16 %v905, %v904
      %925 = vmatpush.bf16.msra.mxu0 %v743
      %926 = vmatpush.bf16.msra.mxu0 %v740
      %927 = vmatpush.bf16.msra.mxu0 %v737
      %928 = vmatpush.bf16.msra.mxu0 %v734
      %929 = vmatpush.bf16.msra.mxu0 %v731
      %930 = vmatpush.bf16.msra.mxu0 %v728
      %931 = vmatpush.bf16.msra.mxu0 %v725
      %932 = vmatpush.bf16.msra.mxu0 %v722
      %933 = vmatmul.bf16.gmra.mxu0 %v924
      %v934 = vpop.f32.mrf.mxu0
      %v935 = vadd.f32 0.0, %v934
      %v936 = vpop.f32.mrf.mxu0
      %v937 = vadd.f32 0.0, %v936
      %938 = vdwg.mxu0
      %939 = vmatpush.bf16.msra.mxu0 %v744
      %940 = vmatpush.bf16.msra.mxu0 %v741
      %941 = vmatpush.bf16.msra.mxu0 %v738
      %942 = vmatpush.bf16.msra.mxu0 %v735
      %943 = vmatpush.bf16.msra.mxu0 %v732
      %944 = vmatpush.bf16.msra.mxu0 %v729
      %945 = vmatpush.bf16.msra.mxu0 %v726
      %946 = vmatpush.bf16.msra.mxu0 %v723
      %947 = vmatmul.bf16.gmra.mxu0 %v924
      %v948 = vpop.f32.mrf.mxu0
      %v949 = vadd.f32 0.0, %v948
      %v950 = vpop.f32.mrf.mxu0
      %v951 = vadd.f32 0.0, %v950
      %952 = vdwg.mxu0
      %953 = vmatpush.bf16.msra.mxu0 %v745
      %954 = vmatpush.bf16.msra.mxu0 %v742
      %955 = vmatpush.bf16.msra.mxu0 %v739
      %956 = vmatpush.bf16.msra.mxu0 %v736
      %957 = vmatpush.bf16.msra.mxu0 %v733
      %958 = vmatpush.bf16.msra.mxu0 %v730
      %959 = vmatpush.bf16.msra.mxu0 %v727
      %960 = vmatpush.bf16.msra.mxu0 %v724
      %961 = vmatmul.bf16.gmra.mxu0 %v924
      %v962 = vpop.f32.mrf.mxu0
      %v963 = vadd.f32 0.0, %v962
      %v964 = vpop.f32.mrf.mxu0
      %v965 = vadd.f32 0.0, %v964
      %966 = vdwg.mxu0
      %v967 = vadd.f32 %v918, %v935
      %v968 = vadd.f32 %v921, %v937
      %v969 = vxor.u32 %v967, 2147483648
      %v970 = vxor.u32 %v968, 2147483648
      %v971 = vmul.f32 %v969, 1.442695
      %v972 = vpow.pop %v971
      %v973 = vmul.f32 %v970, 1.442695
      %v974 = vpow.pop %v973
      %v975 = vadd.f32 %v972, 1.0
      %v976 = vadd.f32 %v974, 1.0
      %v977 = vrcp.pop %v975
      %v978 = vmul.f32 %v975, %v977
      %v979 = vsub.f32 1.0, %v978
      %v980 = vmul.f32 %v977, %v979
      %v981 = vadd.f32 %v977, %v980
      %vm982 = vweird.f32 %v975
      %vm983 = vweird.f32 %v977
      %vm984 = vmor %vm982, %vm983
      %v985 = vsel %vm984, %v977, %v981
      %v986 = vand.u32 2147483647, %v975
      %vm987 = vcmp.eq.f32.partialorder %v986, 8.507059e+37
      %v988 = vand.u32 %v975, 2147483648
      %v989 = vor.u32 1.1754944e-38, %v988
      %v990 = vsel %vm987, %v989, %v985
      %v991 = vmul.f32 1.0, %v990
      %v992 = vrcp.pop %v976
      %v993 = vmul.f32 %v976, %v992
      %v994 = vsub.f32 1.0, %v993
      %v995 = vmul.f32 %v992, %v994
      %v996 = vadd.f32 %v992, %v995
      %vm997 = vweird.f32 %v976
      %vm998 = vweird.f32 %v992
      %vm999 = vmor %vm997, %vm998
      %v1000 = vsel %vm999, %v992, %v996
      %v1001 = vand.u32 2147483647, %v976
      %vm1002 = vcmp.eq.f32.partialorder %v1001, 8.507059e+37
      %v1003 = vand.u32 %v976, 2147483648
      %v1004 = vor.u32 1.1754944e-38, %v1003
      %v1005 = vsel %vm1002, %v1004, %v1000
      %v1006 = vmul.f32 1.0, %v1005
      %v1007 = vadd.f32 %v919, %v949
      %v1008 = vadd.f32 %v922, %v951
      %v1009 = vxor.u32 %v1007, 2147483648
      %v1010 = vxor.u32 %v1008, 2147483648
      %v1011 = vmul.f32 %v1009, 1.442695
      %v1012 = vpow.pop %v1011
      %v1013 = vmul.f32 %v1010, 1.442695
      %v1014 = vpow.pop %v1013
      %v1015 = vadd.f32 %v1012, 1.0
      %v1016 = vadd.f32 %v1014, 1.0
      %v1017 = vrcp.pop %v1015
      %v1018 = vmul.f32 %v1015, %v1017
      %v1019 = vsub.f32 1.0, %v1018
      %v1020 = vmul.f32 %v1017, %v1019
      %v1021 = vadd.f32 %v1017, %v1020
      %vm1022 = vweird.f32 %v1015
      %vm1023 = vweird.f32 %v1017
      %vm1024 = vmor %vm1022, %vm1023
      %v1025 = vsel %vm1024, %v1017, %v1021
      %v1026 = vand.u32 2147483647, %v1015
      %vm1027 = vcmp.eq.f32.partialorder %v1026, 8.507059e+37
      %v1028 = vand.u32 %v1015, 2147483648
      %v1029 = vor.u32 1.1754944e-38, %v1028
      %v1030 = vsel %vm1027, %v1029, %v1025
      %v1031 = vmul.f32 1.0, %v1030
      %v1032 = vrcp.pop %v1016
      %v1033 = vmul.f32 %v1016, %v1032
      %v1034 = vsub.f32 1.0, %v1033
      %v1035 = vmul.f32 %v1032, %v1034
      %v1036 = vadd.f32 %v1032, %v1035
      %vm1037 = vweird.f32 %v1016
      %vm1038 = vweird.f32 %v1032
      %vm1039 = vmor %vm1037, %vm1038
      %v1040 = vsel %vm1039, %v1032, %v1036
      %v1041 = vand.u32 2147483647, %v1016
      %vm1042 = vcmp.eq.f32.partialorder %v1041, 8.507059e+37
      %v1043 = vand.u32 %v1016, 2147483648
      %v1044 = vor.u32 1.1754944e-38, %v1043
      %v1045 = vsel %vm1042, %v1044, %v1040
      %v1046 = vmul.f32 1.0, %v1045
      %v1047 = vadd.f32 %v963, %v630
      %v1048 = vadd.f32 %v965, %v630
      %v1049 = vmul.f32 %v991, %v1047
      %v1050 = vmul.f32 %v1006, %v1048
      %v1051 = vadd.f32 %v920, %v1049
      %v1052 = vadd.f32 %v923, %v1050
      %v1053 = vtanh.pop %v1051
      %v1054 = vtanh.pop %v1052
      %v1055 = vsub.f32 %v904, %v1053
      %v1056 = vsub.f32 %v905, %v1054
      %v1057 = vmul.f32 %v1031, %v1055
      %v1058 = vmul.f32 %v1046, %v1056
      %v1059 = vadd.f32 %v1053, %v1057
      %v1060 = vadd.f32 %v1054, %v1058
      %s1061 = scalar_lea.vmem %s263, 16
      %v1062 = vld [vmem:[%s1061] sm:$0xf]
      %v1063 = vld [vmem:[%s1061 + $0x4] sm:$0xf]
      %v1064 = vunpack.c.l.bf16 %v1062
      %v1065 = vunpack.c.l.bf16 %v1063
      %v1066 = vadd.f32 %v1059, %v1064
      %v1067 = vadd.f32 %v1060, %v1065
      %v1068 = vpack.c.bf16 %v1066, %v1066
      %v1069 = vpack.c.bf16 %v1067, %v1067
      %s1070 = scalar_lea.vmem %s276, 8
      %1071 = vst [vmem:[%s1070] sm:$0xf] %v1068
      %1072 = vst [vmem:[%s1070 + $0x4] sm:$0xf] %v1069
      %s1073 = scalar_lea.vmem [#allocation2], 48
      %v1074 = vld [vmem:[%s1073] sm:$0xff]
      %v1075 = vld [vmem:[%s1073 + $0x8] sm:$0xff]
      %v1076 = vld [vmem:[%s1073 + $0x10] sm:$0xff]
      %v1077 = vld [vmem:[%s1073 + $0x18] sm:$0xff]
      %v1078 = vld [vmem:[%s1073 + $0x20] sm:$0xff]
      %v1079 = vld [vmem:[%s1073 + $0x28] sm:$0xff]
      %v1080 = vpack.c.bf16 %v1060, %v1059
      %1081 = vmatpush.bf16.msra.mxu0 %v743
      %1082 = vmatpush.bf16.msra.mxu0 %v740
      %1083 = vmatpush.bf16.msra.mxu0 %v737
      %1084 = vmatpush.bf16.msra.mxu0 %v734
      %1085 = vmatpush.bf16.msra.mxu0 %v731
      %1086 = vmatpush.bf16.msra.mxu0 %v728
      %1087 = vmatpush.bf16.msra.mxu0 %v725
      %1088 = vmatpush.bf16.msra.mxu0 %v722
      %1089 = vmatmul.bf16.gmra.mxu0 %v1080
      %v1090 = vpop.f32.mrf.mxu0
      %v1091 = vadd.f32 0.0, %v1090
      %v1092 = vpop.f32.mrf.mxu0
      %v1093 = vadd.f32 0.0, %v1092
      %1094 = vdwg.mxu0
      %1095 = vmatpush.bf16.msra.mxu0 %v744
      %1096 = vmatpush.bf16.msra.mxu0 %v741
      %1097 = vmatpush.bf16.msra.mxu0 %v738
      %1098 = vmatpush.bf16.msra.mxu0 %v735
      %1099 = vmatpush.bf16.msra.mxu0 %v732
      %1100 = vmatpush.bf16.msra.mxu0 %v729
      %1101 = vmatpush.bf16.msra.mxu0 %v726
      %1102 = vmatpush.bf16.msra.mxu0 %v723
      %1103 = vmatmul.bf16.gmra.mxu0 %v1080
      %v1104 = vpop.f32.mrf.mxu0
      %v1105 = vadd.f32 0.0, %v1104
      %v1106 = vpop.f32.mrf.mxu0
      %v1107 = vadd.f32 0.0, %v1106
      %1108 = vdwg.mxu0
      %1109 = vmatpush.bf16.msra.mxu0 %v745
      %1110 = vmatpush.bf16.msra.mxu0 %v742
      %1111 = vmatpush.bf16.msra.mxu0 %v739
      %1112 = vmatpush.bf16.msra.mxu0 %v736
      %1113 = vmatpush.bf16.msra.mxu0 %v733
      %1114 = vmatpush.bf16.msra.mxu0 %v730
      %1115 = vmatpush.bf16.msra.mxu0 %v727
      %1116 = vmatpush.bf16.msra.mxu0 %v724
      %1117 = vmatmul.bf16.gmra.mxu0 %v1080
      %v1118 = vpop.f32.mrf.mxu0
      %v1119 = vadd.f32 0.0, %v1118
      %v1120 = vpop.f32.mrf.mxu0
      %v1121 = vadd.f32 0.0, %v1120
      %1122 = vdwg.mxu0
      %v1123 = vadd.f32 %v1074, %v1091
      %v1124 = vadd.f32 %v1077, %v1093
      %v1125 = vxor.u32 %v1123, 2147483648
      %v1126 = vxor.u32 %v1124, 2147483648
      %v1127 = vmul.f32 %v1125, 1.442695
      %v1128 = vpow.pop %v1127
      %v1129 = vmul.f32 %v1126, 1.442695
      %v1130 = vpow.pop %v1129
      %v1131 = vadd.f32 %v1128, 1.0
      %v1132 = vadd.f32 %v1130, 1.0
      %v1133 = vrcp.pop %v1131
      %v1134 = vmul.f32 %v1131, %v1133
      %v1135 = vsub.f32 1.0, %v1134
      %v1136 = vmul.f32 %v1133, %v1135
      %v1137 = vadd.f32 %v1133, %v1136
      %vm1138 = vweird.f32 %v1131
      %vm1139 = vweird.f32 %v1133
      %vm1140 = vmor %vm1138, %vm1139
      %v1141 = vsel %vm1140, %v1133, %v1137
      %v1142 = vand.u32 2147483647, %v1131
      %vm1143 = vcmp.eq.f32.partialorder %v1142, 8.507059e+37
      %v1144 = vand.u32 %v1131, 2147483648
      %v1145 = vor.u32 1.1754944e-38, %v1144
      %v1146 = vsel %vm1143, %v1145, %v1141
      %v1147 = vmul.f32 1.0, %v1146
      %v1148 = vrcp.pop %v1132
      %v1149 = vmul.f32 %v1132, %v1148
      %v1150 = vsub.f32 1.0, %v1149
      %v1151 = vmul.f32 %v1148, %v1150
      %v1152 = vadd.f32 %v1148, %v1151
      %vm1153 = vweird.f32 %v1132
      %vm1154 = vweird.f32 %v1148
      %vm1155 = vmor %vm1153, %vm1154
      %v1156 = vsel %vm1155, %v1148, %v1152
      %v1157 = vand.u32 2147483647, %v1132
      %vm1158 = vcmp.eq.f32.partialorder %v1157, 8.507059e+37
      %v1159 = vand.u32 %v1132, 2147483648
      %v1160 = vor.u32 1.1754944e-38, %v1159
      %v1161 = vsel %vm1158, %v1160, %v1156
      %v1162 = vmul.f32 1.0, %v1161
      %v1163 = vadd.f32 %v1075, %v1105
      %v1164 = vadd.f32 %v1078, %v1107
      %v1165 = vxor.u32 %v1163, 2147483648
      %v1166 = vxor.u32 %v1164, 2147483648
      %v1167 = vmul.f32 %v1165, 1.442695
      %v1168 = vpow.pop %v1167
      %v1169 = vmul.f32 %v1166, 1.442695
      %v1170 = vpow.pop %v1169
      %v1171 = vadd.f32 %v1168, 1.0
      %v1172 = vadd.f32 %v1170, 1.0
      %v1173 = vrcp.pop %v1171
      %v1174 = vmul.f32 %v1171, %v1173
      %v1175 = vsub.f32 1.0, %v1174
      %v1176 = vmul.f32 %v1173, %v1175
      %v1177 = vadd.f32 %v1173, %v1176
      %vm1178 = vweird.f32 %v1171
      %vm1179 = vweird.f32 %v1173
      %vm1180 = vmor %vm1178, %vm1179
      %v1181 = vsel %vm1180, %v1173, %v1177
      %v1182 = vand.u32 2147483647, %v1171
      %vm1183 = vcmp.eq.f32.partialorder %v1182, 8.507059e+37
      %v1184 = vand.u32 %v1171, 2147483648
      %v1185 = vor.u32 1.1754944e-38, %v1184
      %v1186 = vsel %vm1183, %v1185, %v1181
      %v1187 = vmul.f32 1.0, %v1186
      %v1188 = vrcp.pop %v1172
      %v1189 = vmul.f32 %v1172, %v1188
      %v1190 = vsub.f32 1.0, %v1189
      %v1191 = vmul.f32 %v1188, %v1190
      %v1192 = vadd.f32 %v1188, %v1191
      %vm1193 = vweird.f32 %v1172
      %vm1194 = vweird.f32 %v1188
      %vm1195 = vmor %vm1193, %vm1194
      %v1196 = vsel %vm1195, %v1188, %v1192
      %v1197 = vand.u32 2147483647, %v1172
      %vm1198 = vcmp.eq.f32.partialorder %v1197, 8.507059e+37
      %v1199 = vand.u32 %v1172, 2147483648
      %v1200 = vor.u32 1.1754944e-38, %v1199
      %v1201 = vsel %vm1198, %v1200, %v1196
      %v1202 = vmul.f32 1.0, %v1201
      %v1203 = vadd.f32 %v1119, %v630
      %v1204 = vadd.f32 %v1121, %v630
      %v1205 = vmul.f32 %v1147, %v1203
      %v1206 = vmul.f32 %v1162, %v1204
      %v1207 = vadd.f32 %v1076, %v1205
      %v1208 = vadd.f32 %v1079, %v1206
      %v1209 = vtanh.pop %v1207
      %v1210 = vtanh.pop %v1208
      %v1211 = vsub.f32 %v1059, %v1209
      %v1212 = vsub.f32 %v1060, %v1210
      %v1213 = vmul.f32 %v1187, %v1211
      %v1214 = vmul.f32 %v1202, %v1212
      %v1215 = vadd.f32 %v1209, %v1213
      %v1216 = vadd.f32 %v1210, %v1214
      %s1217 = scalar_lea.vmem %s263, 8
      %v1218 = vld [vmem:[%s1217] sm:$0xf]
      %v1219 = vld [vmem:[%s1217 + $0x4] sm:$0xf]
      %v1220 = vunpack.c.l.bf16 %v1218
      %v1221 = vunpack.c.l.bf16 %v1219
      %v1222 = vadd.f32 %v1215, %v1220
      %v1223 = vadd.f32 %v1216, %v1221
      %v1224 = vpack.c.bf16 %v1222, %v1222
      %v1225 = vpack.c.bf16 %v1223, %v1223
      %s1226 = scalar_lea.vmem %s276, 16
      %1227 = vst [vmem:[%s1226] sm:$0xf] %v1224
      %1228 = vst [vmem:[%s1226 + $0x4] sm:$0xf] %v1225
      %v1229 = vld [vmem:[#allocation2] sm:$0xff]
      %v1230 = vld [vmem:[#allocation2 + $0x8] sm:$0xff]
      %v1231 = vld [vmem:[#allocation2 + $0x10] sm:$0xff]
      %v1232 = vld [vmem:[#allocation2 + $0x18] sm:$0xff]
      %v1233 = vld [vmem:[#allocation2 + $0x20] sm:$0xff]
      %v1234 = vld [vmem:[#allocation2 + $0x28] sm:$0xff]
      %v1235 = vpack.c.bf16 %v1216, %v1215
      %1236 = vmatpush.bf16.msra.mxu0 %v743
      %1237 = vmatpush.bf16.msra.mxu0 %v740
      %1238 = vmatpush.bf16.msra.mxu0 %v737
      %1239 = vmatpush.bf16.msra.mxu0 %v734
      %1240 = vmatpush.bf16.msra.mxu0 %v731
      %1241 = vmatpush.bf16.msra.mxu0 %v728
      %1242 = vmatpush.bf16.msra.mxu0 %v725
      %1243 = vmatpush.bf16.msra.mxu0 %v722
      %1244 = vmatmul.bf16.gmra.mxu0 %v1235
      %v1245 = vpop.f32.mrf.mxu0
      %v1246 = vadd.f32 0.0, %v1245
      %v1247 = vpop.f32.mrf.mxu0
      %v1248 = vadd.f32 0.0, %v1247
      %1249 = vdwg.mxu0
      %1250 = vmatpush.bf16.msra.mxu0 %v744
      %1251 = vmatpush.bf16.msra.mxu0 %v741
      %1252 = vmatpush.bf16.msra.mxu0 %v738
      %1253 = vmatpush.bf16.msra.mxu0 %v735
      %1254 = vmatpush.bf16.msra.mxu0 %v732
      %1255 = vmatpush.bf16.msra.mxu0 %v729
      %1256 = vmatpush.bf16.msra.mxu0 %v726
      %1257 = vmatpush.bf16.msra.mxu0 %v723
      %1258 = vmatmul.bf16.gmra.mxu0 %v1235
      %v1259 = vpop.f32.mrf.mxu0
      %v1260 = vadd.f32 0.0, %v1259
      %v1261 = vpop.f32.mrf.mxu0
      %v1262 = vadd.f32 0.0, %v1261
      %1263 = vdwg.mxu0
      %1264 = vmatpush.bf16.msra.mxu0 %v745
      %1265 = vmatpush.bf16.msra.mxu0 %v742
      %1266 = vmatpush.bf16.msra.mxu0 %v739
      %1267 = vmatpush.bf16.msra.mxu0 %v736
      %1268 = vmatpush.bf16.msra.mxu0 %v733
      %1269 = vmatpush.bf16.msra.mxu0 %v730
      %1270 = vmatpush.bf16.msra.mxu0 %v727
      %1271 = vmatpush.bf16.msra.mxu0 %v724
      %1272 = vmatmul.bf16.gmra.mxu0 %v1235
      %v1273 = vpop.f32.mrf.mxu0
      %v1274 = vadd.f32 0.0, %v1273
      %v1275 = vpop.f32.mrf.mxu0
      %v1276 = vadd.f32 0.0, %v1275
      %1277 = vdwg.mxu0
      %v1278 = vadd.f32 %v1229, %v1246
      %v1279 = vadd.f32 %v1232, %v1248
      %v1280 = vxor.u32 %v1278, 2147483648
      %v1281 = vxor.u32 %v1279, 2147483648
      %v1282 = vmul.f32 %v1280, 1.442695
      %v1283 = vpow.pop %v1282
      %v1284 = vmul.f32 %v1281, 1.442695
      %v1285 = vpow.pop %v1284
      %v1286 = vadd.f32 %v1283, 1.0
      %v1287 = vadd.f32 %v1285, 1.0
      %v1288 = vrcp.pop %v1286
      %v1289 = vmul.f32 %v1286, %v1288
      %v1290 = vsub.f32 1.0, %v1289
      %v1291 = vmul.f32 %v1288, %v1290
      %v1292 = vadd.f32 %v1288, %v1291
      %vm1293 = vweird.f32 %v1286
      %vm1294 = vweird.f32 %v1288
      %vm1295 = vmor %vm1293, %vm1294
      %v1296 = vsel %vm1295, %v1288, %v1292
      %v1297 = vand.u32 2147483647, %v1286
      %vm1298 = vcmp.eq.f32.partialorder %v1297, 8.507059e+37
      %v1299 = vand.u32 %v1286, 2147483648
      %v1300 = vor.u32 1.1754944e-38, %v1299
      %v1301 = vsel %vm1298, %v1300, %v1296
      %v1302 = vmul.f32 1.0, %v1301
      %v1303 = vrcp.pop %v1287
      %v1304 = vmul.f32 %v1287, %v1303
      %v1305 = vsub.f32 1.0, %v1304
      %v1306 = vmul.f32 %v1303, %v1305
      %v1307 = vadd.f32 %v1303, %v1306
      %vm1308 = vweird.f32 %v1287
      %vm1309 = vweird.f32 %v1303
      %vm1310 = vmor %vm1308, %vm1309
      %v1311 = vsel %vm1310, %v1303, %v1307
      %v1312 = vand.u32 2147483647, %v1287
      %vm1313 = vcmp.eq.f32.partialorder %v1312, 8.507059e+37
      %v1314 = vand.u32 %v1287, 2147483648
      %v1315 = vor.u32 1.1754944e-38, %v1314
      %v1316 = vsel %vm1313, %v1315, %v1311
      %v1317 = vmul.f32 1.0, %v1316
      %v1318 = vadd.f32 %v1230, %v1260
      %v1319 = vadd.f32 %v1233, %v1262
      %v1320 = vxor.u32 %v1318, 2147483648
      %v1321 = vxor.u32 %v1319, 2147483648
      %v1322 = vmul.f32 %v1320, 1.442695
      %v1323 = vpow.pop %v1322
      %v1324 = vmul.f32 %v1321, 1.442695
      %v1325 = vpow.pop %v1324
      %v1326 = vadd.f32 %v1323, 1.0
      %v1327 = vadd.f32 %v1325, 1.0
      %v1328 = vrcp.pop %v1326
      %v1329 = vmul.f32 %v1326, %v1328
      %v1330 = vsub.f32 1.0, %v1329
      %v1331 = vmul.f32 %v1328, %v1330
      %v1332 = vadd.f32 %v1328, %v1331
      %vm1333 = vweird.f32 %v1326
      %vm1334 = vweird.f32 %v1328
      %vm1335 = vmor %vm1333, %vm1334
      %v1336 = vsel %vm1335, %v1328, %v1332
      %v1337 = vand.u32 2147483647, %v1326
      %vm1338 = vcmp.eq.f32.partialorder %v1337, 8.507059e+37
      %v1339 = vand.u32 %v1326, 2147483648
      %v1340 = vor.u32 1.1754944e-38, %v1339
      %v1341 = vsel %vm1338, %v1340, %v1336
      %v1342 = vmul.f32 1.0, %v1341
      %v1343 = vrcp.pop %v1327
      %v1344 = vmul.f32 %v1327, %v1343
      %v1345 = vsub.f32 1.0, %v1344
      %v1346 = vmul.f32 %v1343, %v1345
      %v1347 = vadd.f32 %v1343, %v1346
      %vm1348 = vweird.f32 %v1327
      %vm1349 = vweird.f32 %v1343
      %vm1350 = vmor %vm1348, %vm1349
      %v1351 = vsel %vm1350, %v1343, %v1347
      %v1352 = vand.u32 2147483647, %v1327
      %vm1353 = vcmp.eq.f32.partialorder %v1352, 8.507059e+37
      %v1354 = vand.u32 %v1327, 2147483648
      %v1355 = vor.u32 1.1754944e-38, %v1354
      %v1356 = vsel %vm1353, %v1355, %v1351
      %v1357 = vmul.f32 1.0, %v1356
      %v1358 = vadd.f32 %v1274, %v630
      %v1359 = vadd.f32 %v1276, %v630
      %v1360 = vmul.f32 %v1302, %v1358
      %v1361 = vmul.f32 %v1317, %v1359
      %v1362 = vadd.f32 %v1231, %v1360
      %v1363 = vadd.f32 %v1234, %v1361
      %v1364 = vtanh.pop %v1362
      %v1365 = vtanh.pop %v1363
      %v1366 = vsub.f32 %v1215, %v1364
      %v1367 = vsub.f32 %v1216, %v1365
      %v1368 = vmul.f32 %v1342, %v1366
      %v1369 = vmul.f32 %v1357, %v1367
      %v1370 = vadd.f32 %v1364, %v1368
      %v1371 = vadd.f32 %v1365, %v1369
      %v1372 = vld [vmem:[%s263] sm:$0xf]
      %v1373 = vld [vmem:[%s263 + $0x4] sm:$0xf]
      %v1374 = vunpack.c.l.bf16 %v1372
      %v1375 = vunpack.c.l.bf16 %v1373
      %v1376 = vadd.f32 %v1370, %v1374
      %v1377 = vadd.f32 %v1371, %v1375
      %v1378 = vpack.c.bf16 %v1376, %v1376
      %v1379 = vpack.c.bf16 %v1377, %v1377
      %s1380 = scalar_lea.vmem %s276, 24
      %1381 = vst [vmem:[%s1380] sm:$0xf] %v1378
      %1382 = vst [vmem:[%s1380 + $0x4] sm:$0xf] %v1379
      %1383 = vst [vmem:[#allocation3] sm:$0xff] %v1370
      %1384 = vst [vmem:[#allocation3 + $0x8] sm:$0xff] %v1371
      %s1385 = smul.u32 4, %s21
      %s1386 = smul.u32 2, %s20
      %p1387 = scmp.lt.s32.totalorder %s1385, 7
      %s1388 = scalar_select %p1387, %s1385, 7
      %p1389 = scmp.lt.s32.totalorder %s1386, 1
      %s1390 = scalar_select %p1389, %s1386, 1
      %s1391 = smul.addr %s1388, 2
      %s1392 = sadd.s32 %s1390, %s1391
      %s1393 = smul.addr %s1392, 4
      %s1394 = scalar_lea.vmem %s5, %s1393
      // Predicated region
      $region45: #{bigru_for_srl_forward.4} parent=39 // pred_check
        %p1395 = pneg %p162
      $region46: #{bigru_for_srl_forward.4} parent=39 // pred_check_branch
        %1397 = sbr.rel (%p1395) target = $region48
      $region47: #{bigru_for_srl_forward.4} parent=39 // pred_region
        %s1398 = smul.u32 4, %s21
        %s1399 = smul.u32 2, %s20
      $region48: #{bigru_for_srl_forward.4} parent=39 // pred_fallthru
        _
    $region40: #{bigru_for_srl_forward.4} parent=5 // pred_fallthru
      _
    %p1400 = scmp.le.s32.totalorder 2, %s11
    // Predicated region
    $region49: #{bigru_for_srl_forward.4} parent=5 // pred_check
      %p1401 = pneg %p1400
    $region50: #{bigru_for_srl_forward.4} parent=5 // pred_check_branch
      %1403 = sbr.rel (%p1401) target = $region52
    $region51: #{bigru_for_srl_forward.4} parent=5 // pred_region
      %s1404 = ssub.s32 %s11, 2
      // Predicated region
      $region53: #{bigru_for_srl_forward.4} parent=51 // pred_check
        %p1405 = pneg %p168
      $region54: #{bigru_for_srl_forward.4} parent=51 // pred_check_branch
        %1407 = sbr.rel (%p1405) target = $region56
      $region55: #{bigru_for_srl_forward.4} parent=51 // pred_region
        %s1408 = smul.u32 4, %s23
        %s1409 = smul.u32 2, %s22
        %p1410 = scmp.lt.s32.totalorder %s1408, 7
        %s1411 = scalar_select %p1410, %s1408, 7
        %p1412 = scmp.lt.s32.totalorder %s1409, 1
        %s1413 = scalar_select %p1412, %s1409, 1
        %s1414 = smul.addr %s1411, 2
        %s1415 = sadd.s32 %s1413, %s1414
        %s1416 = smul.addr %s1415, 4
        %s1417 = scalar_lea.vmem %s5, %s1416
      $region56: #{bigru_for_srl_forward.4} parent=51 // pred_fallthru
        _
    $region52: #{bigru_for_srl_forward.4} parent=5 // pred_fallthru
      _
  $region6: #{bigru_for_srl_forward.4} parent=0 // loop_footer
    %s15 = sadd.s32 1, %s11
  $region7: #{bigru_for_srl_forward.4} parent=0 // loop_footer_branch
    %10 = sbr.rel target = $region3
  $region8: #{bigru_for_srl_forward.4} parent=0 // loop_exit
    _

// kernel: bigru_for_srl_forward.3
$region0: #{bigru_for_srl_forward.3}
  #allocation0 [shape = 'u32[]', space=smem, size = 0x4, offset = 0x4, fixed_abs, tag = 'smem constant byte address 0x4 - core index']
  #allocation1 [shape = 'u32[72,128]{1,0:T(1,128)}', space=vmem, size = 0x9000, scoped, tag = 'internal scratch']
  #allocation2 [shape = 'f32[4,16,384]{2,1,0:T(8,128)}', space=vmem, size = 0x18000, scoped, tag = 'scratch operand']
  #allocation3 [shape = 'f32[16,128]{1,0:T(8,128)}', space=vmem, size = 0x2000, scoped, tag = 'scratch operand']
  %s0 = inlined_call_operand.vmem [shape: bf16[8,16,128], index: 0, kind: input, shape index: {}]
  %s1 = inlined_call_operand.vmem [shape: bf16[128,384], index: 1, kind: input, shape index: {}]
  %s2 = inlined_call_operand.vmem [shape: bf16[128,384], index: 2, kind: input, shape index: {}]
  %s3 = inlined_call_operand.vmem [shape: f32[1,384], index: 3, kind: input, shape index: {}]
  %s4 = inlined_call_operand.vmem [shape: f32[1,128], index: 4, kind: input, shape index: {}]
  %s5 = inlined_call_operand.vmem [shape: bf16[8,16,128], index: 5, kind: output, shape index: {}]
  %s6 = sld [smem:[#allocation0]]
  $region57: #{bigru_for_srl_forward.3} parent=0
    _
  %s8 = ssub.s32 1, %s6
  %s9 = scalar_select 0, %s8, %s6
  loop: start=0, step=1, limit=4
  $region2: #{bigru_for_srl_forward.3} parent=0 // loop_pre_header
    _
  $region3: #{bigru_for_srl_forward.3} parent=0 // loop_header
    %s11 = sphi 0, %s15
    %p12 = scmp.ge.s32.totalorder %s11, 4
    %s18 = sphi 0, %s30
    %s19 = sphi 0, %s26
    %s20 = sphi 0, %s18
    %s21 = sphi 0, %s19
    %s22 = sphi 0, %s20
    %s23 = sphi 0, %s21
    %s35 = sphi 0, %s37
    %s38 = sphi 0, %s35
    %s39 = sphi 0, %s38
    %s55 = sphi 0, %s39
    %s59 = sphi 0, %s59
    %s61 = sphi 0, %s59
    %s62 = sphi 0, %s61
    %s76 = sphi 0, %s62
    %s80 = sphi 0, %s80
    %s82 = sphi 0, %s80
    %s83 = sphi 0, %s82
    %s97 = sphi 0, %s83
    %s101 = sphi 0, %s101
    %s103 = sphi 0, %s101
    %s104 = sphi 0, %s103
    %s118 = sphi 0, %s104
    %s122 = sphi 0, %s122
    %s124 = sphi 0, %s122
    %s125 = sphi 0, %s124
    %s139 = sphi 0, %s125
    %s147 = sphi 0, %s149
    %s150 = sphi 0, %s147
    %s151 = sphi 0, %s150
    %s167 = sphi 0, %s151
  $region4: #{bigru_for_srl_forward.3} parent=0 // loop_header_branch
    %14 = sbr.rel (%p12) target = $region8
  $region5: #{bigru_for_srl_forward.3} parent=0 // loop_body
    %s16 = ssub.s32 %s11, 1
    %s17 = ssub.s32 %s11, 2
    %s24 = sadd.s32 1, %s19
    %p25 = scmp.ge.s32.totalorder %s24, 2
    %s26 = scalar_select %p25, 0, %s24
    %s27 = sadd.s32 1, %s18
    %s28 = scalar_select %p25, %s27, %s18
    %p29 = scmp.ge.s32.totalorder %s28, 1
    %s30 = scalar_select %p29, 0, %s28
    %s31 = ssub.s32 %s19, %s26
    %s32 = ssub.s32 %s18, %s30
    %s33 = sor.u32 %s31, %s32
    %p34 = scmp.eq.s32.totalorder %s33, 0
    %s36 = sadd.s32 %s35, 1
    %s37 = scalar_select %p34, %s35, %s36
    %p40 = pneg %p34
    %p41 = scmp.eq.s32.totalorder %s11, 1
    %p42 = por %p40, %p41
    %p43 = scmp.ne.s32.totalorder %s35, %s38
    %p44 = scmp.eq.s32.totalorder %s11, 0
    %p45 = por %p43, %p44
    %p46 = scmp.ne.s32.totalorder %s35, %s38
    %p47 = scmp.eq.s32.totalorder %s16, 1
    %p48 = por %p46, %p47
    %p49 = scmp.ne.s32.totalorder %s38, %s39
    %p50 = scmp.eq.s32.totalorder %s16, 0
    %p51 = por %p49, %p50
    %p52 = scmp.ne.s32.totalorder %s38, %s39
    %p53 = scmp.eq.s32.totalorder %s17, 1
    %p54 = por %p52, %p53
    %p56 = scmp.ne.s32.totalorder %s39, %s55
    %p57 = scmp.eq.s32.totalorder %s17, 0
    %p58 = por %p56, %p57
    %s60 = sadd.s32 %s59, 1
    %p63 = scmp.eq.s32.totalorder %s11, 1
    %p64 = scmp.ne.s32.totalorder %s59, %s61
    %p65 = scmp.eq.s32.totalorder %s11, 0
    %p66 = por %p64, %p65
    %p67 = scmp.ne.s32.totalorder %s59, %s61
    %p68 = scmp.eq.s32.totalorder %s16, 1
    %p69 = por %p67, %p68
    %p70 = scmp.ne.s32.totalorder %s61, %s62
    %p71 = scmp.eq.s32.totalorder %s16, 0
    %p72 = por %p70, %p71
    %p73 = scmp.ne.s32.totalorder %s61, %s62
    %p74 = scmp.eq.s32.totalorder %s17, 1
    %p75 = por %p73, %p74
    %p77 = scmp.ne.s32.totalorder %s62, %s76
    %p78 = scmp.eq.s32.totalorder %s17, 0
    %p79 = por %p77, %p78
    %s81 = sadd.s32 %s80, 1
    %p84 = scmp.eq.s32.totalorder %s11, 1
    %p85 = scmp.ne.s32.totalorder %s80, %s82
    %p86 = scmp.eq.s32.totalorder %s11, 0
    %p87 = por %p85, %p86
    %p88 = scmp.ne.s32.totalorder %s80, %s82
    %p89 = scmp.eq.s32.totalorder %s16, 1
    %p90 = por %p88, %p89
    %p91 = scmp.ne.s32.totalorder %s82, %s83
    %p92 = scmp.eq.s32.totalorder %s16, 0
    %p93 = por %p91, %p92
    %p94 = scmp.ne.s32.totalorder %s82, %s83
    %p95 = scmp.eq.s32.totalorder %s17, 1
    %p96 = por %p94, %p95
    %p98 = scmp.ne.s32.totalorder %s83, %s97
    %p99 = scmp.eq.s32.totalorder %s17, 0
    %p100 = por %p98, %p99
    %s102 = sadd.s32 %s101, 1
    %p105 = scmp.eq.s32.totalorder %s11, 1
    %p106 = scmp.ne.s32.totalorder %s101, %s103
    %p107 = scmp.eq.s32.totalorder %s11, 0
    %p108 = por %p106, %p107
    %p109 = scmp.ne.s32.totalorder %s101, %s103
    %p110 = scmp.eq.s32.totalorder %s16, 1
    %p111 = por %p109, %p110
    %p112 = scmp.ne.s32.totalorder %s103, %s104
    %p113 = scmp.eq.s32.totalorder %s16, 0
    %p114 = por %p112, %p113
    %p115 = scmp.ne.s32.totalorder %s103, %s104
    %p116 = scmp.eq.s32.totalorder %s17, 1
    %p117 = por %p115, %p116
    %p119 = scmp.ne.s32.totalorder %s104, %s118
    %p120 = scmp.eq.s32.totalorder %s17, 0
    %p121 = por %p119, %p120
    %s123 = sadd.s32 %s122, 1
    %p126 = scmp.eq.s32.totalorder %s11, 1
    %p127 = scmp.ne.s32.totalorder %s122, %s124
    %p128 = scmp.eq.s32.totalorder %s11, 0
    %p129 = por %p127, %p128
    %p130 = scmp.ne.s32.totalorder %s122, %s124
    %p131 = scmp.eq.s32.totalorder %s16, 1
    %p132 = por %p130, %p131
    %p133 = scmp.ne.s32.totalorder %s124, %s125
    %p134 = scmp.eq.s32.totalorder %s16, 0
    %p135 = por %p133, %p134
    %p136 = scmp.ne.s32.totalorder %s124, %s125
    %p137 = scmp.eq.s32.totalorder %s17, 1
    %p138 = por %p136, %p137
    %p140 = scmp.ne.s32.totalorder %s125, %s139
    %p141 = scmp.eq.s32.totalorder %s17, 0
    %p142 = por %p140, %p141
    %s143 = ssub.s32 %s19, %s26
    %s144 = ssub.s32 %s18, %s30
    %s145 = sor.u32 %s143, %s144
    %p146 = scmp.eq.s32.totalorder %s145, 0
    %s148 = sadd.s32 %s147, 1
    %s149 = scalar_select %p146, %s147, %s148
    %p152 = pneg %p146
    %p153 = scmp.eq.s32.totalorder %s11, 1
    %p154 = por %p152, %p153
    %p155 = scmp.ne.s32.totalorder %s147, %s150
    %p156 = scmp.eq.s32.totalorder %s11, 0
    %p157 = por %p155, %p156
    %p158 = scmp.ne.s32.totalorder %s147, %s150
    %p159 = scmp.eq.s32.totalorder %s16, 1
    %p160 = por %p158, %p159
    %p161 = scmp.ne.s32.totalorder %s150, %s151
    %p162 = scmp.eq.s32.totalorder %s16, 0
    %p163 = por %p161, %p162
    %p164 = scmp.ne.s32.totalorder %s150, %s151
    %p165 = scmp.eq.s32.totalorder %s17, 1
    %p166 = por %p164, %p165
    %p168 = scmp.ne.s32.totalorder %s151, %s167
    %p169 = scmp.eq.s32.totalorder %s17, 0
    %p170 = por %p168, %p169
    %p171 = scmp.le.s32.totalorder 1, %s11
    %p172 = scmp.lt.s32.totalorder %s11, 3
    %p173 = pnand %p171, %p172
    %p174 = pneg %p173
    // Predicated region
    $region9: #{bigru_for_srl_forward.3} parent=5 // pred_check
      _
    $region10: #{bigru_for_srl_forward.3} parent=5 // pred_check_branch
      %176 = sbr.rel (%p173) target = $region12
    $region11: #{bigru_for_srl_forward.3} parent=5 // pred_region
      %s177 = ssub.s32 %s11, 1
      // Predicated region
      $region13: #{bigru_for_srl_forward.3} parent=11 // pred_check
        %p178 = pneg %p72
      $region14: #{bigru_for_srl_forward.3} parent=11 // pred_check_branch
        %180 = sbr.rel (%p178) target = $region16
      $region15: #{bigru_for_srl_forward.3} parent=11 // pred_region
        _
      $region16: #{bigru_for_srl_forward.3} parent=11 // pred_fallthru
        _
      // Predicated region
      $region17: #{bigru_for_srl_forward.3} parent=11 // pred_check
        %p181 = pneg %p93
      $region18: #{bigru_for_srl_forward.3} parent=11 // pred_check_branch
        %183 = sbr.rel (%p181) target = $region20
      $region19: #{bigru_for_srl_forward.3} parent=11 // pred_region
        _
      $region20: #{bigru_for_srl_forward.3} parent=11 // pred_fallthru
        _
      // Predicated region
      $region21: #{bigru_for_srl_forward.3} parent=11 // pred_check
        %p184 = pneg %p114
      $region22: #{bigru_for_srl_forward.3} parent=11 // pred_check_branch
        %186 = sbr.rel (%p184) target = $region24
      $region23: #{bigru_for_srl_forward.3} parent=11 // pred_region
        _
      $region24: #{bigru_for_srl_forward.3} parent=11 // pred_fallthru
        _
      // Predicated region
      $region25: #{bigru_for_srl_forward.3} parent=11 // pred_check
        %p187 = pneg %p135
      $region26: #{bigru_for_srl_forward.3} parent=11 // pred_check_branch
        %189 = sbr.rel (%p187) target = $region28
      $region27: #{bigru_for_srl_forward.3} parent=11 // pred_region
        _
      $region28: #{bigru_for_srl_forward.3} parent=11 // pred_fallthru
        _
    $region12: #{bigru_for_srl_forward.3} parent=5 // pred_fallthru
      _
    %p190 = scmp.lt.s32.totalorder %s11, 2
    // Predicated region
    $region29: #{bigru_for_srl_forward.3} parent=5 // pred_check
      %p191 = pneg %p190
    $region30: #{bigru_for_srl_forward.3} parent=5 // pred_check_branch
      %193 = sbr.rel (%p191) target = $region32
    $region31: #{bigru_for_srl_forward.3} parent=5 // pred_region
      // Predicated region
      $region33: #{bigru_for_srl_forward.3} parent=31 // pred_check
        %p194 = pneg %p45
      $region34: #{bigru_for_srl_forward.3} parent=31 // pred_check_branch
        %196 = sbr.rel (%p194) target = $region36
      $region35: #{bigru_for_srl_forward.3} parent=31 // pred_region
        %s197 = smul.u32 4, %s19
        %s198 = smul.u32 2, %s18
        %p199 = scmp.lt.s32.totalorder %s197, 7
        %s200 = scalar_select %p199, %s197, 7
        %p201 = scmp.lt.s32.totalorder %s198, 1
        %s202 = scalar_select %p201, %s198, 1
        %s203 = smul.addr %s200, 2
        %s204 = sadd.s32 %s202, %s203
        %s205 = smul.addr %s204, 4
        %s206 = scalar_lea.vmem %s0, %s205
        %s207 = smul.u32 4, %s19
        %s208 = smul.u32 2, %s18
      $region36: #{bigru_for_srl_forward.3} parent=31 // pred_fallthru
        _
    $region32: #{bigru_for_srl_forward.3} parent=5 // pred_fallthru
      _
    %p209 = scmp.le.s32.totalorder 1, %s11
    %p210 = scmp.lt.s32.totalorder %s11, 3
    %p211 = pnand %p209, %p210
    %p212 = pneg %p211
    // Predicated region
    $region37: #{bigru_for_srl_forward.3} parent=5 // pred_check
      _
    $region38: #{bigru_for_srl_forward.3} parent=5 // pred_check_branch
      %214 = sbr.rel (%p211) target = $region40
    $region39: #{bigru_for_srl_forward.3} parent=5 // pred_region
      %s215 = ssub.s32 %s11, 1
      %s216 = smul.u32 4, %s21
      %s217 = smul.u32 2, %s20
      %p218 = scmp.lt.s32.totalorder %s216, 7
      %s219 = scalar_select %p218, %s216, 7
      %p220 = scmp.lt.s32.totalorder %s217, 1
      %s221 = scalar_select %p220, %s217, 1
      %s222 = smul.addr %s219, 2
      %s223 = sadd.s32 %s221, %s222
      %s224 = smul.addr %s223, 4
      %s225 = scalar_lea.vmem %s0, %s224
      %p226 = pneg %p51
      %p227 = pneg %p48
      %p228 = pneg %p72
      %p229 = pneg %p69
      %p230 = pneg %p93
      %p231 = pneg %p90
      %p232 = pneg %p114
      %p233 = pneg %p111
      %p234 = pneg %p135
      %p235 = pneg %p132
      %p236 = pneg %p163
      %p237 = pneg %p160
      %s238 = smul.u32 4, %s21
      %s239 = smul.u32 2, %s20
      %p240 = scmp.lt.s32.totalorder %s238, 7
      %s241 = scalar_select %p240, %s238, 7
      %p242 = scmp.lt.s32.totalorder %s239, 1
      %s243 = scalar_select %p242, %s239, 1
      %s244 = smul.addr %s241, 2
      %s245 = sadd.s32 %s243, %s244
      %s246 = smul.addr %s245, 4
      %s247 = scalar_lea.vmem %s5, %s246
      %s248 = smul.u32 4, %s21
      %s249 = smul.u32 2, %s20
      %p250 = scmp.lt.s32.totalorder %s248, 7
      %s251 = scalar_select %p250, %s248, 7
      %p252 = scmp.lt.s32.totalorder %s249, 1
      %s253 = scalar_select %p252, %s249, 1
      %s254 = smul.addr %s251, 2
      %s255 = sadd.s32 %s253, %s254
      %s256 = smul.addr %s255, 4
      %s257 = scalar_lea.vmem %s0, %s256
      %s258 = smul.u32 4, %s21
      %s259 = smul.u32 2, %s20
      %s260 = smul.u32 4, %s21
      %s261 = smul.u32 2, %s20
      %p262 = scmp.lt.s32.totalorder %s260, 7
      %s263 = scalar_select %p262, %s260, 7
      %p264 = scmp.lt.s32.totalorder %s261, 1
      %s265 = scalar_select %p264, %s261, 1
      %s266 = smul.addr %s263, 2
      %s267 = sadd.s32 %s265, %s266
      %s268 = smul.addr %s267, 4
      %s269 = scalar_lea.vmem %s5, %s268
      %s270 = smul.u32 4, %s21
      %s271 = smul.u32 2, %s20
      %p272 = scmp.eq.s32.totalorder %s21, 0
      // Predicated region
      $region41: #{bigru_for_srl_forward.3} parent=39 // pred_check
        %p273 = pneg %p272
      $region42: #{bigru_for_srl_forward.3} parent=39 // pred_check_branch
        %275 = sbr.rel (%p273) target = $region44
      $region43: #{bigru_for_srl_forward.3} parent=39 // pred_region
        %276 = vst [vmem:[#allocation3] sm:$0xff] 0.0
        %277 = vst [vmem:[#allocation3 + $0x8] sm:$0xff] 0.0
      $region44: #{bigru_for_srl_forward.3} parent=39 // pred_fallthru
        _
      %v278 = vld [vmem:[%s257] sm:$0xf]
      %v279 = vld [vmem:[%s257 + $0x4] sm:$0xf]
      %v280 = vld [vmem:[%s257 + $0x8] sm:$0xf]
      %v281 = vld [vmem:[%s257 + $0xc] sm:$0xf]
      %v282 = vld [vmem:[%s257 + $0x10] sm:$0xf]
      %v283 = vld [vmem:[%s257 + $0x14] sm:$0xf]
      %v284 = vld [vmem:[%s257 + $0x18] sm:$0xf]
      %v285 = vld [vmem:[%s257 + $0x1c] sm:$0xf]
      %v286 = vld [vmem:[%s1] sm:$0xff]
      %v287 = vld [vmem:[%s1 + $0x8] sm:$0xf]
      %v288 = vld [vmem:[%s1 + $0xc] sm:$0xff]
      %v289 = vld [vmem:[%s1 + $0x14] sm:$0xf]
      %v290 = vld [vmem:[%s1 + $0x18] sm:$0xff]
      %v291 = vld [vmem:[%s1 + $0x20] sm:$0xf]
      %v292 = vld [vmem:[%s1 + $0x24] sm:$0xff]
      %v293 = vld [vmem:[%s1 + $0x2c] sm:$0xf]
      %v294 = vld [vmem:[%s1 + $0x30] sm:$0xff]
      %v295 = vld [vmem:[%s1 + $0x38] sm:$0xf]
      %v296 = vld [vmem:[%s1 + $0x3c] sm:$0xff]
      %v297 = vld [vmem:[%s1 + $0x44] sm:$0xf]
      %v298 = vld [vmem:[%s1 + $0x48] sm:$0xff]
      %v299 = vld [vmem:[%s1 + $0x50] sm:$0xf]
      %v300 = vld [vmem:[%s1 + $0x54] sm:$0xff]
      %v301 = vld [vmem:[%s1 + $0x5c] sm:$0xf]
      %v302 = vld [vmem:[%s1 + $0x60] sm:$0xff]
      %v303 = vld [vmem:[%s1 + $0x68] sm:$0xf]
      %v304 = vld [vmem:[%s1 + $0x6c] sm:$0xff]
      %v305 = vld [vmem:[%s1 + $0x74] sm:$0xf]
      %v306 = vld [vmem:[%s1 + $0x78] sm:$0xff]
      %v307 = vld [vmem:[%s1 + $0x80] sm:$0xf]
      %v308 = vld [vmem:[%s1 + $0x84] sm:$0xff]
      %v309 = vld [vmem:[%s1 + $0x8c] sm:$0xf]
      %v310 = vld [vmem:[%s1 + $0x90] sm:$0xff]
      %v311 = vld [vmem:[%s1 + $0x98] sm:$0xf]
      %v312 = vld [vmem:[%s1 + $0x9c] sm:$0xff]
      %v313 = vld [vmem:[%s1 + $0xa4] sm:$0xf]
      %v314 = vld [vmem:[%s1 + $0xa8] sm:$0xff]
      %v315 = vld [vmem:[%s1 + $0xb0] sm:$0xf]
      %v316 = vld [vmem:[%s1 + $0xb4] sm:$0xff]
      %v317 = vld [vmem:[%s1 + $0xbc] sm:$0xf]
      %v318 = vld [vmem:[%s3] sm:$0x7]
      %v320 = vperm.slane %v318, 0
      %v321 = vperm.slane %v318, 1
      %v322 = vperm.slane %v318, 2
      %v334 = vunpack.c.l.b16 %v278
      %v335 = vunpack.c.l.b16 %v279
      %v336 = vunpack.c.l.b16 %v280
      %v337 = vunpack.c.l.b16 %v281
      %v338 = vunpack.c.l.b16 %v282
      %v339 = vunpack.c.l.b16 %v283
      %v340 = vunpack.c.l.b16 %v284
      %v341 = vunpack.c.l.b16 %v285
      %v342 = vpack.c.b16 %v335, %v334
      %v343 = vpack.c.b16 %v337, %v336
      %v344 = vpack.c.b16 %v339, %v338
      %v345 = vpack.c.b16 %v341, %v340
      %v382 = vunpack.c.l.b16 %v286
      %v383 = vunpack.c.h.b16 %v286
      %v384 = vunpack.c.l.b16 %v287
      %v385 = vunpack.c.l.b16 %v288
      %v386 = vunpack.c.h.b16 %v288
      %v387 = vunpack.c.l.b16 %v289
      %v388 = vunpack.c.l.b16 %v290
      %v389 = vunpack.c.h.b16 %v290
      %v390 = vunpack.c.l.b16 %v291
      %v391 = vunpack.c.l.b16 %v292
      %v392 = vunpack.c.h.b16 %v292
      %v393 = vunpack.c.l.b16 %v293
      %v394 = vunpack.c.l.b16 %v294
      %v395 = vunpack.c.h.b16 %v294
      %v396 = vunpack.c.l.b16 %v295
      %v397 = vunpack.c.l.b16 %v296
      %v398 = vunpack.c.h.b16 %v296
      %v399 = vunpack.c.l.b16 %v297
      %v400 = vunpack.c.l.b16 %v298
      %v401 = vunpack.c.h.b16 %v298
      %v402 = vunpack.c.l.b16 %v299
      %v403 = vunpack.c.l.b16 %v300
      %v404 = vunpack.c.h.b16 %v300
      %v405 = vunpack.c.l.b16 %v301
      %v406 = vunpack.c.l.b16 %v302
      %v407 = vunpack.c.h.b16 %v302
      %v408 = vunpack.c.l.b16 %v303
      %v409 = vunpack.c.l.b16 %v304
      %v410 = vunpack.c.h.b16 %v304
      %v411 = vunpack.c.l.b16 %v305
      %v412 = vunpack.c.l.b16 %v306
      %v413 = vunpack.c.h.b16 %v306
      %v414 = vunpack.c.l.b16 %v307
      %v415 = vunpack.c.l.b16 %v308
      %v416 = vunpack.c.h.b16 %v308
      %v417 = vunpack.c.l.b16 %v309
      %v418 = vunpack.c.l.b16 %v310
      %v419 = vunpack.c.h.b16 %v310
      %v420 = vunpack.c.l.b16 %v311
      %v421 = vunpack.c.l.b16 %v312
      %v422 = vunpack.c.h.b16 %v312
      %v423 = vunpack.c.l.b16 %v313
      %v424 = vunpack.c.l.b16 %v314
      %v425 = vunpack.c.h.b16 %v314
      %v426 = vunpack.c.l.b16 %v315
      %v427 = vunpack.c.l.b16 %v316
      %v428 = vunpack.c.h.b16 %v316
      %v429 = vunpack.c.l.b16 %v317
      %v430 = vpack.c.b16 %v385, %v382
      %v431 = vpack.c.b16 %v386, %v383
      %v432 = vpack.c.b16 %v387, %v384
      %v433 = vpack.c.b16 %v391, %v388
      %v434 = vpack.c.b16 %v392, %v389
      %v435 = vpack.c.b16 %v393, %v390
      %v436 = vpack.c.b16 %v397, %v394
      %v437 = vpack.c.b16 %v398, %v395
      %v438 = vpack.c.b16 %v399, %v396
      %v439 = vpack.c.b16 %v403, %v400
      %v440 = vpack.c.b16 %v404, %v401
      %v441 = vpack.c.b16 %v405, %v402
      %v442 = vpack.c.b16 %v409, %v406
      %v443 = vpack.c.b16 %v410, %v407
      %v444 = vpack.c.b16 %v411, %v408
      %v445 = vpack.c.b16 %v415, %v412
      %v446 = vpack.c.b16 %v416, %v413
      %v447 = vpack.c.b16 %v417, %v414
      %v448 = vpack.c.b16 %v421, %v418
      %v449 = vpack.c.b16 %v422, %v419
      %v450 = vpack.c.b16 %v423, %v420
      %v451 = vpack.c.b16 %v427, %v424
      %v452 = vpack.c.b16 %v428, %v425
      %v453 = vpack.c.b16 %v429, %v426
      %478 = vmatpush.bf16.msra.mxu0 %v451
      %479 = vmatpush.bf16.msra.mxu0 %v448
      %480 = vmatpush.bf16.msra.mxu0 %v445
      %481 = vmatpush.bf16.msra.mxu0 %v442
      %482 = vmatpush.bf16.msra.mxu0 %v439
      %483 = vmatpush.bf16.msra.mxu0 %v436
      %484 = vmatpush.bf16.msra.mxu0 %v433
      %485 = vmatpush.bf16.msra.mxu0 %v430
      %486 = vmatmul.bf16.gmra.mxu0 %v342
      %v487 = vpop.f32.mrf.mxu0
      %v488 = vadd.f32 %v320, %v487
      %v489 = vpop.f32.mrf.mxu0
      %v490 = vadd.f32 %v320, %v489
      %491 = vmatmul.bf16.gmra.mxu0 %v343
      %v492 = vpop.f32.mrf.mxu0
      %v493 = vadd.f32 %v320, %v492
      %v494 = vpop.f32.mrf.mxu0
      %v495 = vadd.f32 %v320, %v494
      %496 = vmatmul.bf16.gmra.mxu0 %v344
      %v497 = vpop.f32.mrf.mxu0
      %v498 = vadd.f32 %v320, %v497
      %v499 = vpop.f32.mrf.mxu0
      %v500 = vadd.f32 %v320, %v499
      %501 = vmatmul.bf16.gmra.mxu0 %v345
      %v502 = vpop.f32.mrf.mxu0
      %v503 = vadd.f32 %v320, %v502
      %v504 = vpop.f32.mrf.mxu0
      %v505 = vadd.f32 %v320, %v504
      %506 = vdwg.mxu0
      %507 = vmatpush.bf16.msra.mxu0 %v452
      %508 = vmatpush.bf16.msra.mxu0 %v449
      %509 = vmatpush.bf16.msra.mxu0 %v446
      %510 = vmatpush.bf16.msra.mxu0 %v443
      %511 = vmatpush.bf16.msra.mxu0 %v440
      %512 = vmatpush.bf16.msra.mxu0 %v437
      %513 = vmatpush.bf16.msra.mxu0 %v434
      %514 = vmatpush.bf16.msra.mxu0 %v431
      %515 = vmatmul.bf16.gmra.mxu0 %v342
      %v516 = vpop.f32.mrf.mxu0
      %v517 = vadd.f32 %v321, %v516
      %v518 = vpop.f32.mrf.mxu0
      %v519 = vadd.f32 %v321, %v518
      %520 = vmatmul.bf16.gmra.mxu0 %v343
      %v521 = vpop.f32.mrf.mxu0
      %v522 = vadd.f32 %v321, %v521
      %v523 = vpop.f32.mrf.mxu0
      %v524 = vadd.f32 %v321, %v523
      %525 = vmatmul.bf16.gmra.mxu0 %v344
      %v526 = vpop.f32.mrf.mxu0
      %v527 = vadd.f32 %v321, %v526
      %v528 = vpop.f32.mrf.mxu0
      %v529 = vadd.f32 %v321, %v528
      %530 = vmatmul.bf16.gmra.mxu0 %v345
      %v531 = vpop.f32.mrf.mxu0
      %v532 = vadd.f32 %v321, %v531
      %v533 = vpop.f32.mrf.mxu0
      %v534 = vadd.f32 %v321, %v533
      %535 = vdwg.mxu0
      %536 = vmatpush.bf16.msra.mxu0 %v453
      %537 = vmatpush.bf16.msra.mxu0 %v450
      %538 = vmatpush.bf16.msra.mxu0 %v447
      %539 = vmatpush.bf16.msra.mxu0 %v444
      %540 = vmatpush.bf16.msra.mxu0 %v441
      %541 = vmatpush.bf16.msra.mxu0 %v438
      %542 = vmatpush.bf16.msra.mxu0 %v435
      %543 = vmatpush.bf16.msra.mxu0 %v432
      %544 = vmatmul.bf16.gmra.mxu0 %v342
      %v545 = vpop.f32.mrf.mxu0
      %v546 = vadd.f32 %v322, %v545
      %v547 = vpop.f32.mrf.mxu0
      %v548 = vadd.f32 %v322, %v547
      %549 = vmatmul.bf16.gmra.mxu0 %v343
      %v550 = vpop.f32.mrf.mxu0
      %v551 = vadd.f32 %v322, %v550
      %v552 = vpop.f32.mrf.mxu0
      %v553 = vadd.f32 %v322, %v552
      %554 = vmatmul.bf16.gmra.mxu0 %v344
      %v555 = vpop.f32.mrf.mxu0
      %v556 = vadd.f32 %v322, %v555
      %v557 = vpop.f32.mrf.mxu0
      %v558 = vadd.f32 %v322, %v557
      %559 = vmatmul.bf16.gmra.mxu0 %v345
      %v560 = vpop.f32.mrf.mxu0
      %v561 = vadd.f32 %v322, %v560
      %v562 = vpop.f32.mrf.mxu0
      %v563 = vadd.f32 %v322, %v562
      %564 = vdwg.mxu0
      %565 = vst [vmem:[#allocation2] sm:$0xff] %v488
      %566 = vst [vmem:[#allocation2 + $0x8] sm:$0xff] %v517
      %567 = vst [vmem:[#allocation2 + $0x10] sm:$0xff] %v546
      %568 = vst [vmem:[#allocation2 + $0x18] sm:$0xff] %v490
      %569 = vst [vmem:[#allocation2 + $0x20] sm:$0xff] %v519
      %570 = vst [vmem:[#allocation2 + $0x28] sm:$0xff] %v548
      %571 = vst [vmem:[#allocation2 + $0x30] sm:$0xff] %v493
      %572 = vst [vmem:[#allocation2 + $0x38] sm:$0xff] %v522
      %573 = vst [vmem:[#allocation2 + $0x40] sm:$0xff] %v551
      %574 = vst [vmem:[#allocation2 + $0x48] sm:$0xff] %v495
      %575 = vst [vmem:[#allocation2 + $0x50] sm:$0xff] %v524
      %576 = vst [vmem:[#allocation2 + $0x58] sm:$0xff] %v553
      %577 = vst [vmem:[#allocation2 + $0x60] sm:$0xff] %v498
      %578 = vst [vmem:[#allocation2 + $0x68] sm:$0xff] %v527
      %579 = vst [vmem:[#allocation2 + $0x70] sm:$0xff] %v556
      %580 = vst [vmem:[#allocation2 + $0x78] sm:$0xff] %v500
      %581 = vst [vmem:[#allocation2 + $0x80] sm:$0xff] %v529
      %582 = vst [vmem:[#allocation2 + $0x88] sm:$0xff] %v558
      %583 = vst [vmem:[#allocation2 + $0x90] sm:$0xff] %v503
      %584 = vst [vmem:[#allocation2 + $0x98] sm:$0xff] %v532
      %585 = vst [vmem:[#allocation2 + $0xa0] sm:$0xff] %v561
      %586 = vst [vmem:[#allocation2 + $0xa8] sm:$0xff] %v505
      %587 = vst [vmem:[#allocation2 + $0xb0] sm:$0xff] %v534
      %588 = vst [vmem:[#allocation2 + $0xb8] sm:$0xff] %v563
      %v589 = vld [vmem:[%s2] sm:$0xff]
      %v590 = vld [vmem:[%s2 + $0x8] sm:$0xf]
      %v591 = vld [vmem:[%s2 + $0xc] sm:$0xff]
      %v592 = vld [vmem:[%s2 + $0x14] sm:$0xf]
      %v593 = vld [vmem:[%s2 + $0x18] sm:$0xff]
      %v594 = vld [vmem:[%s2 + $0x20] sm:$0xf]
      %v595 = vld [vmem:[%s2 + $0x24] sm:$0xff]
      %v596 = vld [vmem:[%s2 + $0x2c] sm:$0xf]
      %v597 = vld [vmem:[%s2 + $0x30] sm:$0xff]
      %v598 = vld [vmem:[%s2 + $0x38] sm:$0xf]
      %v599 = vld [vmem:[%s2 + $0x3c] sm:$0xff]
      %v600 = vld [vmem:[%s2 + $0x44] sm:$0xf]
      %v601 = vld [vmem:[%s2 + $0x48] sm:$0xff]
      %v602 = vld [vmem:[%s2 + $0x50] sm:$0xf]
      %v603 = vld [vmem:[%s2 + $0x54] sm:$0xff]
      %v604 = vld [vmem:[%s2 + $0x5c] sm:$0xf]
      %v605 = vld [vmem:[%s2 + $0x60] sm:$0xff]
      %v606 = vld [vmem:[%s2 + $0x68] sm:$0xf]
      %v607 = vld [vmem:[%s2 + $0x6c] sm:$0xff]
      %v608 = vld [vmem:[%s2 + $0x74] sm:$0xf]
      %v609 = vld [vmem:[%s2 + $0x78] sm:$0xff]
      %v610 = vld [vmem:[%s2 + $0x80] sm:$0xf]
      %v611 = vld [vmem:[%s2 + $0x84] sm:$0xff]
      %v612 = vld [vmem:[%s2 + $0x8c] sm:$0xf]
      %v613 = vld [vmem:[%s2 + $0x90] sm:$0xff]
      %v614 = vld [vmem:[%s2 + $0x98] sm:$0xf]
      %v615 = vld [vmem:[%s2 + $0x9c] sm:$0xff]
      %v616 = vld [vmem:[%s2 + $0xa4] sm:$0xf]
      %v617 = vld [vmem:[%s2 + $0xa8] sm:$0xff]
      %v618 = vld [vmem:[%s2 + $0xb0] sm:$0xf]
      %v619 = vld [vmem:[%s2 + $0xb4] sm:$0xff]
      %v620 = vld [vmem:[%s2 + $0xbc] sm:$0xf]
      %v621 = vld [vmem:[%s4] sm:$0x1]
      %v623 = vperm.slane %v621, 0
      %v625 = vld [vmem:[#allocation3] sm:$0xff]
      %v626 = vld [vmem:[#allocation3 + $0x8] sm:$0xff]
      %v627 = vld [vmem:[#allocation2] sm:$0xff]
      %v628 = vld [vmem:[#allocation2 + $0x8] sm:$0xff]
      %v629 = vld [vmem:[#allocation2 + $0x10] sm:$0xff]
      %v630 = vld [vmem:[#allocation2 + $0x18] sm:$0xff]
      %v631 = vld [vmem:[#allocation2 + $0x20] sm:$0xff]
      %v632 = vld [vmem:[#allocation2 + $0x28] sm:$0xff]
      %v633 = vpack.c.bf16 %v626, %v625
      %v666 = vunpack.c.l.b16 %v589
      %v667 = vunpack.c.h.b16 %v589
      %v668 = vunpack.c.l.b16 %v590
      %v669 = vunpack.c.l.b16 %v591
      %v670 = vunpack.c.h.b16 %v591
      %v671 = vunpack.c.l.b16 %v592
      %v672 = vunpack.c.l.b16 %v593
      %v673 = vunpack.c.h.b16 %v593
      %v674 = vunpack.c.l.b16 %v594
      %v675 = vunpack.c.l.b16 %v595
      %v676 = vunpack.c.h.b16 %v595
      %v677 = vunpack.c.l.b16 %v596
      %v678 = vunpack.c.l.b16 %v597
      %v679 = vunpack.c.h.b16 %v597
      %v680 = vunpack.c.l.b16 %v598
      %v681 = vunpack.c.l.b16 %v599
      %v682 = vunpack.c.h.b16 %v599
      %v683 = vunpack.c.l.b16 %v600
      %v684 = vunpack.c.l.b16 %v601
      %v685 = vunpack.c.h.b16 %v601
      %v686 = vunpack.c.l.b16 %v602
      %v687 = vunpack.c.l.b16 %v603
      %v688 = vunpack.c.h.b16 %v603
      %v689 = vunpack.c.l.b16 %v604
      %v690 = vunpack.c.l.b16 %v605
      %v691 = vunpack.c.h.b16 %v605
      %v692 = vunpack.c.l.b16 %v606
      %v693 = vunpack.c.l.b16 %v607
      %v694 = vunpack.c.h.b16 %v607
      %v695 = vunpack.c.l.b16 %v608
      %v696 = vunpack.c.l.b16 %v609
      %v697 = vunpack.c.h.b16 %v609
      %v698 = vunpack.c.l.b16 %v610
      %v699 = vunpack.c.l.b16 %v611
      %v700 = vunpack.c.h.b16 %v611
      %v701 = vunpack.c.l.b16 %v612
      %v702 = vunpack.c.l.b16 %v613
      %v703 = vunpack.c.h.b16 %v613
      %v704 = vunpack.c.l.b16 %v614
      %v705 = vunpack.c.l.b16 %v615
      %v706 = vunpack.c.h.b16 %v615
      %v707 = vunpack.c.l.b16 %v616
      %v708 = vunpack.c.l.b16 %v617
      %v709 = vunpack.c.h.b16 %v617
      %v710 = vunpack.c.l.b16 %v618
      %v711 = vunpack.c.l.b16 %v619
      %v712 = vunpack.c.h.b16 %v619
      %v713 = vunpack.c.l.b16 %v620
      %v714 = vpack.c.b16 %v669, %v666
      %v715 = vpack.c.b16 %v670, %v667
      %v716 = vpack.c.b16 %v671, %v668
      %v717 = vpack.c.b16 %v675, %v672
      %v718 = vpack.c.b16 %v676, %v673
      %v719 = vpack.c.b16 %v677, %v674
      %v720 = vpack.c.b16 %v681, %v678
      %v721 = vpack.c.b16 %v682, %v679
      %v722 = vpack.c.b16 %v683, %v680
      %v723 = vpack.c.b16 %v687, %v684
      %v724 = vpack.c.b16 %v688, %v685
      %v725 = vpack.c.b16 %v689, %v686
      %v726 = vpack.c.b16 %v693, %v690
      %v727 = vpack.c.b16 %v694, %v691
      %v728 = vpack.c.b16 %v695, %v692
      %v729 = vpack.c.b16 %v699, %v696
      %v730 = vpack.c.b16 %v700, %v697
      %v731 = vpack.c.b16 %v701, %v698
      %v732 = vpack.c.b16 %v705, %v702
      %v733 = vpack.c.b16 %v706, %v703
      %v734 = vpack.c.b16 %v707, %v704
      %v735 = vpack.c.b16 %v711, %v708
      %v736 = vpack.c.b16 %v712, %v709
      %v737 = vpack.c.b16 %v713, %v710
      %762 = vmatpush.bf16.msra.mxu0 %v735
      %763 = vmatpush.bf16.msra.mxu0 %v732
      %764 = vmatpush.bf16.msra.mxu0 %v729
      %765 = vmatpush.bf16.msra.mxu0 %v726
      %766 = vmatpush.bf16.msra.mxu0 %v723
      %767 = vmatpush.bf16.msra.mxu0 %v720
      %768 = vmatpush.bf16.msra.mxu0 %v717
      %769 = vmatpush.bf16.msra.mxu0 %v714
      %770 = vmatmul.bf16.gmra.mxu0 %v633
      %v771 = vpop.f32.mrf.mxu0
      %v772 = vadd.f32 0.0, %v771
      %v773 = vpop.f32.mrf.mxu0
      %v774 = vadd.f32 0.0, %v773
      %775 = vdwg.mxu0
      %776 = vmatpush.bf16.msra.mxu0 %v736
      %777 = vmatpush.bf16.msra.mxu0 %v733
      %778 = vmatpush.bf16.msra.mxu0 %v730
      %779 = vmatpush.bf16.msra.mxu0 %v727
      %780 = vmatpush.bf16.msra.mxu0 %v724
      %781 = vmatpush.bf16.msra.mxu0 %v721
      %782 = vmatpush.bf16.msra.mxu0 %v718
      %783 = vmatpush.bf16.msra.mxu0 %v715
      %784 = vmatmul.bf16.gmra.mxu0 %v633
      %v785 = vpop.f32.mrf.mxu0
      %v786 = vadd.f32 0.0, %v785
      %v787 = vpop.f32.mrf.mxu0
      %v788 = vadd.f32 0.0, %v787
      %789 = vdwg.mxu0
      %790 = vmatpush.bf16.msra.mxu0 %v737
      %791 = vmatpush.bf16.msra.mxu0 %v734
      %792 = vmatpush.bf16.msra.mxu0 %v731
      %793 = vmatpush.bf16.msra.mxu0 %v728
      %794 = vmatpush.bf16.msra.mxu0 %v725
      %795 = vmatpush.bf16.msra.mxu0 %v722
      %796 = vmatpush.bf16.msra.mxu0 %v719
      %797 = vmatpush.bf16.msra.mxu0 %v716
      %798 = vmatmul.bf16.gmra.mxu0 %v633
      %v799 = vpop.f32.mrf.mxu0
      %v800 = vadd.f32 0.0, %v799
      %v801 = vpop.f32.mrf.mxu0
      %v802 = vadd.f32 0.0, %v801
      %803 = vdwg.mxu0
      %v804 = vadd.f32 %v627, %v772
      %v805 = vadd.f32 %v630, %v774
      %v806 = vxor.u32 %v804, 2147483648
      %v807 = vxor.u32 %v805, 2147483648
      %v808 = vmul.f32 %v806, 1.442695
      %v809 = vpow.pop %v808
      %v810 = vmul.f32 %v807, 1.442695
      %v811 = vpow.pop %v810
      %v812 = vadd.f32 %v809, 1.0
      %v813 = vadd.f32 %v811, 1.0
      %v814 = vrcp.pop %v812
      %v815 = vmul.f32 %v812, %v814
      %v816 = vsub.f32 1.0, %v815
      %v817 = vmul.f32 %v814, %v816
      %v818 = vadd.f32 %v814, %v817
      %vm819 = vweird.f32 %v812
      %vm820 = vweird.f32 %v814
      %vm821 = vmor %vm819, %vm820
      %v822 = vsel %vm821, %v814, %v818
      %v823 = vand.u32 2147483647, %v812
      %vm824 = vcmp.eq.f32.partialorder %v823, 8.507059e+37
      %v825 = vand.u32 %v812, 2147483648
      %v826 = vor.u32 1.1754944e-38, %v825
      %v827 = vsel %vm824, %v826, %v822
      %v828 = vmul.f32 1.0, %v827
      %v829 = vrcp.pop %v813
      %v830 = vmul.f32 %v813, %v829
      %v831 = vsub.f32 1.0, %v830
      %v832 = vmul.f32 %v829, %v831
      %v833 = vadd.f32 %v829, %v832
      %vm834 = vweird.f32 %v813
      %vm835 = vweird.f32 %v829
      %vm836 = vmor %vm834, %vm835
      %v837 = vsel %vm836, %v829, %v833
      %v838 = vand.u32 2147483647, %v813
      %vm839 = vcmp.eq.f32.partialorder %v838, 8.507059e+37
      %v840 = vand.u32 %v813, 2147483648
      %v841 = vor.u32 1.1754944e-38, %v840
      %v842 = vsel %vm839, %v841, %v837
      %v843 = vmul.f32 1.0, %v842
      %v844 = vadd.f32 %v628, %v786
      %v845 = vadd.f32 %v631, %v788
      %v846 = vxor.u32 %v844, 2147483648
      %v847 = vxor.u32 %v845, 2147483648
      %v848 = vmul.f32 %v846, 1.442695
      %v849 = vpow.pop %v848
      %v850 = vmul.f32 %v847, 1.442695
      %v851 = vpow.pop %v850
      %v852 = vadd.f32 %v849, 1.0
      %v853 = vadd.f32 %v851, 1.0
      %v854 = vrcp.pop %v852
      %v855 = vmul.f32 %v852, %v854
      %v856 = vsub.f32 1.0, %v855
      %v857 = vmul.f32 %v854, %v856
      %v858 = vadd.f32 %v854, %v857
      %vm859 = vweird.f32 %v852
      %vm860 = vweird.f32 %v854
      %vm861 = vmor %vm859, %vm860
      %v862 = vsel %vm861, %v854, %v858
      %v863 = vand.u32 2147483647, %v852
      %vm864 = vcmp.eq.f32.partialorder %v863, 8.507059e+37
      %v865 = vand.u32 %v852, 2147483648
      %v866 = vor.u32 1.1754944e-38, %v865
      %v867 = vsel %vm864, %v866, %v862
      %v868 = vmul.f32 1.0, %v867
      %v869 = vrcp.pop %v853
      %v870 = vmul.f32 %v853, %v869
      %v871 = vsub.f32 1.0, %v870
      %v872 = vmul.f32 %v869, %v871
      %v873 = vadd.f32 %v869, %v872
      %vm874 = vweird.f32 %v853
      %vm875 = vweird.f32 %v869
      %vm876 = vmor %vm874, %vm875
      %v877 = vsel %vm876, %v869, %v873
      %v878 = vand.u32 2147483647, %v853
      %vm879 = vcmp.eq.f32.partialorder %v878, 8.507059e+37
      %v880 = vand.u32 %v853, 2147483648
      %v881 = vor.u32 1.1754944e-38, %v880
      %v882 = vsel %vm879, %v881, %v877
      %v883 = vmul.f32 1.0, %v882
      %v884 = vadd.f32 %v800, %v623
      %v885 = vadd.f32 %v802, %v623
      %v886 = vmul.f32 %v828, %v884
      %v887 = vmul.f32 %v843, %v885
      %v888 = vadd.f32 %v629, %v886
      %v889 = vadd.f32 %v632, %v887
      %v890 = vtanh.pop %v888
      %v891 = vtanh.pop %v889
      %v892 = vsub.f32 %v625, %v890
      %v893 = vsub.f32 %v626, %v891
      %v894 = vmul.f32 %v868, %v892
      %v895 = vmul.f32 %v883, %v893
      %v896 = vadd.f32 %v890, %v894
      %v897 = vadd.f32 %v891, %v895
      %v898 = vpack.c.bf16 %v896, %v896
      %v899 = vpack.c.bf16 %v897, %v897
      %900 = vst [vmem:[%s269] sm:$0xf] %v898
      %901 = vst [vmem:[%s269 + $0x4] sm:$0xf] %v899
      %s902 = scalar_lea.vmem [#allocation2], 48
      %v903 = vld [vmem:[%s902] sm:$0xff]
      %v904 = vld [vmem:[%s902 + $0x8] sm:$0xff]
      %v905 = vld [vmem:[%s902 + $0x10] sm:$0xff]
      %v906 = vld [vmem:[%s902 + $0x18] sm:$0xff]
      %v907 = vld [vmem:[%s902 + $0x20] sm:$0xff]
      %v908 = vld [vmem:[%s902 + $0x28] sm:$0xff]
      %v911 = vunpack.c.l.b16 %v898
      %v912 = vunpack.c.l.b16 %v899
      %v913 = vpack.c.b16 %v912, %v911
      %915 = vmatpush.bf16.msra.mxu0 %v735
      %916 = vmatpush.bf16.msra.mxu0 %v732
      %917 = vmatpush.bf16.msra.mxu0 %v729
      %918 = vmatpush.bf16.msra.mxu0 %v726
      %919 = vmatpush.bf16.msra.mxu0 %v723
      %920 = vmatpush.bf16.msra.mxu0 %v720
      %921 = vmatpush.bf16.msra.mxu0 %v717
      %922 = vmatpush.bf16.msra.mxu0 %v714
      %923 = vmatmul.bf16.gmra.mxu0 %v913
      %v924 = vpop.f32.mrf.mxu0
      %v925 = vadd.f32 0.0, %v924
      %v926 = vpop.f32.mrf.mxu0
      %v927 = vadd.f32 0.0, %v926
      %928 = vdwg.mxu0
      %929 = vmatpush.bf16.msra.mxu0 %v736
      %930 = vmatpush.bf16.msra.mxu0 %v733
      %931 = vmatpush.bf16.msra.mxu0 %v730
      %932 = vmatpush.bf16.msra.mxu0 %v727
      %933 = vmatpush.bf16.msra.mxu0 %v724
      %934 = vmatpush.bf16.msra.mxu0 %v721
      %935 = vmatpush.bf16.msra.mxu0 %v718
      %936 = vmatpush.bf16.msra.mxu0 %v715
      %937 = vmatmul.bf16.gmra.mxu0 %v913
      %v938 = vpop.f32.mrf.mxu0
      %v939 = vadd.f32 0.0, %v938
      %v940 = vpop.f32.mrf.mxu0
      %v941 = vadd.f32 0.0, %v940
      %942 = vdwg.mxu0
      %943 = vmatpush.bf16.msra.mxu0 %v737
      %944 = vmatpush.bf16.msra.mxu0 %v734
      %945 = vmatpush.bf16.msra.mxu0 %v731
      %946 = vmatpush.bf16.msra.mxu0 %v728
      %947 = vmatpush.bf16.msra.mxu0 %v725
      %948 = vmatpush.bf16.msra.mxu0 %v722
      %949 = vmatpush.bf16.msra.mxu0 %v719
      %950 = vmatpush.bf16.msra.mxu0 %v716
      %951 = vmatmul.bf16.gmra.mxu0 %v913
      %v952 = vpop.f32.mrf.mxu0
      %v953 = vadd.f32 0.0, %v952
      %v954 = vpop.f32.mrf.mxu0
      %v955 = vadd.f32 0.0, %v954
      %956 = vdwg.mxu0
      %v957 = vadd.f32 %v903, %v925
      %v958 = vadd.f32 %v906, %v927
      %v959 = vxor.u32 %v957, 2147483648
      %v960 = vxor.u32 %v958, 2147483648
      %v961 = vmul.f32 %v959, 1.442695
      %v962 = vpow.pop %v961
      %v963 = vmul.f32 %v960, 1.442695
      %v964 = vpow.pop %v963
      %v965 = vadd.f32 %v962, 1.0
      %v966 = vadd.f32 %v964, 1.0
      %v967 = vrcp.pop %v965
      %v968 = vmul.f32 %v965, %v967
      %v969 = vsub.f32 1.0, %v968
      %v970 = vmul.f32 %v967, %v969
      %v971 = vadd.f32 %v967, %v970
      %vm972 = vweird.f32 %v965
      %vm973 = vweird.f32 %v967
      %vm974 = vmor %vm972, %vm973
      %v975 = vsel %vm974, %v967, %v971
      %v976 = vand.u32 2147483647, %v965
      %vm977 = vcmp.eq.f32.partialorder %v976, 8.507059e+37
      %v978 = vand.u32 %v965, 2147483648
      %v979 = vor.u32 1.1754944e-38, %v978
      %v980 = vsel %vm977, %v979, %v975
      %v981 = vmul.f32 1.0, %v980
      %v982 = vrcp.pop %v966
      %v983 = vmul.f32 %v966, %v982
      %v984 = vsub.f32 1.0, %v983
      %v985 = vmul.f32 %v982, %v984
      %v986 = vadd.f32 %v982, %v985
      %vm987 = vweird.f32 %v966
      %vm988 = vweird.f32 %v982
      %vm989 = vmor %vm987, %vm988
      %v990 = vsel %vm989, %v982, %v986
      %v991 = vand.u32 2147483647, %v966
      %vm992 = vcmp.eq.f32.partialorder %v991, 8.507059e+37
      %v993 = vand.u32 %v966, 2147483648
      %v994 = vor.u32 1.1754944e-38, %v993
      %v995 = vsel %vm992, %v994, %v990
      %v996 = vmul.f32 1.0, %v995
      %v997 = vadd.f32 %v904, %v939
      %v998 = vadd.f32 %v907, %v941
      %v999 = vxor.u32 %v997, 2147483648
      %v1000 = vxor.u32 %v998, 2147483648
      %v1001 = vmul.f32 %v999, 1.442695
      %v1002 = vpow.pop %v1001
      %v1003 = vmul.f32 %v1000, 1.442695
      %v1004 = vpow.pop %v1003
      %v1005 = vadd.f32 %v1002, 1.0
      %v1006 = vadd.f32 %v1004, 1.0
      %v1007 = vrcp.pop %v1005
      %v1008 = vmul.f32 %v1005, %v1007
      %v1009 = vsub.f32 1.0, %v1008
      %v1010 = vmul.f32 %v1007, %v1009
      %v1011 = vadd.f32 %v1007, %v1010
      %vm1012 = vweird.f32 %v1005
      %vm1013 = vweird.f32 %v1007
      %vm1014 = vmor %vm1012, %vm1013
      %v1015 = vsel %vm1014, %v1007, %v1011
      %v1016 = vand.u32 2147483647, %v1005
      %vm1017 = vcmp.eq.f32.partialorder %v1016, 8.507059e+37
      %v1018 = vand.u32 %v1005, 2147483648
      %v1019 = vor.u32 1.1754944e-38, %v1018
      %v1020 = vsel %vm1017, %v1019, %v1015
      %v1021 = vmul.f32 1.0, %v1020
      %v1022 = vrcp.pop %v1006
      %v1023 = vmul.f32 %v1006, %v1022
      %v1024 = vsub.f32 1.0, %v1023
      %v1025 = vmul.f32 %v1022, %v1024
      %v1026 = vadd.f32 %v1022, %v1025
      %vm1027 = vweird.f32 %v1006
      %vm1028 = vweird.f32 %v1022
      %vm1029 = vmor %vm1027, %vm1028
      %v1030 = vsel %vm1029, %v1022, %v1026
      %v1031 = vand.u32 2147483647, %v1006
      %vm1032 = vcmp.eq.f32.partialorder %v1031, 8.507059e+37
      %v1033 = vand.u32 %v1006, 2147483648
      %v1034 = vor.u32 1.1754944e-38, %v1033
      %v1035 = vsel %vm1032, %v1034, %v1030
      %v1036 = vmul.f32 1.0, %v1035
      %v1037 = vadd.f32 %v953, %v623
      %v1038 = vadd.f32 %v955, %v623
      %v1039 = vmul.f32 %v981, %v1037
      %v1040 = vmul.f32 %v996, %v1038
      %v1041 = vadd.f32 %v905, %v1039
      %v1042 = vadd.f32 %v908, %v1040
      %v1043 = vtanh.pop %v1041
      %v1044 = vtanh.pop %v1042
      %v1045 = vsub.f32 %v896, %v1043
      %v1046 = vsub.f32 %v897, %v1044
      %v1047 = vmul.f32 %v1021, %v1045
      %v1048 = vmul.f32 %v1036, %v1046
      %v1049 = vadd.f32 %v1043, %v1047
      %v1050 = vadd.f32 %v1044, %v1048
      %v1051 = vpack.c.bf16 %v1049, %v1049
      %v1052 = vpack.c.bf16 %v1050, %v1050
      %s1053 = scalar_lea.vmem %s269, 8
      %1054 = vst [vmem:[%s1053] sm:$0xf] %v1051
      %1055 = vst [vmem:[%s1053 + $0x4] sm:$0xf] %v1052
      %s1056 = scalar_lea.vmem [#allocation2], 96
      %v1057 = vld [vmem:[%s1056] sm:$0xff]
      %v1058 = vld [vmem:[%s1056 + $0x8] sm:$0xff]
      %v1059 = vld [vmem:[%s1056 + $0x10] sm:$0xff]
      %v1060 = vld [vmem:[%s1056 + $0x18] sm:$0xff]
      %v1061 = vld [vmem:[%s1056 + $0x20] sm:$0xff]
      %v1062 = vld [vmem:[%s1056 + $0x28] sm:$0xff]
      %v1065 = vunpack.c.l.b16 %v1051
      %v1066 = vunpack.c.l.b16 %v1052
      %v1067 = vpack.c.b16 %v1066, %v1065
      %1069 = vmatpush.bf16.msra.mxu0 %v735
      %1070 = vmatpush.bf16.msra.mxu0 %v732
      %1071 = vmatpush.bf16.msra.mxu0 %v729
      %1072 = vmatpush.bf16.msra.mxu0 %v726
      %1073 = vmatpush.bf16.msra.mxu0 %v723
      %1074 = vmatpush.bf16.msra.mxu0 %v720
      %1075 = vmatpush.bf16.msra.mxu0 %v717
      %1076 = vmatpush.bf16.msra.mxu0 %v714
      %1077 = vmatmul.bf16.gmra.mxu0 %v1067
      %v1078 = vpop.f32.mrf.mxu0
      %v1079 = vadd.f32 0.0, %v1078
      %v1080 = vpop.f32.mrf.mxu0
      %v1081 = vadd.f32 0.0, %v1080
      %1082 = vdwg.mxu0
      %1083 = vmatpush.bf16.msra.mxu0 %v736
      %1084 = vmatpush.bf16.msra.mxu0 %v733
      %1085 = vmatpush.bf16.msra.mxu0 %v730
      %1086 = vmatpush.bf16.msra.mxu0 %v727
      %1087 = vmatpush.bf16.msra.mxu0 %v724
      %1088 = vmatpush.bf16.msra.mxu0 %v721
      %1089 = vmatpush.bf16.msra.mxu0 %v718
      %1090 = vmatpush.bf16.msra.mxu0 %v715
      %1091 = vmatmul.bf16.gmra.mxu0 %v1067
      %v1092 = vpop.f32.mrf.mxu0
      %v1093 = vadd.f32 0.0, %v1092
      %v1094 = vpop.f32.mrf.mxu0
      %v1095 = vadd.f32 0.0, %v1094
      %1096 = vdwg.mxu0
      %1097 = vmatpush.bf16.msra.mxu0 %v737
      %1098 = vmatpush.bf16.msra.mxu0 %v734
      %1099 = vmatpush.bf16.msra.mxu0 %v731
      %1100 = vmatpush.bf16.msra.mxu0 %v728
      %1101 = vmatpush.bf16.msra.mxu0 %v725
      %1102 = vmatpush.bf16.msra.mxu0 %v722
      %1103 = vmatpush.bf16.msra.mxu0 %v719
      %1104 = vmatpush.bf16.msra.mxu0 %v716
      %1105 = vmatmul.bf16.gmra.mxu0 %v1067
      %v1106 = vpop.f32.mrf.mxu0
      %v1107 = vadd.f32 0.0, %v1106
      %v1108 = vpop.f32.mrf.mxu0
      %v1109 = vadd.f32 0.0, %v1108
      %1110 = vdwg.mxu0
      %v1111 = vadd.f32 %v1057, %v1079
      %v1112 = vadd.f32 %v1060, %v1081
      %v1113 = vxor.u32 %v1111, 2147483648
      %v1114 = vxor.u32 %v1112, 2147483648
      %v1115 = vmul.f32 %v1113, 1.442695
      %v1116 = vpow.pop %v1115
      %v1117 = vmul.f32 %v1114, 1.442695
      %v1118 = vpow.pop %v1117
      %v1119 = vadd.f32 %v1116, 1.0
      %v1120 = vadd.f32 %v1118, 1.0
      %v1121 = vrcp.pop %v1119
      %v1122 = vmul.f32 %v1119, %v1121
      %v1123 = vsub.f32 1.0, %v1122
      %v1124 = vmul.f32 %v1121, %v1123
      %v1125 = vadd.f32 %v1121, %v1124
      %vm1126 = vweird.f32 %v1119
      %vm1127 = vweird.f32 %v1121
      %vm1128 = vmor %vm1126, %vm1127
      %v1129 = vsel %vm1128, %v1121, %v1125
      %v1130 = vand.u32 2147483647, %v1119
      %vm1131 = vcmp.eq.f32.partialorder %v1130, 8.507059e+37
      %v1132 = vand.u32 %v1119, 2147483648
      %v1133 = vor.u32 1.1754944e-38, %v1132
      %v1134 = vsel %vm1131, %v1133, %v1129
      %v1135 = vmul.f32 1.0, %v1134
      %v1136 = vrcp.pop %v1120
      %v1137 = vmul.f32 %v1120, %v1136
      %v1138 = vsub.f32 1.0, %v1137
      %v1139 = vmul.f32 %v1136, %v1138
      %v1140 = vadd.f32 %v1136, %v1139
      %vm1141 = vweird.f32 %v1120
      %vm1142 = vweird.f32 %v1136
      %vm1143 = vmor %vm1141, %vm1142
      %v1144 = vsel %vm1143, %v1136, %v1140
      %v1145 = vand.u32 2147483647, %v1120
      %vm1146 = vcmp.eq.f32.partialorder %v1145, 8.507059e+37
      %v1147 = vand.u32 %v1120, 2147483648
      %v1148 = vor.u32 1.1754944e-38, %v1147
      %v1149 = vsel %vm1146, %v1148, %v1144
      %v1150 = vmul.f32 1.0, %v1149
      %v1151 = vadd.f32 %v1058, %v1093
      %v1152 = vadd.f32 %v1061, %v1095
      %v1153 = vxor.u32 %v1151, 2147483648
      %v1154 = vxor.u32 %v1152, 2147483648
      %v1155 = vmul.f32 %v1153, 1.442695
      %v1156 = vpow.pop %v1155
      %v1157 = vmul.f32 %v1154, 1.442695
      %v1158 = vpow.pop %v1157
      %v1159 = vadd.f32 %v1156, 1.0
      %v1160 = vadd.f32 %v1158, 1.0
      %v1161 = vrcp.pop %v1159
      %v1162 = vmul.f32 %v1159, %v1161
      %v1163 = vsub.f32 1.0, %v1162
      %v1164 = vmul.f32 %v1161, %v1163
      %v1165 = vadd.f32 %v1161, %v1164
      %vm1166 = vweird.f32 %v1159
      %vm1167 = vweird.f32 %v1161
      %vm1168 = vmor %vm1166, %vm1167
      %v1169 = vsel %vm1168, %v1161, %v1165
      %v1170 = vand.u32 2147483647, %v1159
      %vm1171 = vcmp.eq.f32.partialorder %v1170, 8.507059e+37
      %v1172 = vand.u32 %v1159, 2147483648
      %v1173 = vor.u32 1.1754944e-38, %v1172
      %v1174 = vsel %vm1171, %v1173, %v1169
      %v1175 = vmul.f32 1.0, %v1174
      %v1176 = vrcp.pop %v1160
      %v1177 = vmul.f32 %v1160, %v1176
      %v1178 = vsub.f32 1.0, %v1177
      %v1179 = vmul.f32 %v1176, %v1178
      %v1180 = vadd.f32 %v1176, %v1179
      %vm1181 = vweird.f32 %v1160
      %vm1182 = vweird.f32 %v1176
      %vm1183 = vmor %vm1181, %vm1182
      %v1184 = vsel %vm1183, %v1176, %v1180
      %v1185 = vand.u32 2147483647, %v1160
      %vm1186 = vcmp.eq.f32.partialorder %v1185, 8.507059e+37
      %v1187 = vand.u32 %v1160, 2147483648
      %v1188 = vor.u32 1.1754944e-38, %v1187
      %v1189 = vsel %vm1186, %v1188, %v1184
      %v1190 = vmul.f32 1.0, %v1189
      %v1191 = vadd.f32 %v1107, %v623
      %v1192 = vadd.f32 %v1109, %v623
      %v1193 = vmul.f32 %v1135, %v1191
      %v1194 = vmul.f32 %v1150, %v1192
      %v1195 = vadd.f32 %v1059, %v1193
      %v1196 = vadd.f32 %v1062, %v1194
      %v1197 = vtanh.pop %v1195
      %v1198 = vtanh.pop %v1196
      %v1199 = vsub.f32 %v1049, %v1197
      %v1200 = vsub.f32 %v1050, %v1198
      %v1201 = vmul.f32 %v1175, %v1199
      %v1202 = vmul.f32 %v1190, %v1200
      %v1203 = vadd.f32 %v1197, %v1201
      %v1204 = vadd.f32 %v1198, %v1202
      %v1205 = vpack.c.bf16 %v1203, %v1203
      %v1206 = vpack.c.bf16 %v1204, %v1204
      %s1207 = scalar_lea.vmem %s269, 16
      %1208 = vst [vmem:[%s1207] sm:$0xf] %v1205
      %1209 = vst [vmem:[%s1207 + $0x4] sm:$0xf] %v1206
      %s1210 = scalar_lea.vmem [#allocation2], 144
      %v1211 = vld [vmem:[%s1210] sm:$0xff]
      %v1212 = vld [vmem:[%s1210 + $0x8] sm:$0xff]
      %v1213 = vld [vmem:[%s1210 + $0x10] sm:$0xff]
      %v1214 = vld [vmem:[%s1210 + $0x18] sm:$0xff]
      %v1215 = vld [vmem:[%s1210 + $0x20] sm:$0xff]
      %v1216 = vld [vmem:[%s1210 + $0x28] sm:$0xff]
      %v1219 = vunpack.c.l.b16 %v1205
      %v1220 = vunpack.c.l.b16 %v1206
      %v1221 = vpack.c.b16 %v1220, %v1219
      %1223 = vmatpush.bf16.msra.mxu0 %v735
      %1224 = vmatpush.bf16.msra.mxu0 %v732
      %1225 = vmatpush.bf16.msra.mxu0 %v729
      %1226 = vmatpush.bf16.msra.mxu0 %v726
      %1227 = vmatpush.bf16.msra.mxu0 %v723
      %1228 = vmatpush.bf16.msra.mxu0 %v720
      %1229 = vmatpush.bf16.msra.mxu0 %v717
      %1230 = vmatpush.bf16.msra.mxu0 %v714
      %1231 = vmatmul.bf16.gmra.mxu0 %v1221
      %v1232 = vpop.f32.mrf.mxu0
      %v1233 = vadd.f32 0.0, %v1232
      %v1234 = vpop.f32.mrf.mxu0
      %v1235 = vadd.f32 0.0, %v1234
      %1236 = vdwg.mxu0
      %1237 = vmatpush.bf16.msra.mxu0 %v736
      %1238 = vmatpush.bf16.msra.mxu0 %v733
      %1239 = vmatpush.bf16.msra.mxu0 %v730
      %1240 = vmatpush.bf16.msra.mxu0 %v727
      %1241 = vmatpush.bf16.msra.mxu0 %v724
      %1242 = vmatpush.bf16.msra.mxu0 %v721
      %1243 = vmatpush.bf16.msra.mxu0 %v718
      %1244 = vmatpush.bf16.msra.mxu0 %v715
      %1245 = vmatmul.bf16.gmra.mxu0 %v1221
      %v1246 = vpop.f32.mrf.mxu0
      %v1247 = vadd.f32 0.0, %v1246
      %v1248 = vpop.f32.mrf.mxu0
      %v1249 = vadd.f32 0.0, %v1248
      %1250 = vdwg.mxu0
      %1251 = vmatpush.bf16.msra.mxu0 %v737
      %1252 = vmatpush.bf16.msra.mxu0 %v734
      %1253 = vmatpush.bf16.msra.mxu0 %v731
      %1254 = vmatpush.bf16.msra.mxu0 %v728
      %1255 = vmatpush.bf16.msra.mxu0 %v725
      %1256 = vmatpush.bf16.msra.mxu0 %v722
      %1257 = vmatpush.bf16.msra.mxu0 %v719
      %1258 = vmatpush.bf16.msra.mxu0 %v716
      %1259 = vmatmul.bf16.gmra.mxu0 %v1221
      %v1260 = vpop.f32.mrf.mxu0
      %v1261 = vadd.f32 0.0, %v1260
      %v1262 = vpop.f32.mrf.mxu0
      %v1263 = vadd.f32 0.0, %v1262
      %1264 = vdwg.mxu0
      %v1265 = vadd.f32 %v1211, %v1233
      %v1266 = vadd.f32 %v1214, %v1235
      %v1267 = vxor.u32 %v1265, 2147483648
      %v1268 = vxor.u32 %v1266, 2147483648
      %v1269 = vmul.f32 %v1267, 1.442695
      %v1270 = vpow.pop %v1269
      %v1271 = vmul.f32 %v1268, 1.442695
      %v1272 = vpow.pop %v1271
      %v1273 = vadd.f32 %v1270, 1.0
      %v1274 = vadd.f32 %v1272, 1.0
      %v1275 = vrcp.pop %v1273
      %v1276 = vmul.f32 %v1273, %v1275
      %v1277 = vsub.f32 1.0, %v1276
      %v1278 = vmul.f32 %v1275, %v1277
      %v1279 = vadd.f32 %v1275, %v1278
      %vm1280 = vweird.f32 %v1273
      %vm1281 = vweird.f32 %v1275
      %vm1282 = vmor %vm1280, %vm1281
      %v1283 = vsel %vm1282, %v1275, %v1279
      %v1284 = vand.u32 2147483647, %v1273
      %vm1285 = vcmp.eq.f32.partialorder %v1284, 8.507059e+37
      %v1286 = vand.u32 %v1273, 2147483648
      %v1287 = vor.u32 1.1754944e-38, %v1286
      %v1288 = vsel %vm1285, %v1287, %v1283
      %v1289 = vmul.f32 1.0, %v1288
      %v1290 = vrcp.pop %v1274
      %v1291 = vmul.f32 %v1274, %v1290
      %v1292 = vsub.f32 1.0, %v1291
      %v1293 = vmul.f32 %v1290, %v1292
      %v1294 = vadd.f32 %v1290, %v1293
      %vm1295 = vweird.f32 %v1274
      %vm1296 = vweird.f32 %v1290
      %vm1297 = vmor %vm1295, %vm1296
      %v1298 = vsel %vm1297, %v1290, %v1294
      %v1299 = vand.u32 2147483647, %v1274
      %vm1300 = vcmp.eq.f32.partialorder %v1299, 8.507059e+37
      %v1301 = vand.u32 %v1274, 2147483648
      %v1302 = vor.u32 1.1754944e-38, %v1301
      %v1303 = vsel %vm1300, %v1302, %v1298
      %v1304 = vmul.f32 1.0, %v1303
      %v1305 = vadd.f32 %v1212, %v1247
      %v1306 = vadd.f32 %v1215, %v1249
      %v1307 = vxor.u32 %v1305, 2147483648
      %v1308 = vxor.u32 %v1306, 2147483648
      %v1309 = vmul.f32 %v1307, 1.442695
      %v1310 = vpow.pop %v1309
      %v1311 = vmul.f32 %v1308, 1.442695
      %v1312 = vpow.pop %v1311
      %v1313 = vadd.f32 %v1310, 1.0
      %v1314 = vadd.f32 %v1312, 1.0
      %v1315 = vrcp.pop %v1313
      %v1316 = vmul.f32 %v1313, %v1315
      %v1317 = vsub.f32 1.0, %v1316
      %v1318 = vmul.f32 %v1315, %v1317
      %v1319 = vadd.f32 %v1315, %v1318
      %vm1320 = vweird.f32 %v1313
      %vm1321 = vweird.f32 %v1315
      %vm1322 = vmor %vm1320, %vm1321
      %v1323 = vsel %vm1322, %v1315, %v1319
      %v1324 = vand.u32 2147483647, %v1313
      %vm1325 = vcmp.eq.f32.partialorder %v1324, 8.507059e+37
      %v1326 = vand.u32 %v1313, 2147483648
      %v1327 = vor.u32 1.1754944e-38, %v1326
      %v1328 = vsel %vm1325, %v1327, %v1323
      %v1329 = vmul.f32 1.0, %v1328
      %v1330 = vrcp.pop %v1314
      %v1331 = vmul.f32 %v1314, %v1330
      %v1332 = vsub.f32 1.0, %v1331
      %v1333 = vmul.f32 %v1330, %v1332
      %v1334 = vadd.f32 %v1330, %v1333
      %vm1335 = vweird.f32 %v1314
      %vm1336 = vweird.f32 %v1330
      %vm1337 = vmor %vm1335, %vm1336
      %v1338 = vsel %vm1337, %v1330, %v1334
      %v1339 = vand.u32 2147483647, %v1314
      %vm1340 = vcmp.eq.f32.partialorder %v1339, 8.507059e+37
      %v1341 = vand.u32 %v1314, 2147483648
      %v1342 = vor.u32 1.1754944e-38, %v1341
      %v1343 = vsel %vm1340, %v1342, %v1338
      %v1344 = vmul.f32 1.0, %v1343
      %v1345 = vadd.f32 %v1261, %v623
      %v1346 = vadd.f32 %v1263, %v623
      %v1347 = vmul.f32 %v1289, %v1345
      %v1348 = vmul.f32 %v1304, %v1346
      %v1349 = vadd.f32 %v1213, %v1347
      %v1350 = vadd.f32 %v1216, %v1348
      %v1351 = vtanh.pop %v1349
      %v1352 = vtanh.pop %v1350
      %v1353 = vsub.f32 %v1203, %v1351
      %v1354 = vsub.f32 %v1204, %v1352
      %v1355 = vmul.f32 %v1329, %v1353
      %v1356 = vmul.f32 %v1344, %v1354
      %v1357 = vadd.f32 %v1351, %v1355
      %v1358 = vadd.f32 %v1352, %v1356
      %v1359 = vpack.c.bf16 %v1357, %v1357
      %v1360 = vpack.c.bf16 %v1358, %v1358
      %s1361 = scalar_lea.vmem %s269, 24
      %1362 = vst [vmem:[%s1361] sm:$0xf] %v1359
      %1363 = vst [vmem:[%s1361 + $0x4] sm:$0xf] %v1360
      %1364 = vst [vmem:[#allocation3] sm:$0xff] %v1357
      %1365 = vst [vmem:[#allocation3 + $0x8] sm:$0xff] %v1358
      %s1366 = smul.u32 4, %s21
      %s1367 = smul.u32 2, %s20
      %p1368 = scmp.lt.s32.totalorder %s1366, 7
      %s1369 = scalar_select %p1368, %s1366, 7
      %p1370 = scmp.lt.s32.totalorder %s1367, 1
      %s1371 = scalar_select %p1370, %s1367, 1
      %s1372 = smul.addr %s1369, 2
      %s1373 = sadd.s32 %s1371, %s1372
      %s1374 = smul.addr %s1373, 4
      %s1375 = scalar_lea.vmem %s5, %s1374
      // Predicated region
      $region45: #{bigru_for_srl_forward.3} parent=39 // pred_check
        %p1376 = pneg %p160
      $region46: #{bigru_for_srl_forward.3} parent=39 // pred_check_branch
        %1378 = sbr.rel (%p1376) target = $region48
      $region47: #{bigru_for_srl_forward.3} parent=39 // pred_region
        %s1379 = smul.u32 4, %s21
        %s1380 = smul.u32 2, %s20
      $region48: #{bigru_for_srl_forward.3} parent=39 // pred_fallthru
        _
    $region40: #{bigru_for_srl_forward.3} parent=5 // pred_fallthru
      _
    %p1381 = scmp.le.s32.totalorder 2, %s11
    // Predicated region
    $region49: #{bigru_for_srl_forward.3} parent=5 // pred_check
      %p1382 = pneg %p1381
    $region50: #{bigru_for_srl_forward.3} parent=5 // pred_check_branch
      %1384 = sbr.rel (%p1382) target = $region52
    $region51: #{bigru_for_srl_forward.3} parent=5 // pred_region
      %s1385 = ssub.s32 %s11, 2
      // Predicated region
      $region53: #{bigru_for_srl_forward.3} parent=51 // pred_check
        %p1386 = pneg %p166
      $region54: #{bigru_for_srl_forward.3} parent=51 // pred_check_branch
        %1388 = sbr.rel (%p1386) target = $region56
      $region55: #{bigru_for_srl_forward.3} parent=51 // pred_region
        %s1389 = smul.u32 4, %s23
        %s1390 = smul.u32 2, %s22
        %p1391 = scmp.lt.s32.totalorder %s1389, 7
        %s1392 = scalar_select %p1391, %s1389, 7
        %p1393 = scmp.lt.s32.totalorder %s1390, 1
        %s1394 = scalar_select %p1393, %s1390, 1
        %s1395 = smul.addr %s1392, 2
        %s1396 = sadd.s32 %s1394, %s1395
        %s1397 = smul.addr %s1396, 4
        %s1398 = scalar_lea.vmem %s5, %s1397
      $region56: #{bigru_for_srl_forward.3} parent=51 // pred_fallthru
        _
    $region52: #{bigru_for_srl_forward.3} parent=5 // pred_fallthru
      _
  $region6: #{bigru_for_srl_forward.3} parent=0 // loop_footer
    %s15 = sadd.s32 1, %s11
  $region7: #{bigru_for_srl_forward.3} parent=0 // loop_footer_branch
    %10 = sbr.rel target = $region3
  $region8: #{bigru_for_srl_forward.3} parent=0 // loop_exit
    _

// kernel: bigru_for_srl_forward.5
$region0: #{bigru_for_srl_forward.5}
  #allocation0 [shape = 'u32[]', space=smem, size = 0x4, offset = 0x4, fixed_abs, tag = 'smem constant byte address 0x4 - core index']
  #allocation1 [shape = 'u32[72,128]{1,0:T(1,128)}', space=vmem, size = 0x9000, scoped, tag = 'internal scratch']
  #allocation2 [shape = 'f32[4,16,384]{2,1,0:T(8,128)}', space=vmem, size = 0x18000, scoped, tag = 'scratch operand']
  #allocation3 [shape = 'f32[16,128]{1,0:T(8,128)}', space=vmem, size = 0x2000, scoped, tag = 'scratch operand']
  %s0 = inlined_call_operand.vmem [shape: bf16[8,16,128], index: 0, kind: input, shape index: {}]
  %s1 = inlined_call_operand.vmem [shape: bf16[128,384], index: 1, kind: input, shape index: {}]
  %s2 = inlined_call_operand.vmem [shape: bf16[128,384], index: 2, kind: input, shape index: {}]
  %s3 = inlined_call_operand.vmem [shape: f32[1,384], index: 3, kind: input, shape index: {}]
  %s4 = inlined_call_operand.vmem [shape: f32[1,128], index: 4, kind: input, shape index: {}]
  %s5 = inlined_call_operand.vmem [shape: bf16[8,16,128], index: 5, kind: output, shape index: {}]
  %s6 = sld [smem:[#allocation0]]
  $region57: #{bigru_for_srl_forward.5} parent=0
    _
  %s8 = ssub.s32 1, %s6
  %s9 = scalar_select 0, %s8, %s6
  loop: start=0, step=1, limit=4
  $region2: #{bigru_for_srl_forward.5} parent=0 // loop_pre_header
    _
  $region3: #{bigru_for_srl_forward.5} parent=0 // loop_header
    %s11 = sphi 0, %s15
    %p12 = scmp.ge.s32.totalorder %s11, 4
    %s18 = sphi 0, %s30
    %s19 = sphi 0, %s26
    %s20 = sphi 0, %s18
    %s21 = sphi 0, %s19
    %s22 = sphi 0, %s20
    %s23 = sphi 0, %s21
    %s37 = sphi 0, %s39
    %s40 = sphi 0, %s37
    %s41 = sphi 0, %s40
    %s57 = sphi 0, %s41
    %s61 = sphi 0, %s61
    %s63 = sphi 0, %s61
    %s64 = sphi 0, %s63
    %s78 = sphi 0, %s64
    %s82 = sphi 0, %s82
    %s84 = sphi 0, %s82
    %s85 = sphi 0, %s84
    %s99 = sphi 0, %s85
    %s103 = sphi 0, %s103
    %s105 = sphi 0, %s103
    %s106 = sphi 0, %s105
    %s120 = sphi 0, %s106
    %s124 = sphi 0, %s124
    %s126 = sphi 0, %s124
    %s127 = sphi 0, %s126
    %s141 = sphi 0, %s127
    %s151 = sphi 0, %s153
    %s154 = sphi 0, %s151
    %s155 = sphi 0, %s154
    %s171 = sphi 0, %s155
  $region4: #{bigru_for_srl_forward.5} parent=0 // loop_header_branch
    %14 = sbr.rel (%p12) target = $region8
  $region5: #{bigru_for_srl_forward.5} parent=0 // loop_body
    %s16 = ssub.s32 %s11, 1
    %s17 = ssub.s32 %s11, 2
    %s24 = sadd.s32 1, %s19
    %p25 = scmp.ge.s32.totalorder %s24, 2
    %s26 = scalar_select %p25, 0, %s24
    %s27 = sadd.s32 1, %s18
    %s28 = scalar_select %p25, %s27, %s18
    %p29 = scmp.ge.s32.totalorder %s28, 1
    %s30 = scalar_select %p29, 0, %s28
    %s31 = ssub.s32 1, %s19
    %s32 = ssub.s32 1, %s26
    %s33 = ssub.s32 %s31, %s32
    %s34 = ssub.s32 %s18, %s30
    %s35 = sor.u32 %s33, %s34
    %p36 = scmp.eq.s32.totalorder %s35, 0
    %s38 = sadd.s32 %s37, 1
    %s39 = scalar_select %p36, %s37, %s38
    %p42 = pneg %p36
    %p43 = scmp.eq.s32.totalorder %s11, 1
    %p44 = por %p42, %p43
    %p45 = scmp.ne.s32.totalorder %s37, %s40
    %p46 = scmp.eq.s32.totalorder %s11, 0
    %p47 = por %p45, %p46
    %p48 = scmp.ne.s32.totalorder %s37, %s40
    %p49 = scmp.eq.s32.totalorder %s16, 1
    %p50 = por %p48, %p49
    %p51 = scmp.ne.s32.totalorder %s40, %s41
    %p52 = scmp.eq.s32.totalorder %s16, 0
    %p53 = por %p51, %p52
    %p54 = scmp.ne.s32.totalorder %s40, %s41
    %p55 = scmp.eq.s32.totalorder %s17, 1
    %p56 = por %p54, %p55
    %p58 = scmp.ne.s32.totalorder %s41, %s57
    %p59 = scmp.eq.s32.totalorder %s17, 0
    %p60 = por %p58, %p59
    %s62 = sadd.s32 %s61, 1
    %p65 = scmp.eq.s32.totalorder %s11, 1
    %p66 = scmp.ne.s32.totalorder %s61, %s63
    %p67 = scmp.eq.s32.totalorder %s11, 0
    %p68 = por %p66, %p67
    %p69 = scmp.ne.s32.totalorder %s61, %s63
    %p70 = scmp.eq.s32.totalorder %s16, 1
    %p71 = por %p69, %p70
    %p72 = scmp.ne.s32.totalorder %s63, %s64
    %p73 = scmp.eq.s32.totalorder %s16, 0
    %p74 = por %p72, %p73
    %p75 = scmp.ne.s32.totalorder %s63, %s64
    %p76 = scmp.eq.s32.totalorder %s17, 1
    %p77 = por %p75, %p76
    %p79 = scmp.ne.s32.totalorder %s64, %s78
    %p80 = scmp.eq.s32.totalorder %s17, 0
    %p81 = por %p79, %p80
    %s83 = sadd.s32 %s82, 1
    %p86 = scmp.eq.s32.totalorder %s11, 1
    %p87 = scmp.ne.s32.totalorder %s82, %s84
    %p88 = scmp.eq.s32.totalorder %s11, 0
    %p89 = por %p87, %p88
    %p90 = scmp.ne.s32.totalorder %s82, %s84
    %p91 = scmp.eq.s32.totalorder %s16, 1
    %p92 = por %p90, %p91
    %p93 = scmp.ne.s32.totalorder %s84, %s85
    %p94 = scmp.eq.s32.totalorder %s16, 0
    %p95 = por %p93, %p94
    %p96 = scmp.ne.s32.totalorder %s84, %s85
    %p97 = scmp.eq.s32.totalorder %s17, 1
    %p98 = por %p96, %p97
    %p100 = scmp.ne.s32.totalorder %s85, %s99
    %p101 = scmp.eq.s32.totalorder %s17, 0
    %p102 = por %p100, %p101
    %s104 = sadd.s32 %s103, 1
    %p107 = scmp.eq.s32.totalorder %s11, 1
    %p108 = scmp.ne.s32.totalorder %s103, %s105
    %p109 = scmp.eq.s32.totalorder %s11, 0
    %p110 = por %p108, %p109
    %p111 = scmp.ne.s32.totalorder %s103, %s105
    %p112 = scmp.eq.s32.totalorder %s16, 1
    %p113 = por %p111, %p112
    %p114 = scmp.ne.s32.totalorder %s105, %s106
    %p115 = scmp.eq.s32.totalorder %s16, 0
    %p116 = por %p114, %p115
    %p117 = scmp.ne.s32.totalorder %s105, %s106
    %p118 = scmp.eq.s32.totalorder %s17, 1
    %p119 = por %p117, %p118
    %p121 = scmp.ne.s32.totalorder %s106, %s120
    %p122 = scmp.eq.s32.totalorder %s17, 0
    %p123 = por %p121, %p122
    %s125 = sadd.s32 %s124, 1
    %p128 = scmp.eq.s32.totalorder %s11, 1
    %p129 = scmp.ne.s32.totalorder %s124, %s126
    %p130 = scmp.eq.s32.totalorder %s11, 0
    %p131 = por %p129, %p130
    %p132 = scmp.ne.s32.totalorder %s124, %s126
    %p133 = scmp.eq.s32.totalorder %s16, 1
    %p134 = por %p132, %p133
    %p135 = scmp.ne.s32.totalorder %s126, %s127
    %p136 = scmp.eq.s32.totalorder %s16, 0
    %p137 = por %p135, %p136
    %p138 = scmp.ne.s32.totalorder %s126, %s127
    %p139 = scmp.eq.s32.totalorder %s17, 1
    %p140 = por %p138, %p139
    %p142 = scmp.ne.s32.totalorder %s127, %s141
    %p143 = scmp.eq.s32.totalorder %s17, 0
    %p144 = por %p142, %p143
    %s145 = ssub.s32 1, %s19
    %s146 = ssub.s32 1, %s26
    %s147 = ssub.s32 %s145, %s146
    %s148 = ssub.s32 %s18, %s30
    %s149 = sor.u32 %s147, %s148
    %p150 = scmp.eq.s32.totalorder %s149, 0
    %s152 = sadd.s32 %s151, 1
    %s153 = scalar_select %p150, %s151, %s152
    %p156 = pneg %p150
    %p157 = scmp.eq.s32.totalorder %s11, 1
    %p158 = por %p156, %p157
    %p159 = scmp.ne.s32.totalorder %s151, %s154
    %p160 = scmp.eq.s32.totalorder %s11, 0
    %p161 = por %p159, %p160
    %p162 = scmp.ne.s32.totalorder %s151, %s154
    %p163 = scmp.eq.s32.totalorder %s16, 1
    %p164 = por %p162, %p163
    %p165 = scmp.ne.s32.totalorder %s154, %s155
    %p166 = scmp.eq.s32.totalorder %s16, 0
    %p167 = por %p165, %p166
    %p168 = scmp.ne.s32.totalorder %s154, %s155
    %p169 = scmp.eq.s32.totalorder %s17, 1
    %p170 = por %p168, %p169
    %p172 = scmp.ne.s32.totalorder %s155, %s171
    %p173 = scmp.eq.s32.totalorder %s17, 0
    %p174 = por %p172, %p173
    %p175 = scmp.le.s32.totalorder 1, %s11
    %p176 = scmp.lt.s32.totalorder %s11, 3
    %p177 = pnand %p175, %p176
    %p178 = pneg %p177
    // Predicated region
    $region9: #{bigru_for_srl_forward.5} parent=5 // pred_check
      _
    $region10: #{bigru_for_srl_forward.5} parent=5 // pred_check_branch
      %180 = sbr.rel (%p177) target = $region12
    $region11: #{bigru_for_srl_forward.5} parent=5 // pred_region
      %s181 = ssub.s32 %s11, 1
      // Predicated region
      $region13: #{bigru_for_srl_forward.5} parent=11 // pred_check
        %p182 = pneg %p74
      $region14: #{bigru_for_srl_forward.5} parent=11 // pred_check_branch
        %184 = sbr.rel (%p182) target = $region16
      $region15: #{bigru_for_srl_forward.5} parent=11 // pred_region
        _
      $region16: #{bigru_for_srl_forward.5} parent=11 // pred_fallthru
        _
      // Predicated region
      $region17: #{bigru_for_srl_forward.5} parent=11 // pred_check
        %p185 = pneg %p95
      $region18: #{bigru_for_srl_forward.5} parent=11 // pred_check_branch
        %187 = sbr.rel (%p185) target = $region20
      $region19: #{bigru_for_srl_forward.5} parent=11 // pred_region
        _
      $region20: #{bigru_for_srl_forward.5} parent=11 // pred_fallthru
        _
      // Predicated region
      $region21: #{bigru_for_srl_forward.5} parent=11 // pred_check
        %p188 = pneg %p116
      $region22: #{bigru_for_srl_forward.5} parent=11 // pred_check_branch
        %190 = sbr.rel (%p188) target = $region24
      $region23: #{bigru_for_srl_forward.5} parent=11 // pred_region
        _
      $region24: #{bigru_for_srl_forward.5} parent=11 // pred_fallthru
        _
      // Predicated region
      $region25: #{bigru_for_srl_forward.5} parent=11 // pred_check
        %p191 = pneg %p137
      $region26: #{bigru_for_srl_forward.5} parent=11 // pred_check_branch
        %193 = sbr.rel (%p191) target = $region28
      $region27: #{bigru_for_srl_forward.5} parent=11 // pred_region
        _
      $region28: #{bigru_for_srl_forward.5} parent=11 // pred_fallthru
        _
    $region12: #{bigru_for_srl_forward.5} parent=5 // pred_fallthru
      _
    %p194 = scmp.lt.s32.totalorder %s11, 2
    // Predicated region
    $region29: #{bigru_for_srl_forward.5} parent=5 // pred_check
      %p195 = pneg %p194
    $region30: #{bigru_for_srl_forward.5} parent=5 // pred_check_branch
      %197 = sbr.rel (%p195) target = $region32
    $region31: #{bigru_for_srl_forward.5} parent=5 // pred_region
      // Predicated region
      $region33: #{bigru_for_srl_forward.5} parent=31 // pred_check
        %p198 = pneg %p47
      $region34: #{bigru_for_srl_forward.5} parent=31 // pred_check_branch
        %200 = sbr.rel (%p198) target = $region36
      $region35: #{bigru_for_srl_forward.5} parent=31 // pred_region
        %s201 = ssub.s32 1, %s19
        %s202 = smul.u32 4, %s201
        %s203 = smul.u32 2, %s18
        %p204 = scmp.lt.s32.totalorder %s202, 7
        %s205 = scalar_select %p204, %s202, 7
        %p206 = scmp.lt.s32.totalorder %s203, 1
        %s207 = scalar_select %p206, %s203, 1
        %s208 = smul.addr %s205, 2
        %s209 = sadd.s32 %s207, %s208
        %s210 = smul.addr %s209, 4
        %s211 = scalar_lea.vmem %s0, %s210
        %s212 = ssub.s32 1, %s19
        %s213 = smul.u32 4, %s212
        %s214 = smul.u32 2, %s18
      $region36: #{bigru_for_srl_forward.5} parent=31 // pred_fallthru
        _
    $region32: #{bigru_for_srl_forward.5} parent=5 // pred_fallthru
      _
    %p215 = scmp.le.s32.totalorder 1, %s11
    %p216 = scmp.lt.s32.totalorder %s11, 3
    %p217 = pnand %p215, %p216
    %p218 = pneg %p217
    // Predicated region
    $region37: #{bigru_for_srl_forward.5} parent=5 // pred_check
      _
    $region38: #{bigru_for_srl_forward.5} parent=5 // pred_check_branch
      %220 = sbr.rel (%p217) target = $region40
    $region39: #{bigru_for_srl_forward.5} parent=5 // pred_region
      %s221 = ssub.s32 %s11, 1
      %s222 = ssub.s32 1, %s21
      %s223 = smul.u32 4, %s222
      %s224 = smul.u32 2, %s20
      %p225 = scmp.lt.s32.totalorder %s223, 7
      %s226 = scalar_select %p225, %s223, 7
      %p227 = scmp.lt.s32.totalorder %s224, 1
      %s228 = scalar_select %p227, %s224, 1
      %s229 = smul.addr %s226, 2
      %s230 = sadd.s32 %s228, %s229
      %s231 = smul.addr %s230, 4
      %s232 = scalar_lea.vmem %s0, %s231
      %p233 = pneg %p53
      %p234 = pneg %p50
      %p235 = pneg %p74
      %p236 = pneg %p71
      %p237 = pneg %p95
      %p238 = pneg %p92
      %p239 = pneg %p116
      %p240 = pneg %p113
      %p241 = pneg %p137
      %p242 = pneg %p134
      %p243 = pneg %p167
      %p244 = pneg %p164
      %s245 = ssub.s32 1, %s21
      %s246 = smul.u32 4, %s245
      %s247 = smul.u32 2, %s20
      %p248 = scmp.lt.s32.totalorder %s246, 7
      %s249 = scalar_select %p248, %s246, 7
      %p250 = scmp.lt.s32.totalorder %s247, 1
      %s251 = scalar_select %p250, %s247, 1
      %s252 = smul.addr %s249, 2
      %s253 = sadd.s32 %s251, %s252
      %s254 = smul.addr %s253, 4
      %s255 = scalar_lea.vmem %s5, %s254
      %s256 = ssub.s32 1, %s21
      %s257 = smul.u32 4, %s256
      %s258 = smul.u32 2, %s20
      %p259 = scmp.lt.s32.totalorder %s257, 7
      %s260 = scalar_select %p259, %s257, 7
      %p261 = scmp.lt.s32.totalorder %s258, 1
      %s262 = scalar_select %p261, %s258, 1
      %s263 = smul.addr %s260, 2
      %s264 = sadd.s32 %s262, %s263
      %s265 = smul.addr %s264, 4
      %s266 = scalar_lea.vmem %s0, %s265
      %s267 = ssub.s32 1, %s21
      %s268 = smul.u32 4, %s267
      %s269 = smul.u32 2, %s20
      %s270 = ssub.s32 1, %s21
      %s271 = smul.u32 4, %s270
      %s272 = smul.u32 2, %s20
      %p273 = scmp.lt.s32.totalorder %s271, 7
      %s274 = scalar_select %p273, %s271, 7
      %p275 = scmp.lt.s32.totalorder %s272, 1
      %s276 = scalar_select %p275, %s272, 1
      %s277 = smul.addr %s274, 2
      %s278 = sadd.s32 %s276, %s277
      %s279 = smul.addr %s278, 4
      %s280 = scalar_lea.vmem %s5, %s279
      %s281 = ssub.s32 1, %s21
      %s282 = smul.u32 4, %s281
      %s283 = smul.u32 2, %s20
      %p284 = scmp.eq.s32.totalorder %s21, 0
      // Predicated region
      $region41: #{bigru_for_srl_forward.5} parent=39 // pred_check
        %p285 = pneg %p284
      $region42: #{bigru_for_srl_forward.5} parent=39 // pred_check_branch
        %287 = sbr.rel (%p285) target = $region44
      $region43: #{bigru_for_srl_forward.5} parent=39 // pred_region
        %288 = vst [vmem:[#allocation3] sm:$0xff] 0.0
        %289 = vst [vmem:[#allocation3 + $0x8] sm:$0xff] 0.0
      $region44: #{bigru_for_srl_forward.5} parent=39 // pred_fallthru
        _
      %v290 = vld [vmem:[%s266] sm:$0xf]
      %v291 = vld [vmem:[%s266 + $0x4] sm:$0xf]
      %v292 = vld [vmem:[%s266 + $0x8] sm:$0xf]
      %v293 = vld [vmem:[%s266 + $0xc] sm:$0xf]
      %v294 = vld [vmem:[%s266 + $0x10] sm:$0xf]
      %v295 = vld [vmem:[%s266 + $0x14] sm:$0xf]
      %v296 = vld [vmem:[%s266 + $0x18] sm:$0xf]
      %v297 = vld [vmem:[%s266 + $0x1c] sm:$0xf]
      %v298 = vld [vmem:[%s1] sm:$0xff]
      %v299 = vld [vmem:[%s1 + $0x8] sm:$0xf]
      %v300 = vld [vmem:[%s1 + $0xc] sm:$0xff]
      %v301 = vld [vmem:[%s1 + $0x14] sm:$0xf]
      %v302 = vld [vmem:[%s1 + $0x18] sm:$0xff]
      %v303 = vld [vmem:[%s1 + $0x20] sm:$0xf]
      %v304 = vld [vmem:[%s1 + $0x24] sm:$0xff]
      %v305 = vld [vmem:[%s1 + $0x2c] sm:$0xf]
      %v306 = vld [vmem:[%s1 + $0x30] sm:$0xff]
      %v307 = vld [vmem:[%s1 + $0x38] sm:$0xf]
      %v308 = vld [vmem:[%s1 + $0x3c] sm:$0xff]
      %v309 = vld [vmem:[%s1 + $0x44] sm:$0xf]
      %v310 = vld [vmem:[%s1 + $0x48] sm:$0xff]
      %v311 = vld [vmem:[%s1 + $0x50] sm:$0xf]
      %v312 = vld [vmem:[%s1 + $0x54] sm:$0xff]
      %v313 = vld [vmem:[%s1 + $0x5c] sm:$0xf]
      %v314 = vld [vmem:[%s1 + $0x60] sm:$0xff]
      %v315 = vld [vmem:[%s1 + $0x68] sm:$0xf]
      %v316 = vld [vmem:[%s1 + $0x6c] sm:$0xff]
      %v317 = vld [vmem:[%s1 + $0x74] sm:$0xf]
      %v318 = vld [vmem:[%s1 + $0x78] sm:$0xff]
      %v319 = vld [vmem:[%s1 + $0x80] sm:$0xf]
      %v320 = vld [vmem:[%s1 + $0x84] sm:$0xff]
      %v321 = vld [vmem:[%s1 + $0x8c] sm:$0xf]
      %v322 = vld [vmem:[%s1 + $0x90] sm:$0xff]
      %v323 = vld [vmem:[%s1 + $0x98] sm:$0xf]
      %v324 = vld [vmem:[%s1 + $0x9c] sm:$0xff]
      %v325 = vld [vmem:[%s1 + $0xa4] sm:$0xf]
      %v326 = vld [vmem:[%s1 + $0xa8] sm:$0xff]
      %v327 = vld [vmem:[%s1 + $0xb0] sm:$0xf]
      %v328 = vld [vmem:[%s1 + $0xb4] sm:$0xff]
      %v329 = vld [vmem:[%s1 + $0xbc] sm:$0xf]
      %v330 = vld [vmem:[%s3] sm:$0x7]
      %v332 = vperm.slane %v330, 0
      %v333 = vperm.slane %v330, 1
      %v334 = vperm.slane %v330, 2
      %v346 = vunpack.c.l.b16 %v290
      %v347 = vunpack.c.l.b16 %v291
      %v348 = vunpack.c.l.b16 %v292
      %v349 = vunpack.c.l.b16 %v293
      %v350 = vunpack.c.l.b16 %v294
      %v351 = vunpack.c.l.b16 %v295
      %v352 = vunpack.c.l.b16 %v296
      %v353 = vunpack.c.l.b16 %v297
      %v354 = vpack.c.b16 %v347, %v346
      %v355 = vpack.c.b16 %v349, %v348
      %v356 = vpack.c.b16 %v351, %v350
      %v357 = vpack.c.b16 %v353, %v352
      %v394 = vunpack.c.l.b16 %v298
      %v395 = vunpack.c.h.b16 %v298
      %v396 = vunpack.c.l.b16 %v299
      %v397 = vunpack.c.l.b16 %v300
      %v398 = vunpack.c.h.b16 %v300
      %v399 = vunpack.c.l.b16 %v301
      %v400 = vunpack.c.l.b16 %v302
      %v401 = vunpack.c.h.b16 %v302
      %v402 = vunpack.c.l.b16 %v303
      %v403 = vunpack.c.l.b16 %v304
      %v404 = vunpack.c.h.b16 %v304
      %v405 = vunpack.c.l.b16 %v305
      %v406 = vunpack.c.l.b16 %v306
      %v407 = vunpack.c.h.b16 %v306
      %v408 = vunpack.c.l.b16 %v307
      %v409 = vunpack.c.l.b16 %v308
      %v410 = vunpack.c.h.b16 %v308
      %v411 = vunpack.c.l.b16 %v309
      %v412 = vunpack.c.l.b16 %v310
      %v413 = vunpack.c.h.b16 %v310
      %v414 = vunpack.c.l.b16 %v311
      %v415 = vunpack.c.l.b16 %v312
      %v416 = vunpack.c.h.b16 %v312
      %v417 = vunpack.c.l.b16 %v313
      %v418 = vunpack.c.l.b16 %v314
      %v419 = vunpack.c.h.b16 %v314
      %v420 = vunpack.c.l.b16 %v315
      %v421 = vunpack.c.l.b16 %v316
      %v422 = vunpack.c.h.b16 %v316
      %v423 = vunpack.c.l.b16 %v317
      %v424 = vunpack.c.l.b16 %v318
      %v425 = vunpack.c.h.b16 %v318
      %v426 = vunpack.c.l.b16 %v319
      %v427 = vunpack.c.l.b16 %v320
      %v428 = vunpack.c.h.b16 %v320
      %v429 = vunpack.c.l.b16 %v321
      %v430 = vunpack.c.l.b16 %v322
      %v431 = vunpack.c.h.b16 %v322
      %v432 = vunpack.c.l.b16 %v323
      %v433 = vunpack.c.l.b16 %v324
      %v434 = vunpack.c.h.b16 %v324
      %v435 = vunpack.c.l.b16 %v325
      %v436 = vunpack.c.l.b16 %v326
      %v437 = vunpack.c.h.b16 %v326
      %v438 = vunpack.c.l.b16 %v327
      %v439 = vunpack.c.l.b16 %v328
      %v440 = vunpack.c.h.b16 %v328
      %v441 = vunpack.c.l.b16 %v329
      %v442 = vpack.c.b16 %v397, %v394
      %v443 = vpack.c.b16 %v398, %v395
      %v444 = vpack.c.b16 %v399, %v396
      %v445 = vpack.c.b16 %v403, %v400
      %v446 = vpack.c.b16 %v404, %v401
      %v447 = vpack.c.b16 %v405, %v402
      %v448 = vpack.c.b16 %v409, %v406
      %v449 = vpack.c.b16 %v410, %v407
      %v450 = vpack.c.b16 %v411, %v408
      %v451 = vpack.c.b16 %v415, %v412
      %v452 = vpack.c.b16 %v416, %v413
      %v453 = vpack.c.b16 %v417, %v414
      %v454 = vpack.c.b16 %v421, %v418
      %v455 = vpack.c.b16 %v422, %v419
      %v456 = vpack.c.b16 %v423, %v420
      %v457 = vpack.c.b16 %v427, %v424
      %v458 = vpack.c.b16 %v428, %v425
      %v459 = vpack.c.b16 %v429, %v426
      %v460 = vpack.c.b16 %v433, %v430
      %v461 = vpack.c.b16 %v434, %v431
      %v462 = vpack.c.b16 %v435, %v432
      %v463 = vpack.c.b16 %v439, %v436
      %v464 = vpack.c.b16 %v440, %v437
      %v465 = vpack.c.b16 %v441, %v438
      %490 = vmatpush.bf16.msra.mxu0 %v463
      %491 = vmatpush.bf16.msra.mxu0 %v460
      %492 = vmatpush.bf16.msra.mxu0 %v457
      %493 = vmatpush.bf16.msra.mxu0 %v454
      %494 = vmatpush.bf16.msra.mxu0 %v451
      %495 = vmatpush.bf16.msra.mxu0 %v448
      %496 = vmatpush.bf16.msra.mxu0 %v445
      %497 = vmatpush.bf16.msra.mxu0 %v442
      %498 = vmatmul.bf16.gmra.mxu0 %v354
      %v499 = vpop.f32.mrf.mxu0
      %v500 = vadd.f32 %v332, %v499
      %v501 = vpop.f32.mrf.mxu0
      %v502 = vadd.f32 %v332, %v501
      %503 = vmatmul.bf16.gmra.mxu0 %v355
      %v504 = vpop.f32.mrf.mxu0
      %v505 = vadd.f32 %v332, %v504
      %v506 = vpop.f32.mrf.mxu0
      %v507 = vadd.f32 %v332, %v506
      %508 = vmatmul.bf16.gmra.mxu0 %v356
      %v509 = vpop.f32.mrf.mxu0
      %v510 = vadd.f32 %v332, %v509
      %v511 = vpop.f32.mrf.mxu0
      %v512 = vadd.f32 %v332, %v511
      %513 = vmatmul.bf16.gmra.mxu0 %v357
      %v514 = vpop.f32.mrf.mxu0
      %v515 = vadd.f32 %v332, %v514
      %v516 = vpop.f32.mrf.mxu0
      %v517 = vadd.f32 %v332, %v516
      %518 = vdwg.mxu0
      %519 = vmatpush.bf16.msra.mxu0 %v464
      %520 = vmatpush.bf16.msra.mxu0 %v461
      %521 = vmatpush.bf16.msra.mxu0 %v458
      %522 = vmatpush.bf16.msra.mxu0 %v455
      %523 = vmatpush.bf16.msra.mxu0 %v452
      %524 = vmatpush.bf16.msra.mxu0 %v449
      %525 = vmatpush.bf16.msra.mxu0 %v446
      %526 = vmatpush.bf16.msra.mxu0 %v443
      %527 = vmatmul.bf16.gmra.mxu0 %v354
      %v528 = vpop.f32.mrf.mxu0
      %v529 = vadd.f32 %v333, %v528
      %v530 = vpop.f32.mrf.mxu0
      %v531 = vadd.f32 %v333, %v530
      %532 = vmatmul.bf16.gmra.mxu0 %v355
      %v533 = vpop.f32.mrf.mxu0
      %v534 = vadd.f32 %v333, %v533
      %v535 = vpop.f32.mrf.mxu0
      %v536 = vadd.f32 %v333, %v535
      %537 = vmatmul.bf16.gmra.mxu0 %v356
      %v538 = vpop.f32.mrf.mxu0
      %v539 = vadd.f32 %v333, %v538
      %v540 = vpop.f32.mrf.mxu0
      %v541 = vadd.f32 %v333, %v540
      %542 = vmatmul.bf16.gmra.mxu0 %v357
      %v543 = vpop.f32.mrf.mxu0
      %v544 = vadd.f32 %v333, %v543
      %v545 = vpop.f32.mrf.mxu0
      %v546 = vadd.f32 %v333, %v545
      %547 = vdwg.mxu0
      %548 = vmatpush.bf16.msra.mxu0 %v465
      %549 = vmatpush.bf16.msra.mxu0 %v462
      %550 = vmatpush.bf16.msra.mxu0 %v459
      %551 = vmatpush.bf16.msra.mxu0 %v456
      %552 = vmatpush.bf16.msra.mxu0 %v453
      %553 = vmatpush.bf16.msra.mxu0 %v450
      %554 = vmatpush.bf16.msra.mxu0 %v447
      %555 = vmatpush.bf16.msra.mxu0 %v444
      %556 = vmatmul.bf16.gmra.mxu0 %v354
      %v557 = vpop.f32.mrf.mxu0
      %v558 = vadd.f32 %v334, %v557
      %v559 = vpop.f32.mrf.mxu0
      %v560 = vadd.f32 %v334, %v559
      %561 = vmatmul.bf16.gmra.mxu0 %v355
      %v562 = vpop.f32.mrf.mxu0
      %v563 = vadd.f32 %v334, %v562
      %v564 = vpop.f32.mrf.mxu0
      %v565 = vadd.f32 %v334, %v564
      %566 = vmatmul.bf16.gmra.mxu0 %v356
      %v567 = vpop.f32.mrf.mxu0
      %v568 = vadd.f32 %v334, %v567
      %v569 = vpop.f32.mrf.mxu0
      %v570 = vadd.f32 %v334, %v569
      %571 = vmatmul.bf16.gmra.mxu0 %v357
      %v572 = vpop.f32.mrf.mxu0
      %v573 = vadd.f32 %v334, %v572
      %v574 = vpop.f32.mrf.mxu0
      %v575 = vadd.f32 %v334, %v574
      %576 = vdwg.mxu0
      %577 = vst [vmem:[#allocation2] sm:$0xff] %v500
      %578 = vst [vmem:[#allocation2 + $0x8] sm:$0xff] %v529
      %579 = vst [vmem:[#allocation2 + $0x10] sm:$0xff] %v558
      %580 = vst [vmem:[#allocation2 + $0x18] sm:$0xff] %v502
      %581 = vst [vmem:[#allocation2 + $0x20] sm:$0xff] %v531
      %582 = vst [vmem:[#allocation2 + $0x28] sm:$0xff] %v560
      %583 = vst [vmem:[#allocation2 + $0x30] sm:$0xff] %v505
      %584 = vst [vmem:[#allocation2 + $0x38] sm:$0xff] %v534
      %585 = vst [vmem:[#allocation2 + $0x40] sm:$0xff] %v563
      %586 = vst [vmem:[#allocation2 + $0x48] sm:$0xff] %v507
      %587 = vst [vmem:[#allocation2 + $0x50] sm:$0xff] %v536
      %588 = vst [vmem:[#allocation2 + $0x58] sm:$0xff] %v565
      %589 = vst [vmem:[#allocation2 + $0x60] sm:$0xff] %v510
      %590 = vst [vmem:[#allocation2 + $0x68] sm:$0xff] %v539
      %591 = vst [vmem:[#allocation2 + $0x70] sm:$0xff] %v568
      %592 = vst [vmem:[#allocation2 + $0x78] sm:$0xff] %v512
      %593 = vst [vmem:[#allocation2 + $0x80] sm:$0xff] %v541
      %594 = vst [vmem:[#allocation2 + $0x88] sm:$0xff] %v570
      %595 = vst [vmem:[#allocation2 + $0x90] sm:$0xff] %v515
      %596 = vst [vmem:[#allocation2 + $0x98] sm:$0xff] %v544
      %597 = vst [vmem:[#allocation2 + $0xa0] sm:$0xff] %v573
      %598 = vst [vmem:[#allocation2 + $0xa8] sm:$0xff] %v517
      %599 = vst [vmem:[#allocation2 + $0xb0] sm:$0xff] %v546
      %600 = vst [vmem:[#allocation2 + $0xb8] sm:$0xff] %v575
      %v601 = vld [vmem:[%s2] sm:$0xff]
      %v602 = vld [vmem:[%s2 + $0x8] sm:$0xf]
      %v603 = vld [vmem:[%s2 + $0xc] sm:$0xff]
      %v604 = vld [vmem:[%s2 + $0x14] sm:$0xf]
      %v605 = vld [vmem:[%s2 + $0x18] sm:$0xff]
      %v606 = vld [vmem:[%s2 + $0x20] sm:$0xf]
      %v607 = vld [vmem:[%s2 + $0x24] sm:$0xff]
      %v608 = vld [vmem:[%s2 + $0x2c] sm:$0xf]
      %v609 = vld [vmem:[%s2 + $0x30] sm:$0xff]
      %v610 = vld [vmem:[%s2 + $0x38] sm:$0xf]
      %v611 = vld [vmem:[%s2 + $0x3c] sm:$0xff]
      %v612 = vld [vmem:[%s2 + $0x44] sm:$0xf]
      %v613 = vld [vmem:[%s2 + $0x48] sm:$0xff]
      %v614 = vld [vmem:[%s2 + $0x50] sm:$0xf]
      %v615 = vld [vmem:[%s2 + $0x54] sm:$0xff]
      %v616 = vld [vmem:[%s2 + $0x5c] sm:$0xf]
      %v617 = vld [vmem:[%s2 + $0x60] sm:$0xff]
      %v618 = vld [vmem:[%s2 + $0x68] sm:$0xf]
      %v619 = vld [vmem:[%s2 + $0x6c] sm:$0xff]
      %v620 = vld [vmem:[%s2 + $0x74] sm:$0xf]
      %v621 = vld [vmem:[%s2 + $0x78] sm:$0xff]
      %v622 = vld [vmem:[%s2 + $0x80] sm:$0xf]
      %v623 = vld [vmem:[%s2 + $0x84] sm:$0xff]
      %v624 = vld [vmem:[%s2 + $0x8c] sm:$0xf]
      %v625 = vld [vmem:[%s2 + $0x90] sm:$0xff]
      %v626 = vld [vmem:[%s2 + $0x98] sm:$0xf]
      %v627 = vld [vmem:[%s2 + $0x9c] sm:$0xff]
      %v628 = vld [vmem:[%s2 + $0xa4] sm:$0xf]
      %v629 = vld [vmem:[%s2 + $0xa8] sm:$0xff]
      %v630 = vld [vmem:[%s2 + $0xb0] sm:$0xf]
      %v631 = vld [vmem:[%s2 + $0xb4] sm:$0xff]
      %v632 = vld [vmem:[%s2 + $0xbc] sm:$0xf]
      %v633 = vld [vmem:[%s4] sm:$0x1]
      %v635 = vperm.slane %v633, 0
      %v637 = vld [vmem:[#allocation3] sm:$0xff]
      %v638 = vld [vmem:[#allocation3 + $0x8] sm:$0xff]
      %s639 = scalar_lea.vmem [#allocation2], 144
      %v640 = vld [vmem:[%s639] sm:$0xff]
      %v641 = vld [vmem:[%s639 + $0x8] sm:$0xff]
      %v642 = vld [vmem:[%s639 + $0x10] sm:$0xff]
      %v643 = vld [vmem:[%s639 + $0x18] sm:$0xff]
      %v644 = vld [vmem:[%s639 + $0x20] sm:$0xff]
      %v645 = vld [vmem:[%s639 + $0x28] sm:$0xff]
      %v646 = vpack.c.bf16 %v638, %v637
      %v679 = vunpack.c.l.b16 %v601
      %v680 = vunpack.c.h.b16 %v601
      %v681 = vunpack.c.l.b16 %v602
      %v682 = vunpack.c.l.b16 %v603
      %v683 = vunpack.c.h.b16 %v603
      %v684 = vunpack.c.l.b16 %v604
      %v685 = vunpack.c.l.b16 %v605
      %v686 = vunpack.c.h.b16 %v605
      %v687 = vunpack.c.l.b16 %v606
      %v688 = vunpack.c.l.b16 %v607
      %v689 = vunpack.c.h.b16 %v607
      %v690 = vunpack.c.l.b16 %v608
      %v691 = vunpack.c.l.b16 %v609
      %v692 = vunpack.c.h.b16 %v609
      %v693 = vunpack.c.l.b16 %v610
      %v694 = vunpack.c.l.b16 %v611
      %v695 = vunpack.c.h.b16 %v611
      %v696 = vunpack.c.l.b16 %v612
      %v697 = vunpack.c.l.b16 %v613
      %v698 = vunpack.c.h.b16 %v613
      %v699 = vunpack.c.l.b16 %v614
      %v700 = vunpack.c.l.b16 %v615
      %v701 = vunpack.c.h.b16 %v615
      %v702 = vunpack.c.l.b16 %v616
      %v703 = vunpack.c.l.b16 %v617
      %v704 = vunpack.c.h.b16 %v617
      %v705 = vunpack.c.l.b16 %v618
      %v706 = vunpack.c.l.b16 %v619
      %v707 = vunpack.c.h.b16 %v619
      %v708 = vunpack.c.l.b16 %v620
      %v709 = vunpack.c.l.b16 %v621
      %v710 = vunpack.c.h.b16 %v621
      %v711 = vunpack.c.l.b16 %v622
      %v712 = vunpack.c.l.b16 %v623
      %v713 = vunpack.c.h.b16 %v623
      %v714 = vunpack.c.l.b16 %v624
      %v715 = vunpack.c.l.b16 %v625
      %v716 = vunpack.c.h.b16 %v625
      %v717 = vunpack.c.l.b16 %v626
      %v718 = vunpack.c.l.b16 %v627
      %v719 = vunpack.c.h.b16 %v627
      %v720 = vunpack.c.l.b16 %v628
      %v721 = vunpack.c.l.b16 %v629
      %v722 = vunpack.c.h.b16 %v629
      %v723 = vunpack.c.l.b16 %v630
      %v724 = vunpack.c.l.b16 %v631
      %v725 = vunpack.c.h.b16 %v631
      %v726 = vunpack.c.l.b16 %v632
      %v727 = vpack.c.b16 %v682, %v679
      %v728 = vpack.c.b16 %v683, %v680
      %v729 = vpack.c.b16 %v684, %v681
      %v730 = vpack.c.b16 %v688, %v685
      %v731 = vpack.c.b16 %v689, %v686
      %v732 = vpack.c.b16 %v690, %v687
      %v733 = vpack.c.b16 %v694, %v691
      %v734 = vpack.c.b16 %v695, %v692
      %v735 = vpack.c.b16 %v696, %v693
      %v736 = vpack.c.b16 %v700, %v697
      %v737 = vpack.c.b16 %v701, %v698
      %v738 = vpack.c.b16 %v702, %v699
      %v739 = vpack.c.b16 %v706, %v703
      %v740 = vpack.c.b16 %v707, %v704
      %v741 = vpack.c.b16 %v708, %v705
      %v742 = vpack.c.b16 %v712, %v709
      %v743 = vpack.c.b16 %v713, %v710
      %v744 = vpack.c.b16 %v714, %v711
      %v745 = vpack.c.b16 %v718, %v715
      %v746 = vpack.c.b16 %v719, %v716
      %v747 = vpack.c.b16 %v720, %v717
      %v748 = vpack.c.b16 %v724, %v721
      %v749 = vpack.c.b16 %v725, %v722
      %v750 = vpack.c.b16 %v726, %v723
      %775 = vmatpush.bf16.msra.mxu0 %v748
      %776 = vmatpush.bf16.msra.mxu0 %v745
      %777 = vmatpush.bf16.msra.mxu0 %v742
      %778 = vmatpush.bf16.msra.mxu0 %v739
      %779 = vmatpush.bf16.msra.mxu0 %v736
      %780 = vmatpush.bf16.msra.mxu0 %v733
      %781 = vmatpush.bf16.msra.mxu0 %v730
      %782 = vmatpush.bf16.msra.mxu0 %v727
      %783 = vmatmul.bf16.gmra.mxu0 %v646
      %v784 = vpop.f32.mrf.mxu0
      %v785 = vadd.f32 0.0, %v784
      %v786 = vpop.f32.mrf.mxu0
      %v787 = vadd.f32 0.0, %v786
      %788 = vdwg.mxu0
      %789 = vmatpush.bf16.msra.mxu0 %v749
      %790 = vmatpush.bf16.msra.mxu0 %v746
      %791 = vmatpush.bf16.msra.mxu0 %v743
      %792 = vmatpush.bf16.msra.mxu0 %v740
      %793 = vmatpush.bf16.msra.mxu0 %v737
      %794 = vmatpush.bf16.msra.mxu0 %v734
      %795 = vmatpush.bf16.msra.mxu0 %v731
      %796 = vmatpush.bf16.msra.mxu0 %v728
      %797 = vmatmul.bf16.gmra.mxu0 %v646
      %v798 = vpop.f32.mrf.mxu0
      %v799 = vadd.f32 0.0, %v798
      %v800 = vpop.f32.mrf.mxu0
      %v801 = vadd.f32 0.0, %v800
      %802 = vdwg.mxu0
      %803 = vmatpush.bf16.msra.mxu0 %v750
      %804 = vmatpush.bf16.msra.mxu0 %v747
      %805 = vmatpush.bf16.msra.mxu0 %v744
      %806 = vmatpush.bf16.msra.mxu0 %v741
      %807 = vmatpush.bf16.msra.mxu0 %v738
      %808 = vmatpush.bf16.msra.mxu0 %v735
      %809 = vmatpush.bf16.msra.mxu0 %v732
      %810 = vmatpush.bf16.msra.mxu0 %v729
      %811 = vmatmul.bf16.gmra.mxu0 %v646
      %v812 = vpop.f32.mrf.mxu0
      %v813 = vadd.f32 0.0, %v812
      %v814 = vpop.f32.mrf.mxu0
      %v815 = vadd.f32 0.0, %v814
      %816 = vdwg.mxu0
      %v817 = vadd.f32 %v640, %v785
      %v818 = vadd.f32 %v643, %v787
      %v819 = vxor.u32 %v817, 2147483648
      %v820 = vxor.u32 %v818, 2147483648
      %v821 = vmul.f32 %v819, 1.442695
      %v822 = vpow.pop %v821
      %v823 = vmul.f32 %v820, 1.442695
      %v824 = vpow.pop %v823
      %v825 = vadd.f32 %v822, 1.0
      %v826 = vadd.f32 %v824, 1.0
      %v827 = vrcp.pop %v825
      %v828 = vmul.f32 %v825, %v827
      %v829 = vsub.f32 1.0, %v828
      %v830 = vmul.f32 %v827, %v829
      %v831 = vadd.f32 %v827, %v830
      %vm832 = vweird.f32 %v825
      %vm833 = vweird.f32 %v827
      %vm834 = vmor %vm832, %vm833
      %v835 = vsel %vm834, %v827, %v831
      %v836 = vand.u32 2147483647, %v825
      %vm837 = vcmp.eq.f32.partialorder %v836, 8.507059e+37
      %v838 = vand.u32 %v825, 2147483648
      %v839 = vor.u32 1.1754944e-38, %v838
      %v840 = vsel %vm837, %v839, %v835
      %v841 = vmul.f32 1.0, %v840
      %v842 = vrcp.pop %v826
      %v843 = vmul.f32 %v826, %v842
      %v844 = vsub.f32 1.0, %v843
      %v845 = vmul.f32 %v842, %v844
      %v846 = vadd.f32 %v842, %v845
      %vm847 = vweird.f32 %v826
      %vm848 = vweird.f32 %v842
      %vm849 = vmor %vm847, %vm848
      %v850 = vsel %vm849, %v842, %v846
      %v851 = vand.u32 2147483647, %v826
      %vm852 = vcmp.eq.f32.partialorder %v851, 8.507059e+37
      %v853 = vand.u32 %v826, 2147483648
      %v854 = vor.u32 1.1754944e-38, %v853
      %v855 = vsel %vm852, %v854, %v850
      %v856 = vmul.f32 1.0, %v855
      %v857 = vadd.f32 %v641, %v799
      %v858 = vadd.f32 %v644, %v801
      %v859 = vxor.u32 %v857, 2147483648
      %v860 = vxor.u32 %v858, 2147483648
      %v861 = vmul.f32 %v859, 1.442695
      %v862 = vpow.pop %v861
      %v863 = vmul.f32 %v860, 1.442695
      %v864 = vpow.pop %v863
      %v865 = vadd.f32 %v862, 1.0
      %v866 = vadd.f32 %v864, 1.0
      %v867 = vrcp.pop %v865
      %v868 = vmul.f32 %v865, %v867
      %v869 = vsub.f32 1.0, %v868
      %v870 = vmul.f32 %v867, %v869
      %v871 = vadd.f32 %v867, %v870
      %vm872 = vweird.f32 %v865
      %vm873 = vweird.f32 %v867
      %vm874 = vmor %vm872, %vm873
      %v875 = vsel %vm874, %v867, %v871
      %v876 = vand.u32 2147483647, %v865
      %vm877 = vcmp.eq.f32.partialorder %v876, 8.507059e+37
      %v878 = vand.u32 %v865, 2147483648
      %v879 = vor.u32 1.1754944e-38, %v878
      %v880 = vsel %vm877, %v879, %v875
      %v881 = vmul.f32 1.0, %v880
      %v882 = vrcp.pop %v866
      %v883 = vmul.f32 %v866, %v882
      %v884 = vsub.f32 1.0, %v883
      %v885 = vmul.f32 %v882, %v884
      %v886 = vadd.f32 %v882, %v885
      %vm887 = vweird.f32 %v866
      %vm888 = vweird.f32 %v882
      %vm889 = vmor %vm887, %vm888
      %v890 = vsel %vm889, %v882, %v886
      %v891 = vand.u32 2147483647, %v866
      %vm892 = vcmp.eq.f32.partialorder %v891, 8.507059e+37
      %v893 = vand.u32 %v866, 2147483648
      %v894 = vor.u32 1.1754944e-38, %v893
      %v895 = vsel %vm892, %v894, %v890
      %v896 = vmul.f32 1.0, %v895
      %v897 = vadd.f32 %v813, %v635
      %v898 = vadd.f32 %v815, %v635
      %v899 = vmul.f32 %v841, %v897
      %v900 = vmul.f32 %v856, %v898
      %v901 = vadd.f32 %v642, %v899
      %v902 = vadd.f32 %v645, %v900
      %v903 = vtanh.pop %v901
      %v904 = vtanh.pop %v902
      %v905 = vsub.f32 %v637, %v903
      %v906 = vsub.f32 %v638, %v904
      %v907 = vmul.f32 %v881, %v905
      %v908 = vmul.f32 %v896, %v906
      %v909 = vadd.f32 %v903, %v907
      %v910 = vadd.f32 %v904, %v908
      %s911 = scalar_lea.vmem %s266, 24
      %v912 = vld [vmem:[%s911] sm:$0xf]
      %v913 = vld [vmem:[%s911 + $0x4] sm:$0xf]
      %v914 = vunpack.c.l.bf16 %v912
      %v915 = vunpack.c.l.bf16 %v913
      %v916 = vadd.f32 %v909, %v914
      %v917 = vadd.f32 %v910, %v915
      %v918 = vpack.c.bf16 %v916, %v916
      %v919 = vpack.c.bf16 %v917, %v917
      %s920 = scalar_lea.vmem %s280, 24
      %921 = vst [vmem:[%s920] sm:$0xf] %v918
      %922 = vst [vmem:[%s920 + $0x4] sm:$0xf] %v919
      %s923 = scalar_lea.vmem [#allocation2], 96
      %v924 = vld [vmem:[%s923] sm:$0xff]
      %v925 = vld [vmem:[%s923 + $0x8] sm:$0xff]
      %v926 = vld [vmem:[%s923 + $0x10] sm:$0xff]
      %v927 = vld [vmem:[%s923 + $0x18] sm:$0xff]
      %v928 = vld [vmem:[%s923 + $0x20] sm:$0xff]
      %v929 = vld [vmem:[%s923 + $0x28] sm:$0xff]
      %v930 = vpack.c.bf16 %v910, %v909
      %931 = vmatpush.bf16.msra.mxu0 %v748
      %932 = vmatpush.bf16.msra.mxu0 %v745
      %933 = vmatpush.bf16.msra.mxu0 %v742
      %934 = vmatpush.bf16.msra.mxu0 %v739
      %935 = vmatpush.bf16.msra.mxu0 %v736
      %936 = vmatpush.bf16.msra.mxu0 %v733
      %937 = vmatpush.bf16.msra.mxu0 %v730
      %938 = vmatpush.bf16.msra.mxu0 %v727
      %939 = vmatmul.bf16.gmra.mxu0 %v930
      %v940 = vpop.f32.mrf.mxu0
      %v941 = vadd.f32 0.0, %v940
      %v942 = vpop.f32.mrf.mxu0
      %v943 = vadd.f32 0.0, %v942
      %944 = vdwg.mxu0
      %945 = vmatpush.bf16.msra.mxu0 %v749
      %946 = vmatpush.bf16.msra.mxu0 %v746
      %947 = vmatpush.bf16.msra.mxu0 %v743
      %948 = vmatpush.bf16.msra.mxu0 %v740
      %949 = vmatpush.bf16.msra.mxu0 %v737
      %950 = vmatpush.bf16.msra.mxu0 %v734
      %951 = vmatpush.bf16.msra.mxu0 %v731
      %952 = vmatpush.bf16.msra.mxu0 %v728
      %953 = vmatmul.bf16.gmra.mxu0 %v930
      %v954 = vpop.f32.mrf.mxu0
      %v955 = vadd.f32 0.0, %v954
      %v956 = vpop.f32.mrf.mxu0
      %v957 = vadd.f32 0.0, %v956
      %958 = vdwg.mxu0
      %959 = vmatpush.bf16.msra.mxu0 %v750
      %960 = vmatpush.bf16.msra.mxu0 %v747
      %961 = vmatpush.bf16.msra.mxu0 %v744
      %962 = vmatpush.bf16.msra.mxu0 %v741
      %963 = vmatpush.bf16.msra.mxu0 %v738
      %964 = vmatpush.bf16.msra.mxu0 %v735
      %965 = vmatpush.bf16.msra.mxu0 %v732
      %966 = vmatpush.bf16.msra.mxu0 %v729
      %967 = vmatmul.bf16.gmra.mxu0 %v930
      %v968 = vpop.f32.mrf.mxu0
      %v969 = vadd.f32 0.0, %v968
      %v970 = vpop.f32.mrf.mxu0
      %v971 = vadd.f32 0.0, %v970
      %972 = vdwg.mxu0
      %v973 = vadd.f32 %v924, %v941
      %v974 = vadd.f32 %v927, %v943
      %v975 = vxor.u32 %v973, 2147483648
      %v976 = vxor.u32 %v974, 2147483648
      %v977 = vmul.f32 %v975, 1.442695
      %v978 = vpow.pop %v977
      %v979 = vmul.f32 %v976, 1.442695
      %v980 = vpow.pop %v979
      %v981 = vadd.f32 %v978, 1.0
      %v982 = vadd.f32 %v980, 1.0
      %v983 = vrcp.pop %v981
      %v984 = vmul.f32 %v981, %v983
      %v985 = vsub.f32 1.0, %v984
      %v986 = vmul.f32 %v983, %v985
      %v987 = vadd.f32 %v983, %v986
      %vm988 = vweird.f32 %v981
      %vm989 = vweird.f32 %v983
      %vm990 = vmor %vm988, %vm989
      %v991 = vsel %vm990, %v983, %v987
      %v992 = vand.u32 2147483647, %v981
      %vm993 = vcmp.eq.f32.partialorder %v992, 8.507059e+37
      %v994 = vand.u32 %v981, 2147483648
      %v995 = vor.u32 1.1754944e-38, %v994
      %v996 = vsel %vm993, %v995, %v991
      %v997 = vmul.f32 1.0, %v996
      %v998 = vrcp.pop %v982
      %v999 = vmul.f32 %v982, %v998
      %v1000 = vsub.f32 1.0, %v999
      %v1001 = vmul.f32 %v998, %v1000
      %v1002 = vadd.f32 %v998, %v1001
      %vm1003 = vweird.f32 %v982
      %vm1004 = vweird.f32 %v998
      %vm1005 = vmor %vm1003, %vm1004
      %v1006 = vsel %vm1005, %v998, %v1002
      %v1007 = vand.u32 2147483647, %v982
      %vm1008 = vcmp.eq.f32.partialorder %v1007, 8.507059e+37
      %v1009 = vand.u32 %v982, 2147483648
      %v1010 = vor.u32 1.1754944e-38, %v1009
      %v1011 = vsel %vm1008, %v1010, %v1006
      %v1012 = vmul.f32 1.0, %v1011
      %v1013 = vadd.f32 %v925, %v955
      %v1014 = vadd.f32 %v928, %v957
      %v1015 = vxor.u32 %v1013, 2147483648
      %v1016 = vxor.u32 %v1014, 2147483648
      %v1017 = vmul.f32 %v1015, 1.442695
      %v1018 = vpow.pop %v1017
      %v1019 = vmul.f32 %v1016, 1.442695
      %v1020 = vpow.pop %v1019
      %v1021 = vadd.f32 %v1018, 1.0
      %v1022 = vadd.f32 %v1020, 1.0
      %v1023 = vrcp.pop %v1021
      %v1024 = vmul.f32 %v1021, %v1023
      %v1025 = vsub.f32 1.0, %v1024
      %v1026 = vmul.f32 %v1023, %v1025
      %v1027 = vadd.f32 %v1023, %v1026
      %vm1028 = vweird.f32 %v1021
      %vm1029 = vweird.f32 %v1023
      %vm1030 = vmor %vm1028, %vm1029
      %v1031 = vsel %vm1030, %v1023, %v1027
      %v1032 = vand.u32 2147483647, %v1021
      %vm1033 = vcmp.eq.f32.partialorder %v1032, 8.507059e+37
      %v1034 = vand.u32 %v1021, 2147483648
      %v1035 = vor.u32 1.1754944e-38, %v1034
      %v1036 = vsel %vm1033, %v1035, %v1031
      %v1037 = vmul.f32 1.0, %v1036
      %v1038 = vrcp.pop %v1022
      %v1039 = vmul.f32 %v1022, %v1038
      %v1040 = vsub.f32 1.0, %v1039
      %v1041 = vmul.f32 %v1038, %v1040
      %v1042 = vadd.f32 %v1038, %v1041
      %vm1043 = vweird.f32 %v1022
      %vm1044 = vweird.f32 %v1038
      %vm1045 = vmor %vm1043, %vm1044
      %v1046 = vsel %vm1045, %v1038, %v1042
      %v1047 = vand.u32 2147483647, %v1022
      %vm1048 = vcmp.eq.f32.partialorder %v1047, 8.507059e+37
      %v1049 = vand.u32 %v1022, 2147483648
      %v1050 = vor.u32 1.1754944e-38, %v1049
      %v1051 = vsel %vm1048, %v1050, %v1046
      %v1052 = vmul.f32 1.0, %v1051
      %v1053 = vadd.f32 %v969, %v635
      %v1054 = vadd.f32 %v971, %v635
      %v1055 = vmul.f32 %v997, %v1053
      %v1056 = vmul.f32 %v1012, %v1054
      %v1057 = vadd.f32 %v926, %v1055
      %v1058 = vadd.f32 %v929, %v1056
      %v1059 = vtanh.pop %v1057
      %v1060 = vtanh.pop %v1058
      %v1061 = vsub.f32 %v909, %v1059
      %v1062 = vsub.f32 %v910, %v1060
      %v1063 = vmul.f32 %v1037, %v1061
      %v1064 = vmul.f32 %v1052, %v1062
      %v1065 = vadd.f32 %v1059, %v1063
      %v1066 = vadd.f32 %v1060, %v1064
      %s1067 = scalar_lea.vmem %s266, 16
      %v1068 = vld [vmem:[%s1067] sm:$0xf]
      %v1069 = vld [vmem:[%s1067 + $0x4] sm:$0xf]
      %v1070 = vunpack.c.l.bf16 %v1068
      %v1071 = vunpack.c.l.bf16 %v1069
      %v1072 = vadd.f32 %v1065, %v1070
      %v1073 = vadd.f32 %v1066, %v1071
      %v1074 = vpack.c.bf16 %v1072, %v1072
      %v1075 = vpack.c.bf16 %v1073, %v1073
      %s1076 = scalar_lea.vmem %s280, 16
      %1077 = vst [vmem:[%s1076] sm:$0xf] %v1074
      %1078 = vst [vmem:[%s1076 + $0x4] sm:$0xf] %v1075
      %s1079 = scalar_lea.vmem [#allocation2], 48
      %v1080 = vld [vmem:[%s1079] sm:$0xff]
      %v1081 = vld [vmem:[%s1079 + $0x8] sm:$0xff]
      %v1082 = vld [vmem:[%s1079 + $0x10] sm:$0xff]
      %v1083 = vld [vmem:[%s1079 + $0x18] sm:$0xff]
      %v1084 = vld [vmem:[%s1079 + $0x20] sm:$0xff]
      %v1085 = vld [vmem:[%s1079 + $0x28] sm:$0xff]
      %v1086 = vpack.c.bf16 %v1066, %v1065
      %1087 = vmatpush.bf16.msra.mxu0 %v748
      %1088 = vmatpush.bf16.msra.mxu0 %v745
      %1089 = vmatpush.bf16.msra.mxu0 %v742
      %1090 = vmatpush.bf16.msra.mxu0 %v739
      %1091 = vmatpush.bf16.msra.mxu0 %v736
      %1092 = vmatpush.bf16.msra.mxu0 %v733
      %1093 = vmatpush.bf16.msra.mxu0 %v730
      %1094 = vmatpush.bf16.msra.mxu0 %v727
      %1095 = vmatmul.bf16.gmra.mxu0 %v1086
      %v1096 = vpop.f32.mrf.mxu0
      %v1097 = vadd.f32 0.0, %v1096
      %v1098 = vpop.f32.mrf.mxu0
      %v1099 = vadd.f32 0.0, %v1098
      %1100 = vdwg.mxu0
      %1101 = vmatpush.bf16.msra.mxu0 %v749
      %1102 = vmatpush.bf16.msra.mxu0 %v746
      %1103 = vmatpush.bf16.msra.mxu0 %v743
      %1104 = vmatpush.bf16.msra.mxu0 %v740
      %1105 = vmatpush.bf16.msra.mxu0 %v737
      %1106 = vmatpush.bf16.msra.mxu0 %v734
      %1107 = vmatpush.bf16.msra.mxu0 %v731
      %1108 = vmatpush.bf16.msra.mxu0 %v728
      %1109 = vmatmul.bf16.gmra.mxu0 %v1086
      %v1110 = vpop.f32.mrf.mxu0
      %v1111 = vadd.f32 0.0, %v1110
      %v1112 = vpop.f32.mrf.mxu0
      %v1113 = vadd.f32 0.0, %v1112
      %1114 = vdwg.mxu0
      %1115 = vmatpush.bf16.msra.mxu0 %v750
      %1116 = vmatpush.bf16.msra.mxu0 %v747
      %1117 = vmatpush.bf16.msra.mxu0 %v744
      %1118 = vmatpush.bf16.msra.mxu0 %v741
      %1119 = vmatpush.bf16.msra.mxu0 %v738
      %1120 = vmatpush.bf16.msra.mxu0 %v735
      %1121 = vmatpush.bf16.msra.mxu0 %v732
      %1122 = vmatpush.bf16.msra.mxu0 %v729
      %1123 = vmatmul.bf16.gmra.mxu0 %v1086
      %v1124 = vpop.f32.mrf.mxu0
      %v1125 = vadd.f32 0.0, %v1124
      %v1126 = vpop.f32.mrf.mxu0
      %v1127 = vadd.f32 0.0, %v1126
      %1128 = vdwg.mxu0
      %v1129 = vadd.f32 %v1080, %v1097
      %v1130 = vadd.f32 %v1083, %v1099
      %v1131 = vxor.u32 %v1129, 2147483648
      %v1132 = vxor.u32 %v1130, 2147483648
      %v1133 = vmul.f32 %v1131, 1.442695
      %v1134 = vpow.pop %v1133
      %v1135 = vmul.f32 %v1132, 1.442695
      %v1136 = vpow.pop %v1135
      %v1137 = vadd.f32 %v1134, 1.0
      %v1138 = vadd.f32 %v1136, 1.0
      %v1139 = vrcp.pop %v1137
      %v1140 = vmul.f32 %v1137, %v1139
      %v1141 = vsub.f32 1.0, %v1140
      %v1142 = vmul.f32 %v1139, %v1141
      %v1143 = vadd.f32 %v1139, %v1142
      %vm1144 = vweird.f32 %v1137
      %vm1145 = vweird.f32 %v1139
      %vm1146 = vmor %vm1144, %vm1145
      %v1147 = vsel %vm1146, %v1139, %v1143
      %v1148 = vand.u32 2147483647, %v1137
      %vm1149 = vcmp.eq.f32.partialorder %v1148, 8.507059e+37
      %v1150 = vand.u32 %v1137, 2147483648
      %v1151 = vor.u32 1.1754944e-38, %v1150
      %v1152 = vsel %vm1149, %v1151, %v1147
      %v1153 = vmul.f32 1.0, %v1152
      %v1154 = vrcp.pop %v1138
      %v1155 = vmul.f32 %v1138, %v1154
      %v1156 = vsub.f32 1.0, %v1155
      %v1157 = vmul.f32 %v1154, %v1156
      %v1158 = vadd.f32 %v1154, %v1157
      %vm1159 = vweird.f32 %v1138
      %vm1160 = vweird.f32 %v1154
      %vm1161 = vmor %vm1159, %vm1160
      %v1162 = vsel %vm1161, %v1154, %v1158
      %v1163 = vand.u32 2147483647, %v1138
      %vm1164 = vcmp.eq.f32.partialorder %v1163, 8.507059e+37
      %v1165 = vand.u32 %v1138, 2147483648
      %v1166 = vor.u32 1.1754944e-38, %v1165
      %v1167 = vsel %vm1164, %v1166, %v1162
      %v1168 = vmul.f32 1.0, %v1167
      %v1169 = vadd.f32 %v1081, %v1111
      %v1170 = vadd.f32 %v1084, %v1113
      %v1171 = vxor.u32 %v1169, 2147483648
      %v1172 = vxor.u32 %v1170, 2147483648
      %v1173 = vmul.f32 %v1171, 1.442695
      %v1174 = vpow.pop %v1173
      %v1175 = vmul.f32 %v1172, 1.442695
      %v1176 = vpow.pop %v1175
      %v1177 = vadd.f32 %v1174, 1.0
      %v1178 = vadd.f32 %v1176, 1.0
      %v1179 = vrcp.pop %v1177
      %v1180 = vmul.f32 %v1177, %v1179
      %v1181 = vsub.f32 1.0, %v1180
      %v1182 = vmul.f32 %v1179, %v1181
      %v1183 = vadd.f32 %v1179, %v1182
      %vm1184 = vweird.f32 %v1177
      %vm1185 = vweird.f32 %v1179
      %vm1186 = vmor %vm1184, %vm1185
      %v1187 = vsel %vm1186, %v1179, %v1183
      %v1188 = vand.u32 2147483647, %v1177
      %vm1189 = vcmp.eq.f32.partialorder %v1188, 8.507059e+37
      %v1190 = vand.u32 %v1177, 2147483648
      %v1191 = vor.u32 1.1754944e-38, %v1190
      %v1192 = vsel %vm1189, %v1191, %v1187
      %v1193 = vmul.f32 1.0, %v1192
      %v1194 = vrcp.pop %v1178
      %v1195 = vmul.f32 %v1178, %v1194
      %v1196 = vsub.f32 1.0, %v1195
      %v1197 = vmul.f32 %v1194, %v1196
      %v1198 = vadd.f32 %v1194, %v1197
      %vm1199 = vweird.f32 %v1178
      %vm1200 = vweird.f32 %v1194
      %vm1201 = vmor %vm1199, %vm1200
      %v1202 = vsel %vm1201, %v1194, %v1198
      %v1203 = vand.u32 2147483647, %v1178
      %vm1204 = vcmp.eq.f32.partialorder %v1203, 8.507059e+37
      %v1205 = vand.u32 %v1178, 2147483648
      %v1206 = vor.u32 1.1754944e-38, %v1205
      %v1207 = vsel %vm1204, %v1206, %v1202
      %v1208 = vmul.f32 1.0, %v1207
      %v1209 = vadd.f32 %v1125, %v635
      %v1210 = vadd.f32 %v1127, %v635
      %v1211 = vmul.f32 %v1153, %v1209
      %v1212 = vmul.f32 %v1168, %v1210
      %v1213 = vadd.f32 %v1082, %v1211
      %v1214 = vadd.f32 %v1085, %v1212
      %v1215 = vtanh.pop %v1213
      %v1216 = vtanh.pop %v1214
      %v1217 = vsub.f32 %v1065, %v1215
      %v1218 = vsub.f32 %v1066, %v1216
      %v1219 = vmul.f32 %v1193, %v1217
      %v1220 = vmul.f32 %v1208, %v1218
      %v1221 = vadd.f32 %v1215, %v1219
      %v1222 = vadd.f32 %v1216, %v1220
      %s1223 = scalar_lea.vmem %s266, 8
      %v1224 = vld [vmem:[%s1223] sm:$0xf]
      %v1225 = vld [vmem:[%s1223 + $0x4] sm:$0xf]
      %v1226 = vunpack.c.l.bf16 %v1224
      %v1227 = vunpack.c.l.bf16 %v1225
      %v1228 = vadd.f32 %v1221, %v1226
      %v1229 = vadd.f32 %v1222, %v1227
      %v1230 = vpack.c.bf16 %v1228, %v1228
      %v1231 = vpack.c.bf16 %v1229, %v1229
      %s1232 = scalar_lea.vmem %s280, 8
      %1233 = vst [vmem:[%s1232] sm:$0xf] %v1230
      %1234 = vst [vmem:[%s1232 + $0x4] sm:$0xf] %v1231
      %v1235 = vld [vmem:[#allocation2] sm:$0xff]
      %v1236 = vld [vmem:[#allocation2 + $0x8] sm:$0xff]
      %v1237 = vld [vmem:[#allocation2 + $0x10] sm:$0xff]
      %v1238 = vld [vmem:[#allocation2 + $0x18] sm:$0xff]
      %v1239 = vld [vmem:[#allocation2 + $0x20] sm:$0xff]
      %v1240 = vld [vmem:[#allocation2 + $0x28] sm:$0xff]
      %v1241 = vpack.c.bf16 %v1222, %v1221
      %1242 = vmatpush.bf16.msra.mxu0 %v748
      %1243 = vmatpush.bf16.msra.mxu0 %v745
      %1244 = vmatpush.bf16.msra.mxu0 %v742
      %1245 = vmatpush.bf16.msra.mxu0 %v739
      %1246 = vmatpush.bf16.msra.mxu0 %v736
      %1247 = vmatpush.bf16.msra.mxu0 %v733
      %1248 = vmatpush.bf16.msra.mxu0 %v730
      %1249 = vmatpush.bf16.msra.mxu0 %v727
      %1250 = vmatmul.bf16.gmra.mxu0 %v1241
      %v1251 = vpop.f32.mrf.mxu0
      %v1252 = vadd.f32 0.0, %v1251
      %v1253 = vpop.f32.mrf.mxu0
      %v1254 = vadd.f32 0.0, %v1253
      %1255 = vdwg.mxu0
      %1256 = vmatpush.bf16.msra.mxu0 %v749
      %1257 = vmatpush.bf16.msra.mxu0 %v746
      %1258 = vmatpush.bf16.msra.mxu0 %v743
      %1259 = vmatpush.bf16.msra.mxu0 %v740
      %1260 = vmatpush.bf16.msra.mxu0 %v737
      %1261 = vmatpush.bf16.msra.mxu0 %v734
      %1262 = vmatpush.bf16.msra.mxu0 %v731
      %1263 = vmatpush.bf16.msra.mxu0 %v728
      %1264 = vmatmul.bf16.gmra.mxu0 %v1241
      %v1265 = vpop.f32.mrf.mxu0
      %v1266 = vadd.f32 0.0, %v1265
      %v1267 = vpop.f32.mrf.mxu0
      %v1268 = vadd.f32 0.0, %v1267
      %1269 = vdwg.mxu0
      %1270 = vmatpush.bf16.msra.mxu0 %v750
      %1271 = vmatpush.bf16.msra.mxu0 %v747
      %1272 = vmatpush.bf16.msra.mxu0 %v744
      %1273 = vmatpush.bf16.msra.mxu0 %v741
      %1274 = vmatpush.bf16.msra.mxu0 %v738
      %1275 = vmatpush.bf16.msra.mxu0 %v735
      %1276 = vmatpush.bf16.msra.mxu0 %v732
      %1277 = vmatpush.bf16.msra.mxu0 %v729
      %1278 = vmatmul.bf16.gmra.mxu0 %v1241
      %v1279 = vpop.f32.mrf.mxu0
      %v1280 = vadd.f32 0.0, %v1279
      %v1281 = vpop.f32.mrf.mxu0
      %v1282 = vadd.f32 0.0, %v1281
      %1283 = vdwg.mxu0
      %v1284 = vadd.f32 %v1235, %v1252
      %v1285 = vadd.f32 %v1238, %v1254
      %v1286 = vxor.u32 %v1284, 2147483648
      %v1287 = vxor.u32 %v1285, 2147483648
      %v1288 = vmul.f32 %v1286, 1.442695
      %v1289 = vpow.pop %v1288
      %v1290 = vmul.f32 %v1287, 1.442695
      %v1291 = vpow.pop %v1290
      %v1292 = vadd.f32 %v1289, 1.0
      %v1293 = vadd.f32 %v1291, 1.0
      %v1294 = vrcp.pop %v1292
      %v1295 = vmul.f32 %v1292, %v1294
      %v1296 = vsub.f32 1.0, %v1295
      %v1297 = vmul.f32 %v1294, %v1296
      %v1298 = vadd.f32 %v1294, %v1297
      %vm1299 = vweird.f32 %v1292
      %vm1300 = vweird.f32 %v1294
      %vm1301 = vmor %vm1299, %vm1300
      %v1302 = vsel %vm1301, %v1294, %v1298
      %v1303 = vand.u32 2147483647, %v1292
      %vm1304 = vcmp.eq.f32.partialorder %v1303, 8.507059e+37
      %v1305 = vand.u32 %v1292, 2147483648
      %v1306 = vor.u32 1.1754944e-38, %v1305
      %v1307 = vsel %vm1304, %v1306, %v1302
      %v1308 = vmul.f32 1.0, %v1307
      %v1309 = vrcp.pop %v1293
      %v1310 = vmul.f32 %v1293, %v1309
      %v1311 = vsub.f32 1.0, %v1310
      %v1312 = vmul.f32 %v1309, %v1311
      %v1313 = vadd.f32 %v1309, %v1312
      %vm1314 = vweird.f32 %v1293
      %vm1315 = vweird.f32 %v1309
      %vm1316 = vmor %vm1314, %vm1315
      %v1317 = vsel %vm1316, %v1309, %v1313
      %v1318 = vand.u32 2147483647, %v1293
      %vm1319 = vcmp.eq.f32.partialorder %v1318, 8.507059e+37
      %v1320 = vand.u32 %v1293, 2147483648
      %v1321 = vor.u32 1.1754944e-38, %v1320
      %v1322 = vsel %vm1319, %v1321, %v1317
      %v1323 = vmul.f32 1.0, %v1322
      %v1324 = vadd.f32 %v1236, %v1266
      %v1325 = vadd.f32 %v1239, %v1268
      %v1326 = vxor.u32 %v1324, 2147483648
      %v1327 = vxor.u32 %v1325, 2147483648
      %v1328 = vmul.f32 %v1326, 1.442695
      %v1329 = vpow.pop %v1328
      %v1330 = vmul.f32 %v1327, 1.442695
      %v1331 = vpow.pop %v1330
      %v1332 = vadd.f32 %v1329, 1.0
      %v1333 = vadd.f32 %v1331, 1.0
      %v1334 = vrcp.pop %v1332
      %v1335 = vmul.f32 %v1332, %v1334
      %v1336 = vsub.f32 1.0, %v1335
      %v1337 = vmul.f32 %v1334, %v1336
      %v1338 = vadd.f32 %v1334, %v1337
      %vm1339 = vweird.f32 %v1332
      %vm1340 = vweird.f32 %v1334
      %vm1341 = vmor %vm1339, %vm1340
      %v1342 = vsel %vm1341, %v1334, %v1338
      %v1343 = vand.u32 2147483647, %v1332
      %vm1344 = vcmp.eq.f32.partialorder %v1343, 8.507059e+37
      %v1345 = vand.u32 %v1332, 2147483648
      %v1346 = vor.u32 1.1754944e-38, %v1345
      %v1347 = vsel %vm1344, %v1346, %v1342
      %v1348 = vmul.f32 1.0, %v1347
      %v1349 = vrcp.pop %v1333
      %v1350 = vmul.f32 %v1333, %v1349
      %v1351 = vsub.f32 1.0, %v1350
      %v1352 = vmul.f32 %v1349, %v1351
      %v1353 = vadd.f32 %v1349, %v1352
      %vm1354 = vweird.f32 %v1333
      %vm1355 = vweird.f32 %v1349
      %vm1356 = vmor %vm1354, %vm1355
      %v1357 = vsel %vm1356, %v1349, %v1353
      %v1358 = vand.u32 2147483647, %v1333
      %vm1359 = vcmp.eq.f32.partialorder %v1358, 8.507059e+37
      %v1360 = vand.u32 %v1333, 2147483648
      %v1361 = vor.u32 1.1754944e-38, %v1360
      %v1362 = vsel %vm1359, %v1361, %v1357
      %v1363 = vmul.f32 1.0, %v1362
      %v1364 = vadd.f32 %v1280, %v635
      %v1365 = vadd.f32 %v1282, %v635
      %v1366 = vmul.f32 %v1308, %v1364
      %v1367 = vmul.f32 %v1323, %v1365
      %v1368 = vadd.f32 %v1237, %v1366
      %v1369 = vadd.f32 %v1240, %v1367
      %v1370 = vtanh.pop %v1368
      %v1371 = vtanh.pop %v1369
      %v1372 = vsub.f32 %v1221, %v1370
      %v1373 = vsub.f32 %v1222, %v1371
      %v1374 = vmul.f32 %v1348, %v1372
      %v1375 = vmul.f32 %v1363, %v1373
      %v1376 = vadd.f32 %v1370, %v1374
      %v1377 = vadd.f32 %v1371, %v1375
      %v1378 = vld [vmem:[%s266] sm:$0xf]
      %v1379 = vld [vmem:[%s266 + $0x4] sm:$0xf]
      %v1380 = vunpack.c.l.bf16 %v1378
      %v1381 = vunpack.c.l.bf16 %v1379
      %v1382 = vadd.f32 %v1376, %v1380
      %v1383 = vadd.f32 %v1377, %v1381
      %v1384 = vpack.c.bf16 %v1382, %v1382
      %v1385 = vpack.c.bf16 %v1383, %v1383
      %1386 = vst [vmem:[%s280] sm:$0xf] %v1384
      %1387 = vst [vmem:[%s280 + $0x4] sm:$0xf] %v1385
      %1388 = vst [vmem:[#allocation3] sm:$0xff] %v1376
      %1389 = vst [vmem:[#allocation3 + $0x8] sm:$0xff] %v1377
      %s1390 = ssub.s32 1, %s21
      %s1391 = smul.u32 4, %s1390
      %s1392 = smul.u32 2, %s20
      %p1393 = scmp.lt.s32.totalorder %s1391, 7
      %s1394 = scalar_select %p1393, %s1391, 7
      %p1395 = scmp.lt.s32.totalorder %s1392, 1
      %s1396 = scalar_select %p1395, %s1392, 1
      %s1397 = smul.addr %s1394, 2
      %s1398 = sadd.s32 %s1396, %s1397
      %s1399 = smul.addr %s1398, 4
      %s1400 = scalar_lea.vmem %s5, %s1399
      // Predicated region
      $region45: #{bigru_for_srl_forward.5} parent=39 // pred_check
        %p1401 = pneg %p164
      $region46: #{bigru_for_srl_forward.5} parent=39 // pred_check_branch
        %1403 = sbr.rel (%p1401) target = $region48
      $region47: #{bigru_for_srl_forward.5} parent=39 // pred_region
        %s1404 = ssub.s32 1, %s21
        %s1405 = smul.u32 4, %s1404
        %s1406 = smul.u32 2, %s20
      $region48: #{bigru_for_srl_forward.5} parent=39 // pred_fallthru
        _
    $region40: #{bigru_for_srl_forward.5} parent=5 // pred_fallthru
      _
    %p1407 = scmp.le.s32.totalorder 2, %s11
    // Predicated region
    $region49: #{bigru_for_srl_forward.5} parent=5 // pred_check
      %p1408 = pneg %p1407
    $region50: #{bigru_for_srl_forward.5} parent=5 // pred_check_branch
      %1410 = sbr.rel (%p1408) target = $region52
    $region51: #{bigru_for_srl_forward.5} parent=5 // pred_region
      %s1411 = ssub.s32 %s11, 2
      // Predicated region
      $region53: #{bigru_for_srl_forward.5} parent=51 // pred_check
        %p1412 = pneg %p170
      $region54: #{bigru_for_srl_forward.5} parent=51 // pred_check_branch
        %1414 = sbr.rel (%p1412) target = $region56
      $region55: #{bigru_for_srl_forward.5} parent=51 // pred_region
        %s1415 = ssub.s32 1, %s23
        %s1416 = smul.u32 4, %s1415
        %s1417 = smul.u32 2, %s22
        %p1418 = scmp.lt.s32.totalorder %s1416, 7
        %s1419 = scalar_select %p1418, %s1416, 7
        %p1420 = scmp.lt.s32.totalorder %s1417, 1
        %s1421 = scalar_select %p1420, %s1417, 1
        %s1422 = smul.addr %s1419, 2
        %s1423 = sadd.s32 %s1421, %s1422
        %s1424 = smul.addr %s1423, 4
        %s1425 = scalar_lea.vmem %s5, %s1424
      $region56: #{bigru_for_srl_forward.5} parent=51 // pred_fallthru
        _
    $region52: #{bigru_for_srl_forward.5} parent=5 // pred_fallthru
      _
  $region6: #{bigru_for_srl_forward.5} parent=0 // loop_footer
    %s15 = sadd.s32 1, %s11
  $region7: #{bigru_for_srl_forward.5} parent=0 // loop_footer_branch
    %10 = sbr.rel target = $region3
  $region8: #{bigru_for_srl_forward.5} parent=0 // loop_exit
    _

</llo_original>
